<compile_context>
chip_gen: v5e
topology: v5e:2x2
jax: 0.10.0
libtpu: 0.0.40
codegen_flags: <defaults>
</compile_context>

<pallas_src>
import jax
import jax.numpy as jnp
from jax import lax
from jax.experimental import pallas as pl
from jax.experimental.pallas import tpu as pltpu


def _conv3x3_planes(src_ref, w_ref, b_ref, cin, cout, H, W):
    """3x3 'valid' conv over a reflect-padded (cin, H+2, W+2) VMEM ref.

    Pure-VPU formulation: each tap = (SMEM scalar weight) * (shifted (H, W) window).
    Each shifted window is loaded once and reused for all `cout` accumulators.
    Returns `cout` float32 (H, W) planes with the bias already added.
    """
    accs = [jnp.zeros((H, W), jnp.float32) for _ in range(cout)]
    for ci in range(cin):
        for dy in range(3):
            for dx in range(3):
                patch = src_ref[ci, dy:dy + H, dx:dx + W]
                for co in range(cout):
                    w = w_ref[((co * cin + ci) * 3 + dy) * 3 + dx]  # OIHW, flattened
                    accs[co] = accs[co] + w * patch
    return [accs[co] + b_ref[co] for co in range(cout)]


def residual_block_kernel(x_ref, w1_ref, b1_ref, w2_ref, b2_ref, o_ref, xp_ref, yp_ref):
    """Fused residual block for one batch element.

    x_ref / o_ref : (1, C, H, W) VMEM blocks.
    w*_ref        : flat OIHW weights in SMEM.       b*_ref: (C,) biases in SMEM.
    xp_ref/yp_ref : (C, H+2, W+2) VMEM scratch (padded input / padded conv1 activation).
    """
    _, C, H, W = x_ref.shape
    Cout = o_ref.shape[1]

    # ---- reflect-pad x into xp scratch (interior first, then borders) ---------------
    xp_ref[:, 1:H + 1, 1:W + 1] = x_ref[0].astype(jnp.float32)
    xp_ref[:, 0:1, 1:W + 1] = x_ref[0, :, 1:2, :].astype(jnp.float32)                   # top
    xp_ref[:, H + 1:H + 2, 1:W + 1] = x_ref[0, :, H - 2:H - 1, :].astype(jnp.float32)   # bottom
    xp_ref[:, :, 0:1] = xp_ref[:, :, 2:3]                                               # left  (+corners)
    xp_ref[:, :, W + 1:W + 2] = xp_ref[:, :, W - 1:W]                                   # right (+corners)

    # ---- conv1 + bias + ReLU -> interior of yp scratch -------------------------------
    y = _conv3x3_planes(xp_ref, w1_ref, b1_ref, C, Cout, H, W)
    for co in range(Cout):
        yp_ref[co, 1:H + 1, 1:W + 1] = jnp.maximum(y[co], 0.0)

    # ---- reflect-pad the conv1 activation (stays in VMEM, never touches HBM) ---------
    yp_ref[:, 0:1, 1:W + 1] = yp_ref[:, 2:3, 1:W + 1]
    yp_ref[:, H + 1:H + 2, 1:W + 1] = yp_ref[:, H - 1:H, 1:W + 1]
    yp_ref[:, :, 0:1] = yp_ref[:, :, 2:3]
    yp_ref[:, :, W + 1:W + 2] = yp_ref[:, :, W - 1:W]

    # ---- conv2 + bias + skip + ReLU -> output -----------------------------------------
    z = _conv3x3_planes(yp_ref, w2_ref, b2_ref, Cout, Cout, H, W)
    for co in range(Cout):
        skip = x_ref[0, co].astype(jnp.float32)
        o_ref[0, co] = jnp.maximum(z[co] + skip, 0.0).astype(o_ref.dtype)


@jax.jit
def residual_block(x, w1, b1, w2, b2):
    """x: (N, C, H, W) NCHW.  w*: (Cout, Cin, 3, 3) OIHW.  b*: (Cout,).  Cin == Cout."""
    N, C, H, W = x.shape
    Cout = w1.shape[0]
    assert C == Cout, "channel_pad=False path requires input_ch == output_ch"

    smem = pl.BlockSpec(memory_space=pltpu.MemorySpace.SMEM)
    return pl.pallas_call(
        residual_block_kernel,
        out_shape=jax.ShapeDtypeStruct((N, Cout, H, W), x.dtype),
        grid=(N,),
        in_specs=[
            pl.BlockSpec((1, C, H, W), lambda n: (n, 0, 0, 0)),   # x: one image per step
            smem, smem, smem, smem,                               # w1, b1, w2, b2
        ],
        out_specs=pl.BlockSpec((1, Cout, H, W), lambda n: (n, 0, 0, 0)),
        scratch_shapes=[
            pltpu.VMEM((C, H + 2, W + 2), jnp.float32),      # reflect-padded input
            pltpu.VMEM((Cout, H + 2, W + 2), jnp.float32),   # reflect-padded conv1 act
        ],
        input_output_aliases={0: 0},   # skip input x aliases the output buffer
        compiler_params=pltpu.CompilerParams(dimension_semantics=("parallel",)),
    )(x, w1.reshape(-1), b1.reshape(-1), w2.reshape(-1), b2.reshape(-1))


def _reference(x, w1, b1, w2, b2):
    dn = ("NCHW", "OIHW", "NCHW")
    xp = jnp.pad(x, ((0, 0), (0, 0), (1, 1), (1, 1)), mode="reflect")
    y = lax.conv_general_dilated(xp, w1, (1, 1), "VALID", dimension_numbers=dn,
                                 precision=lax.Precision.HIGHEST)
    y = jnp.maximum(y + b1.reshape(1, -1, 1, 1), 0.0)
    yp = jnp.pad(y, ((0, 0), (0, 0), (1, 1), (1, 1)), mode="reflect")
    z = lax.conv_general_dilated(yp, w2, (1, 1), "VALID", dimension_numbers=dn,
                                 precision=lax.Precision.HIGHEST)
    z = z + b2.reshape(1, -1, 1, 1)
    return jnp.maximum(z + x, 0.0)


if __name__ == "__main__":
    # Residual_block(input_ch=4, output_ch=4, padding='reflect', channel_pad=False)
    N, H, W, Cin, Cout = 2, 16, 16, 4, 4
    deviation = 0.01

    key = jax.random.PRNGKey(0)
    kx, kw1, kw2, kb1, kb2 = jax.random.split(key, 5)

    x = jax.random.normal(kx, (N, Cin, H, W), dtype=jnp.float32)          # NCHW like PyTorch
    w1 = deviation * jax.random.normal(kw1, (Cout, Cin, 3, 3), dtype=jnp.float32)   # OIHW
    w2 = deviation * jax.random.normal(kw2, (Cout, Cout, 3, 3), dtype=jnp.float32)
    b1 = deviation * jax.random.normal(kb1, (Cout,), dtype=jnp.float32)
    b2 = deviation * jax.random.normal(kb2, (Cout,), dtype=jnp.float32)

    # Compute the reference first (x is never mutated: the aliased input is copied by XLA
    # because it is not donated, but computing ref first removes any doubt).
    ref = jax.block_until_ready(_reference(x, w1, b1, w2, b2))

    out = jax.block_until_ready(residual_block(x, w1, b1, w2, b2))

    assert out.shape == (N, Cout, H, W)
    assert jnp.allclose(out, ref, atol=1e-4, rtol=1e-4), "mismatch vs JAX reference"

    print("KERNEL_OK")
</pallas_src>

<mosaic_0001>
module attributes {stable_mosaic.version = 11 : i64} {
  func.func @residual_block_kernel(%arg0: i32, %arg1: memref<1x4x16x16xf32, #tpu.memory_space<vmem>>, %arg2: memref<144xf32, #tpu.memory_space<smem>>, %arg3: memref<4xf32, #tpu.memory_space<smem>>, %arg4: memref<144xf32, #tpu.memory_space<smem>>, %arg5: memref<4xf32, #tpu.memory_space<smem>>, %arg6: memref<1x4x16x16xf32, #tpu.memory_space<vmem>>, %arg7: memref<4x18x18xf32, #tpu.memory_space<vmem>>, %arg8: memref<4x18x18xf32, #tpu.memory_space<vmem>>) attributes {dimension_semantics = [#tpu.dimension_semantics<parallel>], iteration_bounds = array<i64: 2>, scalar_prefetch = 0 : i64, scratch_operands = 2 : i64, tpu.core_type = #tpu.core_type<tc>, window_params = [{transform_indices = @transform_0, window_bounds = array<i64: 1, 4, 16, 16>}, {transform_indices = @transform_1, window_bounds = array<i64: 144>}, {transform_indices = @transform_2, window_bounds = array<i64: 4>}, {transform_indices = @transform_3, window_bounds = array<i64: 144>}, {transform_indices = @transform_4, window_bounds = array<i64: 4>}, {transform_indices = @transform_5, window_bounds = array<i64: 1, 4, 16, 16>}]} {
    %c0 = arith.constant 0 : index
    %c0_0 = arith.constant 0 : index
    %c0_1 = arith.constant 0 : index
    %c0_2 = arith.constant 0 : index
    %0 = vector.load %arg1[%c0, %c0_0, %c0_1, %c0_2] : memref<1x4x16x16xf32, #tpu.memory_space<vmem>>, vector<1x4x16x16xf32>
    %1 = vector.shape_cast %0 : vector<1x4x16x16xf32> to vector<4x16x16xf32>
    %c0_3 = arith.constant 0 : index
    %c1 = arith.constant 1 : index
    %c1_4 = arith.constant 1 : index
    %2 = vector.load %arg7[%c0_3, %c1, %c1_4] : memref<4x18x18xf32, #tpu.memory_space<vmem>>, vector<4x16x16xf32>
    tpu.vector_store %arg7[%c0_3, %c1, %c1_4], %1 {strides = array<i32>} : memref<4x18x18xf32, #tpu.memory_space<vmem>>, vector<4x16x16xf32>,
    %c0_5 = arith.constant 0 : index
    %c0_6 = arith.constant 0 : index
    %c1_7 = arith.constant 1 : index
    %c0_8 = arith.constant 0 : index
    %3 = vector.load %arg1[%c0_5, %c0_6, %c1_7, %c0_8] : memref<1x4x16x16xf32, #tpu.memory_space<vmem>>, vector<1x4x1x16xf32>
    %4 = vector.shape_cast %3 : vector<1x4x1x16xf32> to vector<4x1x16xf32>
    %c0_9 = arith.constant 0 : index
    %c0_10 = arith.constant 0 : index
    %c1_11 = arith.constant 1 : index
    %5 = vector.load %arg7[%c0_9, %c0_10, %c1_11] : memref<4x18x18xf32, #tpu.memory_space<vmem>>, vector<4x1x16xf32>
    tpu.vector_store %arg7[%c0_9, %c0_10, %c1_11], %4 {strides = array<i32>} : memref<4x18x18xf32, #tpu.memory_space<vmem>>, vector<4x1x16xf32>,
    %c0_12 = arith.constant 0 : index
    %c0_13 = arith.constant 0 : index
    %c14 = arith.constant 14 : index
    %c0_14 = arith.constant 0 : index
    %6 = vector.load %arg1[%c0_12, %c0_13, %c14, %c0_14] : memref<1x4x16x16xf32, #tpu.memory_space<vmem>>, vector<1x4x1x16xf32>
    %7 = vector.shape_cast %6 : vector<1x4x1x16xf32> to vector<4x1x16xf32>
    %c0_15 = arith.constant 0 : index
    %c17 = arith.constant 17 : index
    %c1_16 = arith.constant 1 : index
    %8 = vector.load %arg7[%c0_15, %c17, %c1_16] : memref<4x18x18xf32, #tpu.memory_space<vmem>>, vector<4x1x16xf32>
    tpu.vector_store %arg7[%c0_15, %c17, %c1_16], %7 {strides = array<i32>} : memref<4x18x18xf32, #tpu.memory_space<vmem>>, vector<4x1x16xf32>,
    %c0_17 = arith.constant 0 : index
    %c0_18 = arith.constant 0 : index
    %c2 = arith.constant 2 : index
    %9 = vector.load %arg7[%c0_17, %c0_18, %c2] : memref<4x18x18xf32, #tpu.memory_space<vmem>>, vector<4x18x1xf32>
    %c0_19 = arith.constant 0 : index
    %c0_20 = arith.constant 0 : index
    %c0_21 = arith.constant 0 : index
    %10 = vector.load %arg7[%c0_19, %c0_20, %c0_21] : memref<4x18x18xf32, #tpu.memory_space<vmem>>, vector<4x18x1xf32>
    tpu.vector_store %arg7[%c0_19, %c0_20, %c0_21], %9 {strides = array<i32>} : memref<4x18x18xf32, #tpu.memory_space<vmem>>, vector<4x18x1xf32>,
    %c0_22 = arith.constant 0 : index
    %c0_23 = arith.constant 0 : index
    %c15 = arith.constant 15 : index
    %11 = vector.load %arg7[%c0_22, %c0_23, %c15] : memref<4x18x18xf32, #tpu.memory_space<vmem>>, vector<4x18x1xf32>
    %c0_24 = arith.constant 0 : index
    %c0_25 = arith.constant 0 : index
    %c17_26 = arith.constant 17 : index
    %12 = vector.load %arg7[%c0_24, %c0_25, %c17_26] : memref<4x18x18xf32, #tpu.memory_space<vmem>>, vector<4x18x1xf32>
    tpu.vector_store %arg7[%c0_24, %c0_25, %c17_26], %11 {strides = array<i32>} : memref<4x18x18xf32, #tpu.memory_space<vmem>>, vector<4x18x1xf32>,
    %cst = arith.constant 0.000000e+00 : f32
    %13 = vector.broadcast %cst : f32 to vector<16x16xf32>
    %cst_27 = arith.constant 0.000000e+00 : f32
    %14 = vector.broadcast %cst_27 : f32 to vector<16x16xf32>
    %cst_28 = arith.constant 0.000000e+00 : f32
    %15 = vector.broadcast %cst_28 : f32 to vector<16x16xf32>
    %cst_29 = arith.constant 0.000000e+00 : f32
    %16 = vector.broadcast %cst_29 : f32 to vector<16x16xf32>
    %c0_30 = arith.constant 0 : index
    %c0_31 = arith.constant 0 : index
    %c0_32 = arith.constant 0 : index
    %17 = vector.load %arg7[%c0_30, %c0_31, %c0_32] : memref<4x18x18xf32, #tpu.memory_space<vmem>>, vector<1x16x16xf32>
    %18 = vector.shape_cast %17 : vector<1x16x16xf32> to vector<16x16xf32>
    %c0_33 = arith.constant 0 : index
    %19 = memref.load %arg2[%c0_33] : memref<144xf32, #tpu.memory_space<smem>>
    %20 = vector.broadcast %19 : f32 to vector<16x16xf32>
    %21 = arith.mulf %20, %18 : vector<16x16xf32>
    %22 = arith.addf %13, %21 : vector<16x16xf32>
    %c36 = arith.constant 36 : index
    %23 = memref.load %arg2[%c36] : memref<144xf32, #tpu.memory_space<smem>>
    %24 = vector.broadcast %23 : f32 to vector<16x16xf32>
    %25 = arith.mulf %24, %18 : vector<16x16xf32>
    %26 = arith.addf %14, %25 : vector<16x16xf32>
    %c72 = arith.constant 72 : index
    %27 = memref.load %arg2[%c72] : memref<144xf32, #tpu.memory_space<smem>>
    %28 = vector.broadcast %27 : f32 to vector<16x16xf32>
    %29 = arith.mulf %28, %18 : vector<16x16xf32>
    %30 = arith.addf %15, %29 : vector<16x16xf32>
    %c108 = arith.constant 108 : index
    %31 = memref.load %arg2[%c108] : memref<144xf32, #tpu.memory_space<smem>>
    %32 = vector.broadcast %31 : f32 to vector<16x16xf32>
    %33 = arith.mulf %32, %18 : vector<16x16xf32>
    %34 = arith.addf %16, %33 : vector<16x16xf32>
    %c0_34 = arith.constant 0 : index
    %c0_35 = arith.constant 0 : index
    %c1_36 = arith.constant 1 : index
    %35 = vector.load %arg7[%c0_34, %c0_35, %c1_36] : memref<4x18x18xf32, #tpu.memory_space<vmem>>, vector<1x16x16xf32>
    %36 = vector.shape_cast %35 : vector<1x16x16xf32> to vector<16x16xf32>
    %c1_37 = arith.constant 1 : index
    %37 = memref.load %arg2[%c1_37] : memref<144xf32, #tpu.memory_space<smem>>
    %38 = vector.broadcast %37 : f32 to vector<16x16xf32>
    %39 = arith.mulf %38, %36 : vector<16x16xf32>
    %40 = arith.addf %22, %39 : vector<16x16xf32>
    %c37 = arith.constant 37 : index
    %41 = memref.load %arg2[%c37] : memref<144xf32, #tpu.memory_space<smem>>
    %42 = vector.broadcast %41 : f32 to vector<16x16xf32>
    %43 = arith.mulf %42, %36 : vector<16x16xf32>
    %44 = arith.addf %26, %43 : vector<16x16xf32>
    %c73 = arith.constant 73 : index
    %45 = memref.load %arg2[%c73] : memref<144xf32, #tpu.memory_space<smem>>
    %46 = vector.broadcast %45 : f32 to vector<16x16xf32>
    %47 = arith.mulf %46, %36 : vector<16x16xf32>
    %48 = arith.addf %30, %47 : vector<16x16xf32>
    %c109 = arith.constant 109 : index
    %49 = memref.load %arg2[%c109] : memref<144xf32, #tpu.memory_space<smem>>
    %50 = vector.broadcast %49 : f32 to vector<16x16xf32>
    %51 = arith.mulf %50, %36 : vector<16x16xf32>
    %52 = arith.addf %34, %51 : vector<16x16xf32>
    %c0_38 = arith.constant 0 : index
    %c0_39 = arith.constant 0 : index
    %c2_40 = arith.constant 2 : index
    %53 = vector.load %arg7[%c0_38, %c0_39, %c2_40] : memref<4x18x18xf32, #tpu.memory_space<vmem>>, vector<1x16x16xf32>
    %54 = vector.shape_cast %53 : vector<1x16x16xf32> to vector<16x16xf32>
    %c2_41 = arith.constant 2 : index
    %55 = memref.load %arg2[%c2_41] : memref<144xf32, #tpu.memory_space<smem>>
    %56 = vector.broadcast %55 : f32 to vector<16x16xf32>
    %57 = arith.mulf %56, %54 : vector<16x16xf32>
    %58 = arith.addf %40, %57 : vector<16x16xf32>
    %c38 = arith.constant 38 : index
    %59 = memref.load %arg2[%c38] : memref<144xf32, #tpu.memory_space<smem>>
    %60 = vector.broadcast %59 : f32 to vector<16x16xf32>
    %61 = arith.mulf %60, %54 : vector<16x16xf32>
    %62 = arith.addf %44, %61 : vector<16x16xf32>
    %c74 = arith.constant 74 : index
    %63 = memref.load %arg2[%c74] : memref<144xf32, #tpu.memory_space<smem>>
    %64 = vector.broadcast %63 : f32 to vector<16x16xf32>
    %65 = arith.mulf %64, %54 : vector<16x16xf32>
    %66 = arith.addf %48, %65 : vector<16x16xf32>
    %c110 = arith.constant 110 : index
    %67 = memref.load %arg2[%c110] : memref<144xf32, #tpu.memory_space<smem>>
    %68 = vector.broadcast %67 : f32 to vector<16x16xf32>
    %69 = arith.mulf %68, %54 : vector<16x16xf32>
    %70 = arith.addf %52, %69 : vector<16x16xf32>
    %c0_42 = arith.constant 0 : index
    %c1_43 = arith.constant 1 : index
    %c0_44 = arith.constant 0 : index
    %71 = vector.load %arg7[%c0_42, %c1_43, %c0_44] : memref<4x18x18xf32, #tpu.memory_space<vmem>>, vector<1x16x16xf32>
    %72 = vector.shape_cast %71 : vector<1x16x16xf32> to vector<16x16xf32>
    %c3 = arith.constant 3 : index
    %73 = memref.load %arg2[%c3] : memref<144xf32, #tpu.memory_space<smem>>
    %74 = vector.broadcast %73 : f32 to vector<16x16xf32>
    %75 = arith.mulf %74, %72 : vector<16x16xf32>
    %76 = arith.addf %58, %75 : vector<16x16xf32>
    %c39 = arith.constant 39 : index
    %77 = memref.load %arg2[%c39] : memref<144xf32, #tpu.memory_space<smem>>
    %78 = vector.broadcast %77 : f32 to vector<16x16xf32>
    %79 = arith.mulf %78, %72 : vector<16x16xf32>
    %80 = arith.addf %62, %79 : vector<16x16xf32>
    %c75 = arith.constant 75 : index
    %81 = memref.load %arg2[%c75] : memref<144xf32, #tpu.memory_space<smem>>
    %82 = vector.broadcast %81 : f32 to vector<16x16xf32>
    %83 = arith.mulf %82, %72 : vector<16x16xf32>
    %84 = arith.addf %66, %83 : vector<16x16xf32>
    %c111 = arith.constant 111 : index
    %85 = memref.load %arg2[%c111] : memref<144xf32, #tpu.memory_space<smem>>
    %86 = vector.broadcast %85 : f32 to vector<16x16xf32>
    %87 = arith.mulf %86, %72 : vector<16x16xf32>
    %88 = arith.addf %70, %87 : vector<16x16xf32>
    %c0_45 = arith.constant 0 : index
    %c1_46 = arith.constant 1 : index
    %c1_47 = arith.constant 1 : index
    %89 = vector.load %arg7[%c0_45, %c1_46, %c1_47] : memref<4x18x18xf32, #tpu.memory_space<vmem>>, vector<1x16x16xf32>
    %90 = vector.shape_cast %89 : vector<1x16x16xf32> to vector<16x16xf32>
    %c4 = arith.constant 4 : index
    %91 = memref.load %arg2[%c4] : memref<144xf32, #tpu.memory_space<smem>>
    %92 = vector.broadcast %91 : f32 to vector<16x16xf32>
    %93 = arith.mulf %92, %90 : vector<16x16xf32>
    %94 = arith.addf %76, %93 : vector<16x16xf32>
    %c40 = arith.constant 40 : index
    %95 = memref.load %arg2[%c40] : memref<144xf32, #tpu.memory_space<smem>>
    %96 = vector.broadcast %95 : f32 to vector<16x16xf32>
    %97 = arith.mulf %96, %90 : vector<16x16xf32>
    %98 = arith.addf %80, %97 : vector<16x16xf32>
    %c76 = arith.constant 76 : index
    %99 = memref.load %arg2[%c76] : memref<144xf32, #tpu.memory_space<smem>>
    %100 = vector.broadcast %99 : f32 to vector<16x16xf32>
    %101 = arith.mulf %100, %90 : vector<16x16xf32>
    %102 = arith.addf %84, %101 : vector<16x16xf32>
    %c112 = arith.constant 112 : index
    %103 = memref.load %arg2[%c112] : memref<144xf32, #tpu.memory_space<smem>>
    %104 = vector.broadcast %103 : f32 to vector<16x16xf32>
    %105 = arith.mulf %104, %90 : vector<16x16xf32>
    %106 = arith.addf %88, %105 : vector<16x16xf32>
    %c0_48 = arith.constant 0 : index
    %c1_49 = arith.constant 1 : index
    %c2_50 = arith.constant 2 : index
    %107 = vector.load %arg7[%c0_48, %c1_49, %c2_50] : memref<4x18x18xf32, #tpu.memory_space<vmem>>, vector<1x16x16xf32>
    %108 = vector.shape_cast %107 : vector<1x16x16xf32> to vector<16x16xf32>
    %c5 = arith.constant 5 : index
    %109 = memref.load %arg2[%c5] : memref<144xf32, #tpu.memory_space<smem>>
    %110 = vector.broadcast %109 : f32 to vector<16x16xf32>
    %111 = arith.mulf %110, %108 : vector<16x16xf32>
    %112 = arith.addf %94, %111 : vector<16x16xf32>
    %c41 = arith.constant 41 : index
    %113 = memref.load %arg2[%c41] : memref<144xf32, #tpu.memory_space<smem>>
    %114 = vector.broadcast %113 : f32 to vector<16x16xf32>
    %115 = arith.mulf %114, %108 : vector<16x16xf32>
    %116 = arith.addf %98, %115 : vector<16x16xf32>
    %c77 = arith.constant 77 : index
    %117 = memref.load %arg2[%c77] : memref<144xf32, #tpu.memory_space<smem>>
    %118 = vector.broadcast %117 : f32 to vector<16x16xf32>
    %119 = arith.mulf %118, %108 : vector<16x16xf32>
    %120 = arith.addf %102, %119 : vector<16x16xf32>
    %c113 = arith.constant 113 : index
    %121 = memref.load %arg2[%c113] : memref<144xf32, #tpu.memory_space<smem>>
    %122 = vector.broadcast %121 : f32 to vector<16x16xf32>
    %123 = arith.mulf %122, %108 : vector<16x16xf32>
    %124 = arith.addf %106, %123 : vector<16x16xf32>
    %c0_51 = arith.constant 0 : index
    %c2_52 = arith.constant 2 : index
    %c0_53 = arith.constant 0 : index
    %125 = vector.load %arg7[%c0_51, %c2_52, %c0_53] : memref<4x18x18xf32, #tpu.memory_space<vmem>>, vector<1x16x16xf32>
    %126 = vector.shape_cast %125 : vector<1x16x16xf32> to vector<16x16xf32>
    %c6 = arith.constant 6 : index
    %127 = memref.load %arg2[%c6] : memref<144xf32, #tpu.memory_space<smem>>
    %128 = vector.broadcast %127 : f32 to vector<16x16xf32>
    %129 = arith.mulf %128, %126 : vector<16x16xf32>
    %130 = arith.addf %112, %129 : vector<16x16xf32>
    %c42 = arith.constant 42 : index
    %131 = memref.load %arg2[%c42] : memref<144xf32, #tpu.memory_space<smem>>
    %132 = vector.broadcast %131 : f32 to vector<16x16xf32>
    %133 = arith.mulf %132, %126 : vector<16x16xf32>
    %134 = arith.addf %116, %133 : vector<16x16xf32>
    %c78 = arith.constant 78 : index
    %135 = memref.load %arg2[%c78] : memref<144xf32, #tpu.memory_space<smem>>
    %136 = vector.broadcast %135 : f32 to vector<16x16xf32>
    %137 = arith.mulf %136, %126 : vector<16x16xf32>
    %138 = arith.addf %120, %137 : vector<16x16xf32>
    %c114 = arith.constant 114 : index
    %139 = memref.load %arg2[%c114] : memref<144xf32, #tpu.memory_space<smem>>
    %140 = vector.broadcast %139 : f32 to vector<16x16xf32>
    %141 = arith.mulf %140, %126 : vector<16x16xf32>
    %142 = arith.addf %124, %141 : vector<16x16xf32>
    %c0_54 = arith.constant 0 : index
    %c2_55 = arith.constant 2 : index
    %c1_56 = arith.constant 1 : index
    %143 = vector.load %arg7[%c0_54, %c2_55, %c1_56] : memref<4x18x18xf32, #tpu.memory_space<vmem>>, vector<1x16x16xf32>
    %144 = vector.shape_cast %143 : vector<1x16x16xf32> to vector<16x16xf32>
    %c7 = arith.constant 7 : index
    %145 = memref.load %arg2[%c7] : memref<144xf32, #tpu.memory_space<smem>>
    %146 = vector.broadcast %145 : f32 to vector<16x16xf32>
    %147 = arith.mulf %146, %144 : vector<16x16xf32>
    %148 = arith.addf %130, %147 : vector<16x16xf32>
    %c43 = arith.constant 43 : index
    %149 = memref.load %arg2[%c43] : memref<144xf32, #tpu.memory_space<smem>>
    %150 = vector.broadcast %149 : f32 to vector<16x16xf32>
    %151 = arith.mulf %150, %144 : vector<16x16xf32>
    %152 = arith.addf %134, %151 : vector<16x16xf32>
    %c79 = arith.constant 79 : index
    %153 = memref.load %arg2[%c79] : memref<144xf32, #tpu.memory_space<smem>>
    %154 = vector.broadcast %153 : f32 to vector<16x16xf32>
    %155 = arith.mulf %154, %144 : vector<16x16xf32>
    %156 = arith.addf %138, %155 : vector<16x16xf32>
    %c115 = arith.constant 115 : index
    %157 = memref.load %arg2[%c115] : memref<144xf32, #tpu.memory_space<smem>>
    %158 = vector.broadcast %157 : f32 to vector<16x16xf32>
    %159 = arith.mulf %158, %144 : vector<16x16xf32>
    %160 = arith.addf %142, %159 : vector<16x16xf32>
    %c0_57 = arith.constant 0 : index
    %c2_58 = arith.constant 2 : index
    %c2_59 = arith.constant 2 : index
    %161 = vector.load %arg7[%c0_57, %c2_58, %c2_59] : memref<4x18x18xf32, #tpu.memory_space<vmem>>, vector<1x16x16xf32>
    %162 = vector.shape_cast %161 : vector<1x16x16xf32> to vector<16x16xf32>
    %c8 = arith.constant 8 : index
    %163 = memref.load %arg2[%c8] : memref<144xf32, #tpu.memory_space<smem>>
    %164 = vector.broadcast %163 : f32 to vector<16x16xf32>
    %165 = arith.mulf %164, %162 : vector<16x16xf32>
    %166 = arith.addf %148, %165 : vector<16x16xf32>
    %c44 = arith.constant 44 : index
    %167 = memref.load %arg2[%c44] : memref<144xf32, #tpu.memory_space<smem>>
    %168 = vector.broadcast %167 : f32 to vector<16x16xf32>
    %169 = arith.mulf %168, %162 : vector<16x16xf32>
    %170 = arith.addf %152, %169 : vector<16x16xf32>
    %c80 = arith.constant 80 : index
    %171 = memref.load %arg2[%c80] : memref<144xf32, #tpu.memory_space<smem>>
    %172 = vector.broadcast %171 : f32 to vector<16x16xf32>
    %173 = arith.mulf %172, %162 : vector<16x16xf32>
    %174 = arith.addf %156, %173 : vector<16x16xf32>
    %c116 = arith.constant 116 : index
    %175 = memref.load %arg2[%c116] : memref<144xf32, #tpu.memory_space<smem>>
    %176 = vector.broadcast %175 : f32 to vector<16x16xf32>
    %177 = arith.mulf %176, %162 : vector<16x16xf32>
    %178 = arith.addf %160, %177 : vector<16x16xf32>
    %c1_60 = arith.constant 1 : index
    %c0_61 = arith.constant 0 : index
    %c0_62 = arith.constant 0 : index
    %179 = vector.load %arg7[%c1_60, %c0_61, %c0_62] : memref<4x18x18xf32, #tpu.memory_space<vmem>>, vector<1x16x16xf32>
    %180 = vector.shape_cast %179 : vector<1x16x16xf32> to vector<16x16xf32>
    %c9 = arith.constant 9 : index
    %181 = memref.load %arg2[%c9] : memref<144xf32, #tpu.memory_space<smem>>
    %182 = vector.broadcast %181 : f32 to vector<16x16xf32>
    %183 = arith.mulf %182, %180 : vector<16x16xf32>
    %184 = arith.addf %166, %183 : vector<16x16xf32>
    %c45 = arith.constant 45 : index
    %185 = memref.load %arg2[%c45] : memref<144xf32, #tpu.memory_space<smem>>
    %186 = vector.broadcast %185 : f32 to vector<16x16xf32>
    %187 = arith.mulf %186, %180 : vector<16x16xf32>
    %188 = arith.addf %170, %187 : vector<16x16xf32>
    %c81 = arith.constant 81 : index
    %189 = memref.load %arg2[%c81] : memref<144xf32, #tpu.memory_space<smem>>
    %190 = vector.broadcast %189 : f32 to vector<16x16xf32>
    %191 = arith.mulf %190, %180 : vector<16x16xf32>
    %192 = arith.addf %174, %191 : vector<16x16xf32>
    %c117 = arith.constant 117 : index
    %193 = memref.load %arg2[%c117] : memref<144xf32, #tpu.memory_space<smem>>
    %194 = vector.broadcast %193 : f32 to vector<16x16xf32>
    %195 = arith.mulf %194, %180 : vector<16x16xf32>
    %196 = arith.addf %178, %195 : vector<16x16xf32>
    %c1_63 = arith.constant 1 : index
    %c0_64 = arith.constant 0 : index
    %c1_65 = arith.constant 1 : index
    %197 = vector.load %arg7[%c1_63, %c0_64, %c1_65] : memref<4x18x18xf32, #tpu.memory_space<vmem>>, vector<1x16x16xf32>
    %198 = vector.shape_cast %197 : vector<1x16x16xf32> to vector<16x16xf32>
    %c10 = arith.constant 10 : index
    %199 = memref.load %arg2[%c10] : memref<144xf32, #tpu.memory_space<smem>>
    %200 = vector.broadcast %199 : f32 to vector<16x16xf32>
    %201 = arith.mulf %200, %198 : vector<16x16xf32>
    %202 = arith.addf %184, %201 : vector<16x16xf32>
    %c46 = arith.constant 46 : index
    %203 = memref.load %arg2[%c46] : memref<144xf32, #tpu.memory_space<smem>>
    %204 = vector.broadcast %203 : f32 to vector<16x16xf32>
    %205 = arith.mulf %204, %198 : vector<16x16xf32>
    %206 = arith.addf %188, %205 : vector<16x16xf32>
    %c82 = arith.constant 82 : index
    %207 = memref.load %arg2[%c82] : memref<144xf32, #tpu.memory_space<smem>>
    %208 = vector.broadcast %207 : f32 to vector<16x16xf32>
    %209 = arith.mulf %208, %198 : vector<16x16xf32>
    %210 = arith.addf %192, %209 : vector<16x16xf32>
    %c118 = arith.constant 118 : index
    %211 = memref.load %arg2[%c118] : memref<144xf32, #tpu.memory_space<smem>>
    %212 = vector.broadcast %211 : f32 to vector<16x16xf32>
    %213 = arith.mulf %212, %198 : vector<16x16xf32>
    %214 = arith.addf %196, %213 : vector<16x16xf32>
    %c1_66 = arith.constant 1 : index
    %c0_67 = arith.constant 0 : index
    %c2_68 = arith.constant 2 : index
    %215 = vector.load %arg7[%c1_66, %c0_67, %c2_68] : memref<4x18x18xf32, #tpu.memory_space<vmem>>, vector<1x16x16xf32>
    %216 = vector.shape_cast %215 : vector<1x16x16xf32> to vector<16x16xf32>
    %c11 = arith.constant 11 : index
    %217 = memref.load %arg2[%c11] : memref<144xf32, #tpu.memory_space<smem>>
    %218 = vector.broadcast %217 : f32 to vector<16x16xf32>
    %219 = arith.mulf %218, %216 : vector<16x16xf32>
    %220 = arith.addf %202, %219 : vector<16x16xf32>
    %c47 = arith.constant 47 : index
    %221 = memref.load %arg2[%c47] : memref<144xf32, #tpu.memory_space<smem>>
    %222 = vector.broadcast %221 : f32 to vector<16x16xf32>
    %223 = arith.mulf %222, %216 : vector<16x16xf32>
    %224 = arith.addf %206, %223 : vector<16x16xf32>
    %c83 = arith.constant 83 : index
    %225 = memref.load %arg2[%c83] : memref<144xf32, #tpu.memory_space<smem>>
    %226 = vector.broadcast %225 : f32 to vector<16x16xf32>
    %227 = arith.mulf %226, %216 : vector<16x16xf32>
    %228 = arith.addf %210, %227 : vector<16x16xf32>
    %c119 = arith.constant 119 : index
    %229 = memref.load %arg2[%c119] : memref<144xf32, #tpu.memory_space<smem>>
    %230 = vector.broadcast %229 : f32 to vector<16x16xf32>
    %231 = arith.mulf %230, %216 : vector<16x16xf32>
    %232 = arith.addf %214, %231 : vector<16x16xf32>
    %c1_69 = arith.constant 1 : index
    %c1_70 = arith.constant 1 : index
    %c0_71 = arith.constant 0 : index
    %233 = vector.load %arg7[%c1_69, %c1_70, %c0_71] : memref<4x18x18xf32, #tpu.memory_space<vmem>>, vector<1x16x16xf32>
    %234 = vector.shape_cast %233 : vector<1x16x16xf32> to vector<16x16xf32>
    %c12 = arith.constant 12 : index
    %235 = memref.load %arg2[%c12] : memref<144xf32, #tpu.memory_space<smem>>
    %236 = vector.broadcast %235 : f32 to vector<16x16xf32>
    %237 = arith.mulf %236, %234 : vector<16x16xf32>
    %238 = arith.addf %220, %237 : vector<16x16xf32>
    %c48 = arith.constant 48 : index
    %239 = memref.load %arg2[%c48] : memref<144xf32, #tpu.memory_space<smem>>
    %240 = vector.broadcast %239 : f32 to vector<16x16xf32>
    %241 = arith.mulf %240, %234 : vector<16x16xf32>
    %242 = arith.addf %224, %241 : vector<16x16xf32>
    %c84 = arith.constant 84 : index
    %243 = memref.load %arg2[%c84] : memref<144xf32, #tpu.memory_space<smem>>
    %244 = vector.broadcast %243 : f32 to vector<16x16xf32>
    %245 = arith.mulf %244, %234 : vector<16x16xf32>
    %246 = arith.addf %228, %245 : vector<16x16xf32>
    %c120 = arith.constant 120 : index
    %247 = memref.load %arg2[%c120] : memref<144xf32, #tpu.memory_space<smem>>
    %248 = vector.broadcast %247 : f32 to vector<16x16xf32>
    %249 = arith.mulf %248, %234 : vector<16x16xf32>
    %250 = arith.addf %232, %249 : vector<16x16xf32>
    %c1_72 = arith.constant 1 : index
    %c1_73 = arith.constant 1 : index
    %c1_74 = arith.constant 1 : index
    %251 = vector.load %arg7[%c1_72, %c1_73, %c1_74] : memref<4x18x18xf32, #tpu.memory_space<vmem>>, vector<1x16x16xf32>
    %252 = vector.shape_cast %251 : vector<1x16x16xf32> to vector<16x16xf32>
    %c13 = arith.constant 13 : index
    %253 = memref.load %arg2[%c13] : memref<144xf32, #tpu.memory_space<smem>>
    %254 = vector.broadcast %253 : f32 to vector<16x16xf32>
    %255 = arith.mulf %254, %252 : vector<16x16xf32>
    %256 = arith.addf %238, %255 : vector<16x16xf32>
    %c49 = arith.constant 49 : index
    %257 = memref.load %arg2[%c49] : memref<144xf32, #tpu.memory_space<smem>>
    %258 = vector.broadcast %257 : f32 to vector<16x16xf32>
    %259 = arith.mulf %258, %252 : vector<16x16xf32>
    %260 = arith.addf %242, %259 : vector<16x16xf32>
    %c85 = arith.constant 85 : index
    %261 = memref.load %arg2[%c85] : memref<144xf32, #tpu.memory_space<smem>>
    %262 = vector.broadcast %261 : f32 to vector<16x16xf32>
    %263 = arith.mulf %262, %252 : vector<16x16xf32>
    %264 = arith.addf %246, %263 : vector<16x16xf32>
    %c121 = arith.constant 121 : index
    %265 = memref.load %arg2[%c121] : memref<144xf32, #tpu.memory_space<smem>>
    %266 = vector.broadcast %265 : f32 to vector<16x16xf32>
    %267 = arith.mulf %266, %252 : vector<16x16xf32>
    %268 = arith.addf %250, %267 : vector<16x16xf32>
    %c1_75 = arith.constant 1 : index
    %c1_76 = arith.constant 1 : index
    %c2_77 = arith.constant 2 : index
    %269 = vector.load %arg7[%c1_75, %c1_76, %c2_77] : memref<4x18x18xf32, #tpu.memory_space<vmem>>, vector<1x16x16xf32>
    %270 = vector.shape_cast %269 : vector<1x16x16xf32> to vector<16x16xf32>
    %c14_78 = arith.constant 14 : index
    %271 = memref.load %arg2[%c14_78] : memref<144xf32, #tpu.memory_space<smem>>
    %272 = vector.broadcast %271 : f32 to vector<16x16xf32>
    %273 = arith.mulf %272, %270 : vector<16x16xf32>
    %274 = arith.addf %256, %273 : vector<16x16xf32>
    %c50 = arith.constant 50 : index
    %275 = memref.load %arg2[%c50] : memref<144xf32, #tpu.memory_space<smem>>
    %276 = vector.broadcast %275 : f32 to vector<16x16xf32>
    %277 = arith.mulf %276, %270 : vector<16x16xf32>
    %278 = arith.addf %260, %277 : vector<16x16xf32>
    %c86 = arith.constant 86 : index
    %279 = memref.load %arg2[%c86] : memref<144xf32, #tpu.memory_space<smem>>
    %280 = vector.broadcast %279 : f32 to vector<16x16xf32>
    %281 = arith.mulf %280, %270 : vector<16x16xf32>
    %282 = arith.addf %264, %281 : vector<16x16xf32>
    %c122 = arith.constant 122 : index
    %283 = memref.load %arg2[%c122] : memref<144xf32, #tpu.memory_space<smem>>
    %284 = vector.broadcast %283 : f32 to vector<16x16xf32>
    %285 = arith.mulf %284, %270 : vector<16x16xf32>
    %286 = arith.addf %268, %285 : vector<16x16xf32>
    %c1_79 = arith.constant 1 : index
    %c2_80 = arith.constant 2 : index
    %c0_81 = arith.constant 0 : index
    %287 = vector.load %arg7[%c1_79, %c2_80, %c0_81] : memref<4x18x18xf32, #tpu.memory_space<vmem>>, vector<1x16x16xf32>
    %288 = vector.shape_cast %287 : vector<1x16x16xf32> to vector<16x16xf32>
    %c15_82 = arith.constant 15 : index
    %289 = memref.load %arg2[%c15_82] : memref<144xf32, #tpu.memory_space<smem>>
    %290 = vector.broadcast %289 : f32 to vector<16x16xf32>
    %291 = arith.mulf %290, %288 : vector<16x16xf32>
    %292 = arith.addf %274, %291 : vector<16x16xf32>
    %c51 = arith.constant 51 : index
    %293 = memref.load %arg2[%c51] : memref<144xf32, #tpu.memory_space<smem>>
    %294 = vector.broadcast %293 : f32 to vector<16x16xf32>
    %295 = arith.mulf %294, %288 : vector<16x16xf32>
    %296 = arith.addf %278, %295 : vector<16x16xf32>
    %c87 = arith.constant 87 : index
    %297 = memref.load %arg2[%c87] : memref<144xf32, #tpu.memory_space<smem>>
    %298 = vector.broadcast %297 : f32 to vector<16x16xf32>
    %299 = arith.mulf %298, %288 : vector<16x16xf32>
    %300 = arith.addf %282, %299 : vector<16x16xf32>
    %c123 = arith.constant 123 : index
    %301 = memref.load %arg2[%c123] : memref<144xf32, #tpu.memory_space<smem>>
    %302 = vector.broadcast %301 : f32 to vector<16x16xf32>
    %303 = arith.mulf %302, %288 : vector<16x16xf32>
    %304 = arith.addf %286, %303 : vector<16x16xf32>
    %c1_83 = arith.constant 1 : index
    %c2_84 = arith.constant 2 : index
    %c1_85 = arith.constant 1 : index
    %305 = vector.load %arg7[%c1_83, %c2_84, %c1_85] : memref<4x18x18xf32, #tpu.memory_space<vmem>>, vector<1x16x16xf32>
    %306 = vector.shape_cast %305 : vector<1x16x16xf32> to vector<16x16xf32>
    %c16 = arith.constant 16 : index
    %307 = memref.load %arg2[%c16] : memref<144xf32, #tpu.memory_space<smem>>
    %308 = vector.broadcast %307 : f32 to vector<16x16xf32>
    %309 = arith.mulf %308, %306 : vector<16x16xf32>
    %310 = arith.addf %292, %309 : vector<16x16xf32>
    %c52 = arith.constant 52 : index
    %311 = memref.load %arg2[%c52] : memref<144xf32, #tpu.memory_space<smem>>
    %312 = vector.broadcast %311 : f32 to vector<16x16xf32>
    %313 = arith.mulf %312, %306 : vector<16x16xf32>
    %314 = arith.addf %296, %313 : vector<16x16xf32>
    %c88 = arith.constant 88 : index
    %315 = memref.load %arg2[%c88] : memref<144xf32, #tpu.memory_space<smem>>
    %316 = vector.broadcast %315 : f32 to vector<16x16xf32>
    %317 = arith.mulf %316, %306 : vector<16x16xf32>
    %318 = arith.addf %300, %317 : vector<16x16xf32>
    %c124 = arith.constant 124 : index
    %319 = memref.load %arg2[%c124] : memref<144xf32, #tpu.memory_space<smem>>
    %320 = vector.broadcast %319 : f32 to vector<16x16xf32>
    %321 = arith.mulf %320, %306 : vector<16x16xf32>
    %322 = arith.addf %304, %321 : vector<16x16xf32>
    %c1_86 = arith.constant 1 : index
    %c2_87 = arith.constant 2 : index
    %c2_88 = arith.constant 2 : index
    %323 = vector.load %arg7[%c1_86, %c2_87, %c2_88] : memref<4x18x18xf32, #tpu.memory_space<vmem>>, vector<1x16x16xf32>
    %324 = vector.shape_cast %323 : vector<1x16x16xf32> to vector<16x16xf32>
    %c17_89 = arith.constant 17 : index
    %325 = memref.load %arg2[%c17_89] : memref<144xf32, #tpu.memory_space<smem>>
    %326 = vector.broadcast %325 : f32 to vector<16x16xf32>
    %327 = arith.mulf %326, %324 : vector<16x16xf32>
    %328 = arith.addf %310, %327 : vector<16x16xf32>
    %c53 = arith.constant 53 : index
    %329 = memref.load %arg2[%c53] : memref<144xf32, #tpu.memory_space<smem>>
    %330 = vector.broadcast %329 : f32 to vector<16x16xf32>
    %331 = arith.mulf %330, %324 : vector<16x16xf32>
    %332 = arith.addf %314, %331 : vector<16x16xf32>
    %c89 = arith.constant 89 : index
    %333 = memref.load %arg2[%c89] : memref<144xf32, #tpu.memory_space<smem>>
    %334 = vector.broadcast %333 : f32 to vector<16x16xf32>
    %335 = arith.mulf %334, %324 : vector<16x16xf32>
    %336 = arith.addf %318, %335 : vector<16x16xf32>
    %c125 = arith.constant 125 : index
    %337 = memref.load %arg2[%c125] : memref<144xf32, #tpu.memory_space<smem>>
    %338 = vector.broadcast %337 : f32 to vector<16x16xf32>
    %339 = arith.mulf %338, %324 : vector<16x16xf32>
    %340 = arith.addf %322, %339 : vector<16x16xf32>
    %c2_90 = arith.constant 2 : index
    %c0_91 = arith.constant 0 : index
    %c0_92 = arith.constant 0 : index
    %341 = vector.load %arg7[%c2_90, %c0_91, %c0_92] : memref<4x18x18xf32, #tpu.memory_space<vmem>>, vector<1x16x16xf32>
    %342 = vector.shape_cast %341 : vector<1x16x16xf32> to vector<16x16xf32>
    %c18 = arith.constant 18 : index
    %343 = memref.load %arg2[%c18] : memref<144xf32, #tpu.memory_space<smem>>
    %344 = vector.broadcast %343 : f32 to vector<16x16xf32>
    %345 = arith.mulf %344, %342 : vector<16x16xf32>
    %346 = arith.addf %328, %345 : vector<16x16xf32>
    %c54 = arith.constant 54 : index
    %347 = memref.load %arg2[%c54] : memref<144xf32, #tpu.memory_space<smem>>
    %348 = vector.broadcast %347 : f32 to vector<16x16xf32>
    %349 = arith.mulf %348, %342 : vector<16x16xf32>
    %350 = arith.addf %332, %349 : vector<16x16xf32>
    %c90 = arith.constant 90 : index
    %351 = memref.load %arg2[%c90] : memref<144xf32, #tpu.memory_space<smem>>
    %352 = vector.broadcast %351 : f32 to vector<16x16xf32>
    %353 = arith.mulf %352, %342 : vector<16x16xf32>
    %354 = arith.addf %336, %353 : vector<16x16xf32>
    %c126 = arith.constant 126 : index
    %355 = memref.load %arg2[%c126] : memref<144xf32, #tpu.memory_space<smem>>
    %356 = vector.broadcast %355 : f32 to vector<16x16xf32>
    %357 = arith.mulf %356, %342 : vector<16x16xf32>
    %358 = arith.addf %340, %357 : vector<16x16xf32>
    %c2_93 = arith.constant 2 : index
    %c0_94 = arith.constant 0 : index
    %c1_95 = arith.constant 1 : index
    %359 = vector.load %arg7[%c2_93, %c0_94, %c1_95] : memref<4x18x18xf32, #tpu.memory_space<vmem>>, vector<1x16x16xf32>
    %360 = vector.shape_cast %359 : vector<1x16x16xf32> to vector<16x16xf32>
    %c19 = arith.constant 19 : index
    %361 = memref.load %arg2[%c19] : memref<144xf32, #tpu.memory_space<smem>>
    %362 = vector.broadcast %361 : f32 to vector<16x16xf32>
    %363 = arith.mulf %362, %360 : vector<16x16xf32>
    %364 = arith.addf %346, %363 : vector<16x16xf32>
    %c55 = arith.constant 55 : index
    %365 = memref.load %arg2[%c55] : memref<144xf32, #tpu.memory_space<smem>>
    %366 = vector.broadcast %365 : f32 to vector<16x16xf32>
    %367 = arith.mulf %366, %360 : vector<16x16xf32>
    %368 = arith.addf %350, %367 : vector<16x16xf32>
    %c91 = arith.constant 91 : index
    %369 = memref.load %arg2[%c91] : memref<144xf32, #tpu.memory_space<smem>>
    %370 = vector.broadcast %369 : f32 to vector<16x16xf32>
    %371 = arith.mulf %370, %360 : vector<16x16xf32>
    %372 = arith.addf %354, %371 : vector<16x16xf32>
    %c127 = arith.constant 127 : index
    %373 = memref.load %arg2[%c127] : memref<144xf32, #tpu.memory_space<smem>>
    %374 = vector.broadcast %373 : f32 to vector<16x16xf32>
    %375 = arith.mulf %374, %360 : vector<16x16xf32>
    %376 = arith.addf %358, %375 : vector<16x16xf32>
    %c2_96 = arith.constant 2 : index
    %c0_97 = arith.constant 0 : index
    %c2_98 = arith.constant 2 : index
    %377 = vector.load %arg7[%c2_96, %c0_97, %c2_98] : memref<4x18x18xf32, #tpu.memory_space<vmem>>, vector<1x16x16xf32>
    %378 = vector.shape_cast %377 : vector<1x16x16xf32> to vector<16x16xf32>
    %c20 = arith.constant 20 : index
    %379 = memref.load %arg2[%c20] : memref<144xf32, #tpu.memory_space<smem>>
    %380 = vector.broadcast %379 : f32 to vector<16x16xf32>
    %381 = arith.mulf %380, %378 : vector<16x16xf32>
    %382 = arith.addf %364, %381 : vector<16x16xf32>
    %c56 = arith.constant 56 : index
    %383 = memref.load %arg2[%c56] : memref<144xf32, #tpu.memory_space<smem>>
    %384 = vector.broadcast %383 : f32 to vector<16x16xf32>
    %385 = arith.mulf %384, %378 : vector<16x16xf32>
    %386 = arith.addf %368, %385 : vector<16x16xf32>
    %c92 = arith.constant 92 : index
    %387 = memref.load %arg2[%c92] : memref<144xf32, #tpu.memory_space<smem>>
    %388 = vector.broadcast %387 : f32 to vector<16x16xf32>
    %389 = arith.mulf %388, %378 : vector<16x16xf32>
    %390 = arith.addf %372, %389 : vector<16x16xf32>
    %c128 = arith.constant 128 : index
    %391 = memref.load %arg2[%c128] : memref<144xf32, #tpu.memory_space<smem>>
    %392 = vector.broadcast %391 : f32 to vector<16x16xf32>
    %393 = arith.mulf %392, %378 : vector<16x16xf32>
    %394 = arith.addf %376, %393 : vector<16x16xf32>
    %c2_99 = arith.constant 2 : index
    %c1_100 = arith.constant 1 : index
    %c0_101 = arith.constant 0 : index
    %395 = vector.load %arg7[%c2_99, %c1_100, %c0_101] : memref<4x18x18xf32, #tpu.memory_space<vmem>>, vector<1x16x16xf32>
    %396 = vector.shape_cast %395 : vector<1x16x16xf32> to vector<16x16xf32>
    %c21 = arith.constant 21 : index
    %397 = memref.load %arg2[%c21] : memref<144xf32, #tpu.memory_space<smem>>
    %398 = vector.broadcast %397 : f32 to vector<16x16xf32>
    %399 = arith.mulf %398, %396 : vector<16x16xf32>
    %400 = arith.addf %382, %399 : vector<16x16xf32>
    %c57 = arith.constant 57 : index
    %401 = memref.load %arg2[%c57] : memref<144xf32, #tpu.memory_space<smem>>
    %402 = vector.broadcast %401 : f32 to vector<16x16xf32>
    %403 = arith.mulf %402, %396 : vector<16x16xf32>
    %404 = arith.addf %386, %403 : vector<16x16xf32>
    %c93 = arith.constant 93 : index
    %405 = memref.load %arg2[%c93] : memref<144xf32, #tpu.memory_space<smem>>
    %406 = vector.broadcast %405 : f32 to vector<16x16xf32>
    %407 = arith.mulf %406, %396 : vector<16x16xf32>
    %408 = arith.addf %390, %407 : vector<16x16xf32>
    %c129 = arith.constant 129 : index
    %409 = memref.load %arg2[%c129] : memref<144xf32, #tpu.memory_space<smem>>
    %410 = vector.broadcast %409 : f32 to vector<16x16xf32>
    %411 = arith.mulf %410, %396 : vector<16x16xf32>
    %412 = arith.addf %394, %411 : vector<16x16xf32>
    %c2_102 = arith.constant 2 : index
    %c1_103 = arith.constant 1 : index
    %c1_104 = arith.constant 1 : index
    %413 = vector.load %arg7[%c2_102, %c1_103, %c1_104] : memref<4x18x18xf32, #tpu.memory_space<vmem>>, vector<1x16x16xf32>
    %414 = vector.shape_cast %413 : vector<1x16x16xf32> to vector<16x16xf32>
    %c22 = arith.constant 22 : index
    %415 = memref.load %arg2[%c22] : memref<144xf32, #tpu.memory_space<smem>>
    %416 = vector.broadcast %415 : f32 to vector<16x16xf32>
    %417 = arith.mulf %416, %414 : vector<16x16xf32>
    %418 = arith.addf %400, %417 : vector<16x16xf32>
    %c58 = arith.constant 58 : index
    %419 = memref.load %arg2[%c58] : memref<144xf32, #tpu.memory_space<smem>>
    %420 = vector.broadcast %419 : f32 to vector<16x16xf32>
    %421 = arith.mulf %420, %414 : vector<16x16xf32>
    %422 = arith.addf %404, %421 : vector<16x16xf32>
    %c94 = arith.constant 94 : index
    %423 = memref.load %arg2[%c94] : memref<144xf32, #tpu.memory_space<smem>>
    %424 = vector.broadcast %423 : f32 to vector<16x16xf32>
    %425 = arith.mulf %424, %414 : vector<16x16xf32>
    %426 = arith.addf %408, %425 : vector<16x16xf32>
    %c130 = arith.constant 130 : index
    %427 = memref.load %arg2[%c130] : memref<144xf32, #tpu.memory_space<smem>>
    %428 = vector.broadcast %427 : f32 to vector<16x16xf32>
    %429 = arith.mulf %428, %414 : vector<16x16xf32>
    %430 = arith.addf %412, %429 : vector<16x16xf32>
    %c2_105 = arith.constant 2 : index
    %c1_106 = arith.constant 1 : index
    %c2_107 = arith.constant 2 : index
    %431 = vector.load %arg7[%c2_105, %c1_106, %c2_107] : memref<4x18x18xf32, #tpu.memory_space<vmem>>, vector<1x16x16xf32>
    %432 = vector.shape_cast %431 : vector<1x16x16xf32> to vector<16x16xf32>
    %c23 = arith.constant 23 : index
    %433 = memref.load %arg2[%c23] : memref<144xf32, #tpu.memory_space<smem>>
    %434 = vector.broadcast %433 : f32 to vector<16x16xf32>
    %435 = arith.mulf %434, %432 : vector<16x16xf32>
    %436 = arith.addf %418, %435 : vector<16x16xf32>
    %c59 = arith.constant 59 : index
    %437 = memref.load %arg2[%c59] : memref<144xf32, #tpu.memory_space<smem>>
    %438 = vector.broadcast %437 : f32 to vector<16x16xf32>
    %439 = arith.mulf %438, %432 : vector<16x16xf32>
    %440 = arith.addf %422, %439 : vector<16x16xf32>
    %c95 = arith.constant 95 : index
    %441 = memref.load %arg2[%c95] : memref<144xf32, #tpu.memory_space<smem>>
    %442 = vector.broadcast %441 : f32 to vector<16x16xf32>
    %443 = arith.mulf %442, %432 : vector<16x16xf32>
    %444 = arith.addf %426, %443 : vector<16x16xf32>
    %c131 = arith.constant 131 : index
    %445 = memref.load %arg2[%c131] : memref<144xf32, #tpu.memory_space<smem>>
    %446 = vector.broadcast %445 : f32 to vector<16x16xf32>
    %447 = arith.mulf %446, %432 : vector<16x16xf32>
    %448 = arith.addf %430, %447 : vector<16x16xf32>
    %c2_108 = arith.constant 2 : index
    %c2_109 = arith.constant 2 : index
    %c0_110 = arith.constant 0 : index
    %449 = vector.load %arg7[%c2_108, %c2_109, %c0_110] : memref<4x18x18xf32, #tpu.memory_space<vmem>>, vector<1x16x16xf32>
    %450 = vector.shape_cast %449 : vector<1x16x16xf32> to vector<16x16xf32>
    %c24 = arith.constant 24 : index
    %451 = memref.load %arg2[%c24] : memref<144xf32, #tpu.memory_space<smem>>
    %452 = vector.broadcast %451 : f32 to vector<16x16xf32>
    %453 = arith.mulf %452, %450 : vector<16x16xf32>
    %454 = arith.addf %436, %453 : vector<16x16xf32>
    %c60 = arith.constant 60 : index
    %455 = memref.load %arg2[%c60] : memref<144xf32, #tpu.memory_space<smem>>
    %456 = vector.broadcast %455 : f32 to vector<16x16xf32>
    %457 = arith.mulf %456, %450 : vector<16x16xf32>
    %458 = arith.addf %440, %457 : vector<16x16xf32>
    %c96 = arith.constant 96 : index
    %459 = memref.load %arg2[%c96] : memref<144xf32, #tpu.memory_space<smem>>
    %460 = vector.broadcast %459 : f32 to vector<16x16xf32>
    %461 = arith.mulf %460, %450 : vector<16x16xf32>
    %462 = arith.addf %444, %461 : vector<16x16xf32>
    %c132 = arith.constant 132 : index
    %463 = memref.load %arg2[%c132] : memref<144xf32, #tpu.memory_space<smem>>
    %464 = vector.broadcast %463 : f32 to vector<16x16xf32>
    %465 = arith.mulf %464, %450 : vector<16x16xf32>
    %466 = arith.addf %448, %465 : vector<16x16xf32>
    %c2_111 = arith.constant 2 : index
    %c2_112 = arith.constant 2 : index
    %c1_113 = arith.constant 1 : index
    %467 = vector.load %arg7[%c2_111, %c2_112, %c1_113] : memref<4x18x18xf32, #tpu.memory_space<vmem>>, vector<1x16x16xf32>
    %468 = vector.shape_cast %467 : vector<1x16x16xf32> to vector<16x16xf32>
    %c25 = arith.constant 25 : index
    %469 = memref.load %arg2[%c25] : memref<144xf32, #tpu.memory_space<smem>>
    %470 = vector.broadcast %469 : f32 to vector<16x16xf32>
    %471 = arith.mulf %470, %468 : vector<16x16xf32>
    %472 = arith.addf %454, %471 : vector<16x16xf32>
    %c61 = arith.constant 61 : index
    %473 = memref.load %arg2[%c61] : memref<144xf32, #tpu.memory_space<smem>>
    %474 = vector.broadcast %473 : f32 to vector<16x16xf32>
    %475 = arith.mulf %474, %468 : vector<16x16xf32>
    %476 = arith.addf %458, %475 : vector<16x16xf32>
    %c97 = arith.constant 97 : index
    %477 = memref.load %arg2[%c97] : memref<144xf32, #tpu.memory_space<smem>>
    %478 = vector.broadcast %477 : f32 to vector<16x16xf32>
    %479 = arith.mulf %478, %468 : vector<16x16xf32>
    %480 = arith.addf %462, %479 : vector<16x16xf32>
    %c133 = arith.constant 133 : index
    %481 = memref.load %arg2[%c133] : memref<144xf32, #tpu.memory_space<smem>>
    %482 = vector.broadcast %481 : f32 to vector<16x16xf32>
    %483 = arith.mulf %482, %468 : vector<16x16xf32>
    %484 = arith.addf %466, %483 : vector<16x16xf32>
    %c2_114 = arith.constant 2 : index
    %c2_115 = arith.constant 2 : index
    %c2_116 = arith.constant 2 : index
    %485 = vector.load %arg7[%c2_114, %c2_115, %c2_116] : memref<4x18x18xf32, #tpu.memory_space<vmem>>, vector<1x16x16xf32>
    %486 = vector.shape_cast %485 : vector<1x16x16xf32> to vector<16x16xf32>
    %c26 = arith.constant 26 : index
    %487 = memref.load %arg2[%c26] : memref<144xf32, #tpu.memory_space<smem>>
    %488 = vector.broadcast %487 : f32 to vector<16x16xf32>
    %489 = arith.mulf %488, %486 : vector<16x16xf32>
    %490 = arith.addf %472, %489 : vector<16x16xf32>
    %c62 = arith.constant 62 : index
    %491 = memref.load %arg2[%c62] : memref<144xf32, #tpu.memory_space<smem>>
    %492 = vector.broadcast %491 : f32 to vector<16x16xf32>
    %493 = arith.mulf %492, %486 : vector<16x16xf32>
    %494 = arith.addf %476, %493 : vector<16x16xf32>
    %c98 = arith.constant 98 : index
    %495 = memref.load %arg2[%c98] : memref<144xf32, #tpu.memory_space<smem>>
    %496 = vector.broadcast %495 : f32 to vector<16x16xf32>
    %497 = arith.mulf %496, %486 : vector<16x16xf32>
    %498 = arith.addf %480, %497 : vector<16x16xf32>
    %c134 = arith.constant 134 : index
    %499 = memref.load %arg2[%c134] : memref<144xf32, #tpu.memory_space<smem>>
    %500 = vector.broadcast %499 : f32 to vector<16x16xf32>
    %501 = arith.mulf %500, %486 : vector<16x16xf32>
    %502 = arith.addf %484, %501 : vector<16x16xf32>
    %c3_117 = arith.constant 3 : index
    %c0_118 = arith.constant 0 : index
    %c0_119 = arith.constant 0 : index
    %503 = vector.load %arg7[%c3_117, %c0_118, %c0_119] : memref<4x18x18xf32, #tpu.memory_space<vmem>>, vector<1x16x16xf32>
    %504 = vector.shape_cast %503 : vector<1x16x16xf32> to vector<16x16xf32>
    %c27 = arith.constant 27 : index
    %505 = memref.load %arg2[%c27] : memref<144xf32, #tpu.memory_space<smem>>
    %506 = vector.broadcast %505 : f32 to vector<16x16xf32>
    %507 = arith.mulf %506, %504 : vector<16x16xf32>
    %508 = arith.addf %490, %507 : vector<16x16xf32>
    %c63 = arith.constant 63 : index
    %509 = memref.load %arg2[%c63] : memref<144xf32, #tpu.memory_space<smem>>
    %510 = vector.broadcast %509 : f32 to vector<16x16xf32>
    %511 = arith.mulf %510, %504 : vector<16x16xf32>
    %512 = arith.addf %494, %511 : vector<16x16xf32>
    %c99 = arith.constant 99 : index
    %513 = memref.load %arg2[%c99] : memref<144xf32, #tpu.memory_space<smem>>
    %514 = vector.broadcast %513 : f32 to vector<16x16xf32>
    %515 = arith.mulf %514, %504 : vector<16x16xf32>
    %516 = arith.addf %498, %515 : vector<16x16xf32>
    %c135 = arith.constant 135 : index
    %517 = memref.load %arg2[%c135] : memref<144xf32, #tpu.memory_space<smem>>
    %518 = vector.broadcast %517 : f32 to vector<16x16xf32>
    %519 = arith.mulf %518, %504 : vector<16x16xf32>
    %520 = arith.addf %502, %519 : vector<16x16xf32>
    %c3_120 = arith.constant 3 : index
    %c0_121 = arith.constant 0 : index
    %c1_122 = arith.constant 1 : index
    %521 = vector.load %arg7[%c3_120, %c0_121, %c1_122] : memref<4x18x18xf32, #tpu.memory_space<vmem>>, vector<1x16x16xf32>
    %522 = vector.shape_cast %521 : vector<1x16x16xf32> to vector<16x16xf32>
    %c28 = arith.constant 28 : index
    %523 = memref.load %arg2[%c28] : memref<144xf32, #tpu.memory_space<smem>>
    %524 = vector.broadcast %523 : f32 to vector<16x16xf32>
    %525 = arith.mulf %524, %522 : vector<16x16xf32>
    %526 = arith.addf %508, %525 : vector<16x16xf32>
    %c64 = arith.constant 64 : index
    %527 = memref.load %arg2[%c64] : memref<144xf32, #tpu.memory_space<smem>>
    %528 = vector.broadcast %527 : f32 to vector<16x16xf32>
    %529 = arith.mulf %528, %522 : vector<16x16xf32>
    %530 = arith.addf %512, %529 : vector<16x16xf32>
    %c100 = arith.constant 100 : index
    %531 = memref.load %arg2[%c100] : memref<144xf32, #tpu.memory_space<smem>>
    %532 = vector.broadcast %531 : f32 to vector<16x16xf32>
    %533 = arith.mulf %532, %522 : vector<16x16xf32>
    %534 = arith.addf %516, %533 : vector<16x16xf32>
    %c136 = arith.constant 136 : index
    %535 = memref.load %arg2[%c136] : memref<144xf32, #tpu.memory_space<smem>>
    %536 = vector.broadcast %535 : f32 to vector<16x16xf32>
    %537 = arith.mulf %536, %522 : vector<16x16xf32>
    %538 = arith.addf %520, %537 : vector<16x16xf32>
    %c3_123 = arith.constant 3 : index
    %c0_124 = arith.constant 0 : index
    %c2_125 = arith.constant 2 : index
    %539 = vector.load %arg7[%c3_123, %c0_124, %c2_125] : memref<4x18x18xf32, #tpu.memory_space<vmem>>, vector<1x16x16xf32>
    %540 = vector.shape_cast %539 : vector<1x16x16xf32> to vector<16x16xf32>
    %c29 = arith.constant 29 : index
    %541 = memref.load %arg2[%c29] : memref<144xf32, #tpu.memory_space<smem>>
    %542 = vector.broadcast %541 : f32 to vector<16x16xf32>
    %543 = arith.mulf %542, %540 : vector<16x16xf32>
    %544 = arith.addf %526, %543 : vector<16x16xf32>
    %c65 = arith.constant 65 : index
    %545 = memref.load %arg2[%c65] : memref<144xf32, #tpu.memory_space<smem>>
    %546 = vector.broadcast %545 : f32 to vector<16x16xf32>
    %547 = arith.mulf %546, %540 : vector<16x16xf32>
    %548 = arith.addf %530, %547 : vector<16x16xf32>
    %c101 = arith.constant 101 : index
    %549 = memref.load %arg2[%c101] : memref<144xf32, #tpu.memory_space<smem>>
    %550 = vector.broadcast %549 : f32 to vector<16x16xf32>
    %551 = arith.mulf %550, %540 : vector<16x16xf32>
    %552 = arith.addf %534, %551 : vector<16x16xf32>
    %c137 = arith.constant 137 : index
    %553 = memref.load %arg2[%c137] : memref<144xf32, #tpu.memory_space<smem>>
    %554 = vector.broadcast %553 : f32 to vector<16x16xf32>
    %555 = arith.mulf %554, %540 : vector<16x16xf32>
    %556 = arith.addf %538, %555 : vector<16x16xf32>
    %c3_126 = arith.constant 3 : index
    %c1_127 = arith.constant 1 : index
    %c0_128 = arith.constant 0 : index
    %557 = vector.load %arg7[%c3_126, %c1_127, %c0_128] : memref<4x18x18xf32, #tpu.memory_space<vmem>>, vector<1x16x16xf32>
    %558 = vector.shape_cast %557 : vector<1x16x16xf32> to vector<16x16xf32>
    %c30 = arith.constant 30 : index
    %559 = memref.load %arg2[%c30] : memref<144xf32, #tpu.memory_space<smem>>
    %560 = vector.broadcast %559 : f32 to vector<16x16xf32>
    %561 = arith.mulf %560, %558 : vector<16x16xf32>
    %562 = arith.addf %544, %561 : vector<16x16xf32>
    %c66 = arith.constant 66 : index
    %563 = memref.load %arg2[%c66] : memref<144xf32, #tpu.memory_space<smem>>
    %564 = vector.broadcast %563 : f32 to vector<16x16xf32>
    %565 = arith.mulf %564, %558 : vector<16x16xf32>
    %566 = arith.addf %548, %565 : vector<16x16xf32>
    %c102 = arith.constant 102 : index
    %567 = memref.load %arg2[%c102] : memref<144xf32, #tpu.memory_space<smem>>
    %568 = vector.broadcast %567 : f32 to vector<16x16xf32>
    %569 = arith.mulf %568, %558 : vector<16x16xf32>
    %570 = arith.addf %552, %569 : vector<16x16xf32>
    %c138 = arith.constant 138 : index
    %571 = memref.load %arg2[%c138] : memref<144xf32, #tpu.memory_space<smem>>
    %572 = vector.broadcast %571 : f32 to vector<16x16xf32>
    %573 = arith.mulf %572, %558 : vector<16x16xf32>
    %574 = arith.addf %556, %573 : vector<16x16xf32>
    %c3_129 = arith.constant 3 : index
    %c1_130 = arith.constant 1 : index
    %c1_131 = arith.constant 1 : index
    %575 = vector.load %arg7[%c3_129, %c1_130, %c1_131] : memref<4x18x18xf32, #tpu.memory_space<vmem>>, vector<1x16x16xf32>
    %576 = vector.shape_cast %575 : vector<1x16x16xf32> to vector<16x16xf32>
    %c31 = arith.constant 31 : index
    %577 = memref.load %arg2[%c31] : memref<144xf32, #tpu.memory_space<smem>>
    %578 = vector.broadcast %577 : f32 to vector<16x16xf32>
    %579 = arith.mulf %578, %576 : vector<16x16xf32>
    %580 = arith.addf %562, %579 : vector<16x16xf32>
    %c67 = arith.constant 67 : index
    %581 = memref.load %arg2[%c67] : memref<144xf32, #tpu.memory_space<smem>>
    %582 = vector.broadcast %581 : f32 to vector<16x16xf32>
    %583 = arith.mulf %582, %576 : vector<16x16xf32>
    %584 = arith.addf %566, %583 : vector<16x16xf32>
    %c103 = arith.constant 103 : index
    %585 = memref.load %arg2[%c103] : memref<144xf32, #tpu.memory_space<smem>>
    %586 = vector.broadcast %585 : f32 to vector<16x16xf32>
    %587 = arith.mulf %586, %576 : vector<16x16xf32>
    %588 = arith.addf %570, %587 : vector<16x16xf32>
    %c139 = arith.constant 139 : index
    %589 = memref.load %arg2[%c139] : memref<144xf32, #tpu.memory_space<smem>>
    %590 = vector.broadcast %589 : f32 to vector<16x16xf32>
    %591 = arith.mulf %590, %576 : vector<16x16xf32>
    %592 = arith.addf %574, %591 : vector<16x16xf32>
    %c3_132 = arith.constant 3 : index
    %c1_133 = arith.constant 1 : index
    %c2_134 = arith.constant 2 : index
    %593 = vector.load %arg7[%c3_132, %c1_133, %c2_134] : memref<4x18x18xf32, #tpu.memory_space<vmem>>, vector<1x16x16xf32>
    %594 = vector.shape_cast %593 : vector<1x16x16xf32> to vector<16x16xf32>
    %c32 = arith.constant 32 : index
    %595 = memref.load %arg2[%c32] : memref<144xf32, #tpu.memory_space<smem>>
    %596 = vector.broadcast %595 : f32 to vector<16x16xf32>
    %597 = arith.mulf %596, %594 : vector<16x16xf32>
    %598 = arith.addf %580, %597 : vector<16x16xf32>
    %c68 = arith.constant 68 : index
    %599 = memref.load %arg2[%c68] : memref<144xf32, #tpu.memory_space<smem>>
    %600 = vector.broadcast %599 : f32 to vector<16x16xf32>
    %601 = arith.mulf %600, %594 : vector<16x16xf32>
    %602 = arith.addf %584, %601 : vector<16x16xf32>
    %c104 = arith.constant 104 : index
    %603 = memref.load %arg2[%c104] : memref<144xf32, #tpu.memory_space<smem>>
    %604 = vector.broadcast %603 : f32 to vector<16x16xf32>
    %605 = arith.mulf %604, %594 : vector<16x16xf32>
    %606 = arith.addf %588, %605 : vector<16x16xf32>
    %c140 = arith.constant 140 : index
    %607 = memref.load %arg2[%c140] : memref<144xf32, #tpu.memory_space<smem>>
    %608 = vector.broadcast %607 : f32 to vector<16x16xf32>
    %609 = arith.mulf %608, %594 : vector<16x16xf32>
    %610 = arith.addf %592, %609 : vector<16x16xf32>
    %c3_135 = arith.constant 3 : index
    %c2_136 = arith.constant 2 : index
    %c0_137 = arith.constant 0 : index
    %611 = vector.load %arg7[%c3_135, %c2_136, %c0_137] : memref<4x18x18xf32, #tpu.memory_space<vmem>>, vector<1x16x16xf32>
    %612 = vector.shape_cast %611 : vector<1x16x16xf32> to vector<16x16xf32>
    %c33 = arith.constant 33 : index
    %613 = memref.load %arg2[%c33] : memref<144xf32, #tpu.memory_space<smem>>
    %614 = vector.broadcast %613 : f32 to vector<16x16xf32>
    %615 = arith.mulf %614, %612 : vector<16x16xf32>
    %616 = arith.addf %598, %615 : vector<16x16xf32>
    %c69 = arith.constant 69 : index
    %617 = memref.load %arg2[%c69] : memref<144xf32, #tpu.memory_space<smem>>
    %618 = vector.broadcast %617 : f32 to vector<16x16xf32>
    %619 = arith.mulf %618, %612 : vector<16x16xf32>
    %620 = arith.addf %602, %619 : vector<16x16xf32>
    %c105 = arith.constant 105 : index
    %621 = memref.load %arg2[%c105] : memref<144xf32, #tpu.memory_space<smem>>
    %622 = vector.broadcast %621 : f32 to vector<16x16xf32>
    %623 = arith.mulf %622, %612 : vector<16x16xf32>
    %624 = arith.addf %606, %623 : vector<16x16xf32>
    %c141 = arith.constant 141 : index
    %625 = memref.load %arg2[%c141] : memref<144xf32, #tpu.memory_space<smem>>
    %626 = vector.broadcast %625 : f32 to vector<16x16xf32>
    %627 = arith.mulf %626, %612 : vector<16x16xf32>
    %628 = arith.addf %610, %627 : vector<16x16xf32>
    %c3_138 = arith.constant 3 : index
    %c2_139 = arith.constant 2 : index
    %c1_140 = arith.constant 1 : index
    %629 = vector.load %arg7[%c3_138, %c2_139, %c1_140] : memref<4x18x18xf32, #tpu.memory_space<vmem>>, vector<1x16x16xf32>
    %630 = vector.shape_cast %629 : vector<1x16x16xf32> to vector<16x16xf32>
    %c34 = arith.constant 34 : index
    %631 = memref.load %arg2[%c34] : memref<144xf32, #tpu.memory_space<smem>>
    %632 = vector.broadcast %631 : f32 to vector<16x16xf32>
    %633 = arith.mulf %632, %630 : vector<16x16xf32>
    %634 = arith.addf %616, %633 : vector<16x16xf32>
    %c70 = arith.constant 70 : index
    %635 = memref.load %arg2[%c70] : memref<144xf32, #tpu.memory_space<smem>>
    %636 = vector.broadcast %635 : f32 to vector<16x16xf32>
    %637 = arith.mulf %636, %630 : vector<16x16xf32>
    %638 = arith.addf %620, %637 : vector<16x16xf32>
    %c106 = arith.constant 106 : index
    %639 = memref.load %arg2[%c106] : memref<144xf32, #tpu.memory_space<smem>>
    %640 = vector.broadcast %639 : f32 to vector<16x16xf32>
    %641 = arith.mulf %640, %630 : vector<16x16xf32>
    %642 = arith.addf %624, %641 : vector<16x16xf32>
    %c142 = arith.constant 142 : index
    %643 = memref.load %arg2[%c142] : memref<144xf32, #tpu.memory_space<smem>>
    %644 = vector.broadcast %643 : f32 to vector<16x16xf32>
    %645 = arith.mulf %644, %630 : vector<16x16xf32>
    %646 = arith.addf %628, %645 : vector<16x16xf32>
    %c3_141 = arith.constant 3 : index
    %c2_142 = arith.constant 2 : index
    %c2_143 = arith.constant 2 : index
    %647 = vector.load %arg7[%c3_141, %c2_142, %c2_143] : memref<4x18x18xf32, #tpu.memory_space<vmem>>, vector<1x16x16xf32>
    %648 = vector.shape_cast %647 : vector<1x16x16xf32> to vector<16x16xf32>
    %c35 = arith.constant 35 : index
    %649 = memref.load %arg2[%c35] : memref<144xf32, #tpu.memory_space<smem>>
    %650 = vector.broadcast %649 : f32 to vector<16x16xf32>
    %651 = arith.mulf %650, %648 : vector<16x16xf32>
    %652 = arith.addf %634, %651 : vector<16x16xf32>
    %c71 = arith.constant 71 : index
    %653 = memref.load %arg2[%c71] : memref<144xf32, #tpu.memory_space<smem>>
    %654 = vector.broadcast %653 : f32 to vector<16x16xf32>
    %655 = arith.mulf %654, %648 : vector<16x16xf32>
    %656 = arith.addf %638, %655 : vector<16x16xf32>
    %c107 = arith.constant 107 : index
    %657 = memref.load %arg2[%c107] : memref<144xf32, #tpu.memory_space<smem>>
    %658 = vector.broadcast %657 : f32 to vector<16x16xf32>
    %659 = arith.mulf %658, %648 : vector<16x16xf32>
    %660 = arith.addf %642, %659 : vector<16x16xf32>
    %c143 = arith.constant 143 : index
    %661 = memref.load %arg2[%c143] : memref<144xf32, #tpu.memory_space<smem>>
    %662 = vector.broadcast %661 : f32 to vector<16x16xf32>
    %663 = arith.mulf %662, %648 : vector<16x16xf32>
    %664 = arith.addf %646, %663 : vector<16x16xf32>
    %c0_144 = arith.constant 0 : index
    %665 = memref.load %arg3[%c0_144] : memref<4xf32, #tpu.memory_space<smem>>
    %666 = vector.broadcast %665 : f32 to vector<16x16xf32>
    %667 = arith.addf %652, %666 : vector<16x16xf32>
    %c1_145 = arith.constant 1 : index
    %668 = memref.load %arg3[%c1_145] : memref<4xf32, #tpu.memory_space<smem>>
    %669 = vector.broadcast %668 : f32 to vector<16x16xf32>
    %670 = arith.addf %656, %669 : vector<16x16xf32>
    %c2_146 = arith.constant 2 : index
    %671 = memref.load %arg3[%c2_146] : memref<4xf32, #tpu.memory_space<smem>>
    %672 = vector.broadcast %671 : f32 to vector<16x16xf32>
    %673 = arith.addf %660, %672 : vector<16x16xf32>
    %c3_147 = arith.constant 3 : index
    %674 = memref.load %arg3[%c3_147] : memref<4xf32, #tpu.memory_space<smem>>
    %675 = vector.broadcast %674 : f32 to vector<16x16xf32>
    %676 = arith.addf %664, %675 : vector<16x16xf32>
    %cst_148 = arith.constant 0.000000e+00 : f32
    %677 = vector.broadcast %cst_148 : f32 to vector<16x16xf32>
    %678 = arith.maximumf %667, %677 : vector<16x16xf32>
    %c0_149 = arith.constant 0 : index
    %c1_150 = arith.constant 1 : index
    %c1_151 = arith.constant 1 : index
    %679 = vector.load %arg8[%c0_149, %c1_150, %c1_151] : memref<4x18x18xf32, #tpu.memory_space<vmem>>, vector<1x16x16xf32>
    %680 = vector.shape_cast %679 : vector<1x16x16xf32> to vector<16x16xf32>
    %681 = vector.shape_cast %678 : vector<16x16xf32> to vector<1x16x16xf32>
    tpu.vector_store %arg8[%c0_149, %c1_150, %c1_151], %681 {strides = array<i32>} : memref<4x18x18xf32, #tpu.memory_space<vmem>>, vector<1x16x16xf32>,
    %cst_152 = arith.constant 0.000000e+00 : f32
    %682 = vector.broadcast %cst_152 : f32 to vector<16x16xf32>
    %683 = arith.maximumf %670, %682 : vector<16x16xf32>
    %c1_153 = arith.constant 1 : index
    %c1_154 = arith.constant 1 : index
    %c1_155 = arith.constant 1 : index
    %684 = vector.load %arg8[%c1_153, %c1_154, %c1_155] : memref<4x18x18xf32, #tpu.memory_space<vmem>>, vector<1x16x16xf32>
    %685 = vector.shape_cast %684 : vector<1x16x16xf32> to vector<16x16xf32>
    %686 = vector.shape_cast %683 : vector<16x16xf32> to vector<1x16x16xf32>
    tpu.vector_store %arg8[%c1_153, %c1_154, %c1_155], %686 {strides = array<i32>} : memref<4x18x18xf32, #tpu.memory_space<vmem>>, vector<1x16x16xf32>,
    %cst_156 = arith.constant 0.000000e+00 : f32
    %687 = vector.broadcast %cst_156 : f32 to vector<16x16xf32>
    %688 = arith.maximumf %673, %687 : vector<16x16xf32>
    %c2_157 = arith.constant 2 : index
    %c1_158 = arith.constant 1 : index
    %c1_159 = arith.constant 1 : index
    %689 = vector.load %arg8[%c2_157, %c1_158, %c1_159] : memref<4x18x18xf32, #tpu.memory_space<vmem>>, vector<1x16x16xf32>
    %690 = vector.shape_cast %689 : vector<1x16x16xf32> to vector<16x16xf32>
    %691 = vector.shape_cast %688 : vector<16x16xf32> to vector<1x16x16xf32>
    tpu.vector_store %arg8[%c2_157, %c1_158, %c1_159], %691 {strides = array<i32>} : memref<4x18x18xf32, #tpu.memory_space<vmem>>, vector<1x16x16xf32>,
    %cst_160 = arith.constant 0.000000e+00 : f32
    %692 = vector.broadcast %cst_160 : f32 to vector<16x16xf32>
    %693 = arith.maximumf %676, %692 : vector<16x16xf32>
    %c3_161 = arith.constant 3 : index
    %c1_162 = arith.constant 1 : index
    %c1_163 = arith.constant 1 : index
    %694 = vector.load %arg8[%c3_161, %c1_162, %c1_163] : memref<4x18x18xf32, #tpu.memory_space<vmem>>, vector<1x16x16xf32>
    %695 = vector.shape_cast %694 : vector<1x16x16xf32> to vector<16x16xf32>
    %696 = vector.shape_cast %693 : vector<16x16xf32> to vector<1x16x16xf32>
    tpu.vector_store %arg8[%c3_161, %c1_162, %c1_163], %696 {strides = array<i32>} : memref<4x18x18xf32, #tpu.memory_space<vmem>>, vector<1x16x16xf32>,
    %c0_164 = arith.constant 0 : index
    %c2_165 = arith.constant 2 : index
    %c1_166 = arith.constant 1 : index
    %697 = vector.load %arg8[%c0_164, %c2_165, %c1_166] : memref<4x18x18xf32, #tpu.memory_space<vmem>>, vector<4x1x16xf32>
    %c0_167 = arith.constant 0 : index
    %c0_168 = arith.constant 0 : index
    %c1_169 = arith.constant 1 : index
    %698 = vector.load %arg8[%c0_167, %c0_168, %c1_169] : memref<4x18x18xf32, #tpu.memory_space<vmem>>, vector<4x1x16xf32>
    tpu.vector_store %arg8[%c0_167, %c0_168, %c1_169], %697 {strides = array<i32>} : memref<4x18x18xf32, #tpu.memory_space<vmem>>, vector<4x1x16xf32>,
    %c0_170 = arith.constant 0 : index
    %c15_171 = arith.constant 15 : index
    %c1_172 = arith.constant 1 : index
    %699 = vector.load %arg8[%c0_170, %c15_171, %c1_172] : memref<4x18x18xf32, #tpu.memory_space<vmem>>, vector<4x1x16xf32>
    %c0_173 = arith.constant 0 : index
    %c17_174 = arith.constant 17 : index
    %c1_175 = arith.constant 1 : index
    %700 = vector.load %arg8[%c0_173, %c17_174, %c1_175] : memref<4x18x18xf32, #tpu.memory_space<vmem>>, vector<4x1x16xf32>
    tpu.vector_store %arg8[%c0_173, %c17_174, %c1_175], %699 {strides = array<i32>} : memref<4x18x18xf32, #tpu.memory_space<vmem>>, vector<4x1x16xf32>,
    %c0_176 = arith.constant 0 : index
    %c0_177 = arith.constant 0 : index
    %c2_178 = arith.constant 2 : index
    %701 = vector.load %arg8[%c0_176, %c0_177, %c2_178] : memref<4x18x18xf32, #tpu.memory_space<vmem>>, vector<4x18x1xf32>
    %c0_179 = arith.constant 0 : index
    %c0_180 = arith.constant 0 : index
    %c0_181 = arith.constant 0 : index
    %702 = vector.load %arg8[%c0_179, %c0_180, %c0_181] : memref<4x18x18xf32, #tpu.memory_space<vmem>>, vector<4x18x1xf32>
    tpu.vector_store %arg8[%c0_179, %c0_180, %c0_181], %701 {strides = array<i32>} : memref<4x18x18xf32, #tpu.memory_space<vmem>>, vector<4x18x1xf32>,
    %c0_182 = arith.constant 0 : index
    %c0_183 = arith.constant 0 : index
    %c15_184 = arith.constant 15 : index
    %703 = vector.load %arg8[%c0_182, %c0_183, %c15_184] : memref<4x18x18xf32, #tpu.memory_space<vmem>>, vector<4x18x1xf32>
    %c0_185 = arith.constant 0 : index
    %c0_186 = arith.constant 0 : index
    %c17_187 = arith.constant 17 : index
    %704 = vector.load %arg8[%c0_185, %c0_186, %c17_187] : memref<4x18x18xf32, #tpu.memory_space<vmem>>, vector<4x18x1xf32>
    tpu.vector_store %arg8[%c0_185, %c0_186, %c17_187], %703 {strides = array<i32>} : memref<4x18x18xf32, #tpu.memory_space<vmem>>, vector<4x18x1xf32>,
    %cst_188 = arith.constant 0.000000e+00 : f32
    %705 = vector.broadcast %cst_188 : f32 to vector<16x16xf32>
    %cst_189 = arith.constant 0.000000e+00 : f32
    %706 = vector.broadcast %cst_189 : f32 to vector<16x16xf32>
    %cst_190 = arith.constant 0.000000e+00 : f32
    %707 = vector.broadcast %cst_190 : f32 to vector<16x16xf32>
    %cst_191 = arith.constant 0.000000e+00 : f32
    %708 = vector.broadcast %cst_191 : f32 to vector<16x16xf32>
    %c0_192 = arith.constant 0 : index
    %c0_193 = arith.constant 0 : index
    %c0_194 = arith.constant 0 : index
    %709 = vector.load %arg8[%c0_192, %c0_193, %c0_194] : memref<4x18x18xf32, #tpu.memory_space<vmem>>, vector<1x16x16xf32>
    %710 = vector.shape_cast %709 : vector<1x16x16xf32> to vector<16x16xf32>
    %c0_195 = arith.constant 0 : index
    %711 = memref.load %arg4[%c0_195] : memref<144xf32, #tpu.memory_space<smem>>
    %712 = vector.broadcast %711 : f32 to vector<16x16xf32>
    %713 = arith.mulf %712, %710 : vector<16x16xf32>
    %714 = arith.addf %705, %713 : vector<16x16xf32>
    %c36_196 = arith.constant 36 : index
    %715 = memref.load %arg4[%c36_196] : memref<144xf32, #tpu.memory_space<smem>>
    %716 = vector.broadcast %715 : f32 to vector<16x16xf32>
    %717 = arith.mulf %716, %710 : vector<16x16xf32>
    %718 = arith.addf %706, %717 : vector<16x16xf32>
    %c72_197 = arith.constant 72 : index
    %719 = memref.load %arg4[%c72_197] : memref<144xf32, #tpu.memory_space<smem>>
    %720 = vector.broadcast %719 : f32 to vector<16x16xf32>
    %721 = arith.mulf %720, %710 : vector<16x16xf32>
    %722 = arith.addf %707, %721 : vector<16x16xf32>
    %c108_198 = arith.constant 108 : index
    %723 = memref.load %arg4[%c108_198] : memref<144xf32, #tpu.memory_space<smem>>
    %724 = vector.broadcast %723 : f32 to vector<16x16xf32>
    %725 = arith.mulf %724, %710 : vector<16x16xf32>
    %726 = arith.addf %708, %725 : vector<16x16xf32>
    %c0_199 = arith.constant 0 : index
    %c0_200 = arith.constant 0 : index
    %c1_201 = arith.constant 1 : index
    %727 = vector.load %arg8[%c0_199, %c0_200, %c1_201] : memref<4x18x18xf32, #tpu.memory_space<vmem>>, vector<1x16x16xf32>
    %728 = vector.shape_cast %727 : vector<1x16x16xf32> to vector<16x16xf32>
    %c1_202 = arith.constant 1 : index
    %729 = memref.load %arg4[%c1_202] : memref<144xf32, #tpu.memory_space<smem>>
    %730 = vector.broadcast %729 : f32 to vector<16x16xf32>
    %731 = arith.mulf %730, %728 : vector<16x16xf32>
    %732 = arith.addf %714, %731 : vector<16x16xf32>
    %c37_203 = arith.constant 37 : index
    %733 = memref.load %arg4[%c37_203] : memref<144xf32, #tpu.memory_space<smem>>
    %734 = vector.broadcast %733 : f32 to vector<16x16xf32>
    %735 = arith.mulf %734, %728 : vector<16x16xf32>
    %736 = arith.addf %718, %735 : vector<16x16xf32>
    %c73_204 = arith.constant 73 : index
    %737 = memref.load %arg4[%c73_204] : memref<144xf32, #tpu.memory_space<smem>>
    %738 = vector.broadcast %737 : f32 to vector<16x16xf32>
    %739 = arith.mulf %738, %728 : vector<16x16xf32>
    %740 = arith.addf %722, %739 : vector<16x16xf32>
    %c109_205 = arith.constant 109 : index
    %741 = memref.load %arg4[%c109_205] : memref<144xf32, #tpu.memory_space<smem>>
    %742 = vector.broadcast %741 : f32 to vector<16x16xf32>
    %743 = arith.mulf %742, %728 : vector<16x16xf32>
    %744 = arith.addf %726, %743 : vector<16x16xf32>
    %c0_206 = arith.constant 0 : index
    %c0_207 = arith.constant 0 : index
    %c2_208 = arith.constant 2 : index
    %745 = vector.load %arg8[%c0_206, %c0_207, %c2_208] : memref<4x18x18xf32, #tpu.memory_space<vmem>>, vector<1x16x16xf32>
    %746 = vector.shape_cast %745 : vector<1x16x16xf32> to vector<16x16xf32>
    %c2_209 = arith.constant 2 : index
    %747 = memref.load %arg4[%c2_209] : memref<144xf32, #tpu.memory_space<smem>>
    %748 = vector.broadcast %747 : f32 to vector<16x16xf32>
    %749 = arith.mulf %748, %746 : vector<16x16xf32>
    %750 = arith.addf %732, %749 : vector<16x16xf32>
    %c38_210 = arith.constant 38 : index
    %751 = memref.load %arg4[%c38_210] : memref<144xf32, #tpu.memory_space<smem>>
    %752 = vector.broadcast %751 : f32 to vector<16x16xf32>
    %753 = arith.mulf %752, %746 : vector<16x16xf32>
    %754 = arith.addf %736, %753 : vector<16x16xf32>
    %c74_211 = arith.constant 74 : index
    %755 = memref.load %arg4[%c74_211] : memref<144xf32, #tpu.memory_space<smem>>
    %756 = vector.broadcast %755 : f32 to vector<16x16xf32>
    %757 = arith.mulf %756, %746 : vector<16x16xf32>
    %758 = arith.addf %740, %757 : vector<16x16xf32>
    %c110_212 = arith.constant 110 : index
    %759 = memref.load %arg4[%c110_212] : memref<144xf32, #tpu.memory_space<smem>>
    %760 = vector.broadcast %759 : f32 to vector<16x16xf32>
    %761 = arith.mulf %760, %746 : vector<16x16xf32>
    %762 = arith.addf %744, %761 : vector<16x16xf32>
    %c0_213 = arith.constant 0 : index
    %c1_214 = arith.constant 1 : index
    %c0_215 = arith.constant 0 : index
    %763 = vector.load %arg8[%c0_213, %c1_214, %c0_215] : memref<4x18x18xf32, #tpu.memory_space<vmem>>, vector<1x16x16xf32>
    %764 = vector.shape_cast %763 : vector<1x16x16xf32> to vector<16x16xf32>
    %c3_216 = arith.constant 3 : index
    %765 = memref.load %arg4[%c3_216] : memref<144xf32, #tpu.memory_space<smem>>
    %766 = vector.broadcast %765 : f32 to vector<16x16xf32>
    %767 = arith.mulf %766, %764 : vector<16x16xf32>
    %768 = arith.addf %750, %767 : vector<16x16xf32>
    %c39_217 = arith.constant 39 : index
    %769 = memref.load %arg4[%c39_217] : memref<144xf32, #tpu.memory_space<smem>>
    %770 = vector.broadcast %769 : f32 to vector<16x16xf32>
    %771 = arith.mulf %770, %764 : vector<16x16xf32>
    %772 = arith.addf %754, %771 : vector<16x16xf32>
    %c75_218 = arith.constant 75 : index
    %773 = memref.load %arg4[%c75_218] : memref<144xf32, #tpu.memory_space<smem>>
    %774 = vector.broadcast %773 : f32 to vector<16x16xf32>
    %775 = arith.mulf %774, %764 : vector<16x16xf32>
    %776 = arith.addf %758, %775 : vector<16x16xf32>
    %c111_219 = arith.constant 111 : index
    %777 = memref.load %arg4[%c111_219] : memref<144xf32, #tpu.memory_space<smem>>
    %778 = vector.broadcast %777 : f32 to vector<16x16xf32>
    %779 = arith.mulf %778, %764 : vector<16x16xf32>
    %780 = arith.addf %762, %779 : vector<16x16xf32>
    %c0_220 = arith.constant 0 : index
    %c1_221 = arith.constant 1 : index
    %c1_222 = arith.constant 1 : index
    %781 = vector.load %arg8[%c0_220, %c1_221, %c1_222] : memref<4x18x18xf32, #tpu.memory_space<vmem>>, vector<1x16x16xf32>
    %782 = vector.shape_cast %781 : vector<1x16x16xf32> to vector<16x16xf32>
    %c4_223 = arith.constant 4 : index
    %783 = memref.load %arg4[%c4_223] : memref<144xf32, #tpu.memory_space<smem>>
    %784 = vector.broadcast %783 : f32 to vector<16x16xf32>
    %785 = arith.mulf %784, %782 : vector<16x16xf32>
    %786 = arith.addf %768, %785 : vector<16x16xf32>
    %c40_224 = arith.constant 40 : index
    %787 = memref.load %arg4[%c40_224] : memref<144xf32, #tpu.memory_space<smem>>
    %788 = vector.broadcast %787 : f32 to vector<16x16xf32>
    %789 = arith.mulf %788, %782 : vector<16x16xf32>
    %790 = arith.addf %772, %789 : vector<16x16xf32>
    %c76_225 = arith.constant 76 : index
    %791 = memref.load %arg4[%c76_225] : memref<144xf32, #tpu.memory_space<smem>>
    %792 = vector.broadcast %791 : f32 to vector<16x16xf32>
    %793 = arith.mulf %792, %782 : vector<16x16xf32>
    %794 = arith.addf %776, %793 : vector<16x16xf32>
    %c112_226 = arith.constant 112 : index
    %795 = memref.load %arg4[%c112_226] : memref<144xf32, #tpu.memory_space<smem>>
    %796 = vector.broadcast %795 : f32 to vector<16x16xf32>
    %797 = arith.mulf %796, %782 : vector<16x16xf32>
    %798 = arith.addf %780, %797 : vector<16x16xf32>
    %c0_227 = arith.constant 0 : index
    %c1_228 = arith.constant 1 : index
    %c2_229 = arith.constant 2 : index
    %799 = vector.load %arg8[%c0_227, %c1_228, %c2_229] : memref<4x18x18xf32, #tpu.memory_space<vmem>>, vector<1x16x16xf32>
    %800 = vector.shape_cast %799 : vector<1x16x16xf32> to vector<16x16xf32>
    %c5_230 = arith.constant 5 : index
    %801 = memref.load %arg4[%c5_230] : memref<144xf32, #tpu.memory_space<smem>>
    %802 = vector.broadcast %801 : f32 to vector<16x16xf32>
    %803 = arith.mulf %802, %800 : vector<16x16xf32>
    %804 = arith.addf %786, %803 : vector<16x16xf32>
    %c41_231 = arith.constant 41 : index
    %805 = memref.load %arg4[%c41_231] : memref<144xf32, #tpu.memory_space<smem>>
    %806 = vector.broadcast %805 : f32 to vector<16x16xf32>
    %807 = arith.mulf %806, %800 : vector<16x16xf32>
    %808 = arith.addf %790, %807 : vector<16x16xf32>
    %c77_232 = arith.constant 77 : index
    %809 = memref.load %arg4[%c77_232] : memref<144xf32, #tpu.memory_space<smem>>
    %810 = vector.broadcast %809 : f32 to vector<16x16xf32>
    %811 = arith.mulf %810, %800 : vector<16x16xf32>
    %812 = arith.addf %794, %811 : vector<16x16xf32>
    %c113_233 = arith.constant 113 : index
    %813 = memref.load %arg4[%c113_233] : memref<144xf32, #tpu.memory_space<smem>>
    %814 = vector.broadcast %813 : f32 to vector<16x16xf32>
    %815 = arith.mulf %814, %800 : vector<16x16xf32>
    %816 = arith.addf %798, %815 : vector<16x16xf32>
    %c0_234 = arith.constant 0 : index
    %c2_235 = arith.constant 2 : index
    %c0_236 = arith.constant 0 : index
    %817 = vector.load %arg8[%c0_234, %c2_235, %c0_236] : memref<4x18x18xf32, #tpu.memory_space<vmem>>, vector<1x16x16xf32>
    %818 = vector.shape_cast %817 : vector<1x16x16xf32> to vector<16x16xf32>
    %c6_237 = arith.constant 6 : index
    %819 = memref.load %arg4[%c6_237] : memref<144xf32, #tpu.memory_space<smem>>
    %820 = vector.broadcast %819 : f32 to vector<16x16xf32>
    %821 = arith.mulf %820, %818 : vector<16x16xf32>
    %822 = arith.addf %804, %821 : vector<16x16xf32>
    %c42_238 = arith.constant 42 : index
    %823 = memref.load %arg4[%c42_238] : memref<144xf32, #tpu.memory_space<smem>>
    %824 = vector.broadcast %823 : f32 to vector<16x16xf32>
    %825 = arith.mulf %824, %818 : vector<16x16xf32>
    %826 = arith.addf %808, %825 : vector<16x16xf32>
    %c78_239 = arith.constant 78 : index
    %827 = memref.load %arg4[%c78_239] : memref<144xf32, #tpu.memory_space<smem>>
    %828 = vector.broadcast %827 : f32 to vector<16x16xf32>
    %829 = arith.mulf %828, %818 : vector<16x16xf32>
    %830 = arith.addf %812, %829 : vector<16x16xf32>
    %c114_240 = arith.constant 114 : index
    %831 = memref.load %arg4[%c114_240] : memref<144xf32, #tpu.memory_space<smem>>
    %832 = vector.broadcast %831 : f32 to vector<16x16xf32>
    %833 = arith.mulf %832, %818 : vector<16x16xf32>
    %834 = arith.addf %816, %833 : vector<16x16xf32>
    %c0_241 = arith.constant 0 : index
    %c2_242 = arith.constant 2 : index
    %c1_243 = arith.constant 1 : index
    %835 = vector.load %arg8[%c0_241, %c2_242, %c1_243] : memref<4x18x18xf32, #tpu.memory_space<vmem>>, vector<1x16x16xf32>
    %836 = vector.shape_cast %835 : vector<1x16x16xf32> to vector<16x16xf32>
    %c7_244 = arith.constant 7 : index
    %837 = memref.load %arg4[%c7_244] : memref<144xf32, #tpu.memory_space<smem>>
    %838 = vector.broadcast %837 : f32 to vector<16x16xf32>
    %839 = arith.mulf %838, %836 : vector<16x16xf32>
    %840 = arith.addf %822, %839 : vector<16x16xf32>
    %c43_245 = arith.constant 43 : index
    %841 = memref.load %arg4[%c43_245] : memref<144xf32, #tpu.memory_space<smem>>
    %842 = vector.broadcast %841 : f32 to vector<16x16xf32>
    %843 = arith.mulf %842, %836 : vector<16x16xf32>
    %844 = arith.addf %826, %843 : vector<16x16xf32>
    %c79_246 = arith.constant 79 : index
    %845 = memref.load %arg4[%c79_246] : memref<144xf32, #tpu.memory_space<smem>>
    %846 = vector.broadcast %845 : f32 to vector<16x16xf32>
    %847 = arith.mulf %846, %836 : vector<16x16xf32>
    %848 = arith.addf %830, %847 : vector<16x16xf32>
    %c115_247 = arith.constant 115 : index
    %849 = memref.load %arg4[%c115_247] : memref<144xf32, #tpu.memory_space<smem>>
    %850 = vector.broadcast %849 : f32 to vector<16x16xf32>
    %851 = arith.mulf %850, %836 : vector<16x16xf32>
    %852 = arith.addf %834, %851 : vector<16x16xf32>
    %c0_248 = arith.constant 0 : index
    %c2_249 = arith.constant 2 : index
    %c2_250 = arith.constant 2 : index
    %853 = vector.load %arg8[%c0_248, %c2_249, %c2_250] : memref<4x18x18xf32, #tpu.memory_space<vmem>>, vector<1x16x16xf32>
    %854 = vector.shape_cast %853 : vector<1x16x16xf32> to vector<16x16xf32>
    %c8_251 = arith.constant 8 : index
    %855 = memref.load %arg4[%c8_251] : memref<144xf32, #tpu.memory_space<smem>>
    %856 = vector.broadcast %855 : f32 to vector<16x16xf32>
    %857 = arith.mulf %856, %854 : vector<16x16xf32>
    %858 = arith.addf %840, %857 : vector<16x16xf32>
    %c44_252 = arith.constant 44 : index
    %859 = memref.load %arg4[%c44_252] : memref<144xf32, #tpu.memory_space<smem>>
    %860 = vector.broadcast %859 : f32 to vector<16x16xf32>
    %861 = arith.mulf %860, %854 : vector<16x16xf32>
    %862 = arith.addf %844, %861 : vector<16x16xf32>
    %c80_253 = arith.constant 80 : index
    %863 = memref.load %arg4[%c80_253] : memref<144xf32, #tpu.memory_space<smem>>
    %864 = vector.broadcast %863 : f32 to vector<16x16xf32>
    %865 = arith.mulf %864, %854 : vector<16x16xf32>
    %866 = arith.addf %848, %865 : vector<16x16xf32>
    %c116_254 = arith.constant 116 : index
    %867 = memref.load %arg4[%c116_254] : memref<144xf32, #tpu.memory_space<smem>>
    %868 = vector.broadcast %867 : f32 to vector<16x16xf32>
    %869 = arith.mulf %868, %854 : vector<16x16xf32>
    %870 = arith.addf %852, %869 : vector<16x16xf32>
    %c1_255 = arith.constant 1 : index
    %c0_256 = arith.constant 0 : index
    %c0_257 = arith.constant 0 : index
    %871 = vector.load %arg8[%c1_255, %c0_256, %c0_257] : memref<4x18x18xf32, #tpu.memory_space<vmem>>, vector<1x16x16xf32>
    %872 = vector.shape_cast %871 : vector<1x16x16xf32> to vector<16x16xf32>
    %c9_258 = arith.constant 9 : index
    %873 = memref.load %arg4[%c9_258] : memref<144xf32, #tpu.memory_space<smem>>
    %874 = vector.broadcast %873 : f32 to vector<16x16xf32>
    %875 = arith.mulf %874, %872 : vector<16x16xf32>
    %876 = arith.addf %858, %875 : vector<16x16xf32>
    %c45_259 = arith.constant 45 : index
    %877 = memref.load %arg4[%c45_259] : memref<144xf32, #tpu.memory_space<smem>>
    %878 = vector.broadcast %877 : f32 to vector<16x16xf32>
    %879 = arith.mulf %878, %872 : vector<16x16xf32>
    %880 = arith.addf %862, %879 : vector<16x16xf32>
    %c81_260 = arith.constant 81 : index
    %881 = memref.load %arg4[%c81_260] : memref<144xf32, #tpu.memory_space<smem>>
    %882 = vector.broadcast %881 : f32 to vector<16x16xf32>
    %883 = arith.mulf %882, %872 : vector<16x16xf32>
    %884 = arith.addf %866, %883 : vector<16x16xf32>
    %c117_261 = arith.constant 117 : index
    %885 = memref.load %arg4[%c117_261] : memref<144xf32, #tpu.memory_space<smem>>
    %886 = vector.broadcast %885 : f32 to vector<16x16xf32>
    %887 = arith.mulf %886, %872 : vector<16x16xf32>
    %888 = arith.addf %870, %887 : vector<16x16xf32>
    %c1_262 = arith.constant 1 : index
    %c0_263 = arith.constant 0 : index
    %c1_264 = arith.constant 1 : index
    %889 = vector.load %arg8[%c1_262, %c0_263, %c1_264] : memref<4x18x18xf32, #tpu.memory_space<vmem>>, vector<1x16x16xf32>
    %890 = vector.shape_cast %889 : vector<1x16x16xf32> to vector<16x16xf32>
    %c10_265 = arith.constant 10 : index
    %891 = memref.load %arg4[%c10_265] : memref<144xf32, #tpu.memory_space<smem>>
    %892 = vector.broadcast %891 : f32 to vector<16x16xf32>
    %893 = arith.mulf %892, %890 : vector<16x16xf32>
    %894 = arith.addf %876, %893 : vector<16x16xf32>
    %c46_266 = arith.constant 46 : index
    %895 = memref.load %arg4[%c46_266] : memref<144xf32, #tpu.memory_space<smem>>
    %896 = vector.broadcast %895 : f32 to vector<16x16xf32>
    %897 = arith.mulf %896, %890 : vector<16x16xf32>
    %898 = arith.addf %880, %897 : vector<16x16xf32>
    %c82_267 = arith.constant 82 : index
    %899 = memref.load %arg4[%c82_267] : memref<144xf32, #tpu.memory_space<smem>>
    %900 = vector.broadcast %899 : f32 to vector<16x16xf32>
    %901 = arith.mulf %900, %890 : vector<16x16xf32>
    %902 = arith.addf %884, %901 : vector<16x16xf32>
    %c118_268 = arith.constant 118 : index
    %903 = memref.load %arg4[%c118_268] : memref<144xf32, #tpu.memory_space<smem>>
    %904 = vector.broadcast %903 : f32 to vector<16x16xf32>
    %905 = arith.mulf %904, %890 : vector<16x16xf32>
    %906 = arith.addf %888, %905 : vector<16x16xf32>
    %c1_269 = arith.constant 1 : index
    %c0_270 = arith.constant 0 : index
    %c2_271 = arith.constant 2 : index
    %907 = vector.load %arg8[%c1_269, %c0_270, %c2_271] : memref<4x18x18xf32, #tpu.memory_space<vmem>>, vector<1x16x16xf32>
    %908 = vector.shape_cast %907 : vector<1x16x16xf32> to vector<16x16xf32>
    %c11_272 = arith.constant 11 : index
    %909 = memref.load %arg4[%c11_272] : memref<144xf32, #tpu.memory_space<smem>>
    %910 = vector.broadcast %909 : f32 to vector<16x16xf32>
    %911 = arith.mulf %910, %908 : vector<16x16xf32>
    %912 = arith.addf %894, %911 : vector<16x16xf32>
    %c47_273 = arith.constant 47 : index
    %913 = memref.load %arg4[%c47_273] : memref<144xf32, #tpu.memory_space<smem>>
    %914 = vector.broadcast %913 : f32 to vector<16x16xf32>
    %915 = arith.mulf %914, %908 : vector<16x16xf32>
    %916 = arith.addf %898, %915 : vector<16x16xf32>
    %c83_274 = arith.constant 83 : index
    %917 = memref.load %arg4[%c83_274] : memref<144xf32, #tpu.memory_space<smem>>
    %918 = vector.broadcast %917 : f32 to vector<16x16xf32>
    %919 = arith.mulf %918, %908 : vector<16x16xf32>
    %920 = arith.addf %902, %919 : vector<16x16xf32>
    %c119_275 = arith.constant 119 : index
    %921 = memref.load %arg4[%c119_275] : memref<144xf32, #tpu.memory_space<smem>>
    %922 = vector.broadcast %921 : f32 to vector<16x16xf32>
    %923 = arith.mulf %922, %908 : vector<16x16xf32>
    %924 = arith.addf %906, %923 : vector<16x16xf32>
    %c1_276 = arith.constant 1 : index
    %c1_277 = arith.constant 1 : index
    %c0_278 = arith.constant 0 : index
    %925 = vector.load %arg8[%c1_276, %c1_277, %c0_278] : memref<4x18x18xf32, #tpu.memory_space<vmem>>, vector<1x16x16xf32>
    %926 = vector.shape_cast %925 : vector<1x16x16xf32> to vector<16x16xf32>
    %c12_279 = arith.constant 12 : index
    %927 = memref.load %arg4[%c12_279] : memref<144xf32, #tpu.memory_space<smem>>
    %928 = vector.broadcast %927 : f32 to vector<16x16xf32>
    %929 = arith.mulf %928, %926 : vector<16x16xf32>
    %930 = arith.addf %912, %929 : vector<16x16xf32>
    %c48_280 = arith.constant 48 : index
    %931 = memref.load %arg4[%c48_280] : memref<144xf32, #tpu.memory_space<smem>>
    %932 = vector.broadcast %931 : f32 to vector<16x16xf32>
    %933 = arith.mulf %932, %926 : vector<16x16xf32>
    %934 = arith.addf %916, %933 : vector<16x16xf32>
    %c84_281 = arith.constant 84 : index
    %935 = memref.load %arg4[%c84_281] : memref<144xf32, #tpu.memory_space<smem>>
    %936 = vector.broadcast %935 : f32 to vector<16x16xf32>
    %937 = arith.mulf %936, %926 : vector<16x16xf32>
    %938 = arith.addf %920, %937 : vector<16x16xf32>
    %c120_282 = arith.constant 120 : index
    %939 = memref.load %arg4[%c120_282] : memref<144xf32, #tpu.memory_space<smem>>
    %940 = vector.broadcast %939 : f32 to vector<16x16xf32>
    %941 = arith.mulf %940, %926 : vector<16x16xf32>
    %942 = arith.addf %924, %941 : vector<16x16xf32>
    %c1_283 = arith.constant 1 : index
    %c1_284 = arith.constant 1 : index
    %c1_285 = arith.constant 1 : index
    %943 = vector.load %arg8[%c1_283, %c1_284, %c1_285] : memref<4x18x18xf32, #tpu.memory_space<vmem>>, vector<1x16x16xf32>
    %944 = vector.shape_cast %943 : vector<1x16x16xf32> to vector<16x16xf32>
    %c13_286 = arith.constant 13 : index
    %945 = memref.load %arg4[%c13_286] : memref<144xf32, #tpu.memory_space<smem>>
    %946 = vector.broadcast %945 : f32 to vector<16x16xf32>
    %947 = arith.mulf %946, %944 : vector<16x16xf32>
    %948 = arith.addf %930, %947 : vector<16x16xf32>
    %c49_287 = arith.constant 49 : index
    %949 = memref.load %arg4[%c49_287] : memref<144xf32, #tpu.memory_space<smem>>
    %950 = vector.broadcast %949 : f32 to vector<16x16xf32>
    %951 = arith.mulf %950, %944 : vector<16x16xf32>
    %952 = arith.addf %934, %951 : vector<16x16xf32>
    %c85_288 = arith.constant 85 : index
    %953 = memref.load %arg4[%c85_288] : memref<144xf32, #tpu.memory_space<smem>>
    %954 = vector.broadcast %953 : f32 to vector<16x16xf32>
    %955 = arith.mulf %954, %944 : vector<16x16xf32>
    %956 = arith.addf %938, %955 : vector<16x16xf32>
    %c121_289 = arith.constant 121 : index
    %957 = memref.load %arg4[%c121_289] : memref<144xf32, #tpu.memory_space<smem>>
    %958 = vector.broadcast %957 : f32 to vector<16x16xf32>
    %959 = arith.mulf %958, %944 : vector<16x16xf32>
    %960 = arith.addf %942, %959 : vector<16x16xf32>
    %c1_290 = arith.constant 1 : index
    %c1_291 = arith.constant 1 : index
    %c2_292 = arith.constant 2 : index
    %961 = vector.load %arg8[%c1_290, %c1_291, %c2_292] : memref<4x18x18xf32, #tpu.memory_space<vmem>>, vector<1x16x16xf32>
    %962 = vector.shape_cast %961 : vector<1x16x16xf32> to vector<16x16xf32>
    %c14_293 = arith.constant 14 : index
    %963 = memref.load %arg4[%c14_293] : memref<144xf32, #tpu.memory_space<smem>>
    %964 = vector.broadcast %963 : f32 to vector<16x16xf32>
    %965 = arith.mulf %964, %962 : vector<16x16xf32>
    %966 = arith.addf %948, %965 : vector<16x16xf32>
    %c50_294 = arith.constant 50 : index
    %967 = memref.load %arg4[%c50_294] : memref<144xf32, #tpu.memory_space<smem>>
    %968 = vector.broadcast %967 : f32 to vector<16x16xf32>
    %969 = arith.mulf %968, %962 : vector<16x16xf32>
    %970 = arith.addf %952, %969 : vector<16x16xf32>
    %c86_295 = arith.constant 86 : index
    %971 = memref.load %arg4[%c86_295] : memref<144xf32, #tpu.memory_space<smem>>
    %972 = vector.broadcast %971 : f32 to vector<16x16xf32>
    %973 = arith.mulf %972, %962 : vector<16x16xf32>
    %974 = arith.addf %956, %973 : vector<16x16xf32>
    %c122_296 = arith.constant 122 : index
    %975 = memref.load %arg4[%c122_296] : memref<144xf32, #tpu.memory_space<smem>>
    %976 = vector.broadcast %975 : f32 to vector<16x16xf32>
    %977 = arith.mulf %976, %962 : vector<16x16xf32>
    %978 = arith.addf %960, %977 : vector<16x16xf32>
    %c1_297 = arith.constant 1 : index
    %c2_298 = arith.constant 2 : index
    %c0_299 = arith.constant 0 : index
    %979 = vector.load %arg8[%c1_297, %c2_298, %c0_299] : memref<4x18x18xf32, #tpu.memory_space<vmem>>, vector<1x16x16xf32>
    %980 = vector.shape_cast %979 : vector<1x16x16xf32> to vector<16x16xf32>
    %c15_300 = arith.constant 15 : index
    %981 = memref.load %arg4[%c15_300] : memref<144xf32, #tpu.memory_space<smem>>
    %982 = vector.broadcast %981 : f32 to vector<16x16xf32>
    %983 = arith.mulf %982, %980 : vector<16x16xf32>
    %984 = arith.addf %966, %983 : vector<16x16xf32>
    %c51_301 = arith.constant 51 : index
    %985 = memref.load %arg4[%c51_301] : memref<144xf32, #tpu.memory_space<smem>>
    %986 = vector.broadcast %985 : f32 to vector<16x16xf32>
    %987 = arith.mulf %986, %980 : vector<16x16xf32>
    %988 = arith.addf %970, %987 : vector<16x16xf32>
    %c87_302 = arith.constant 87 : index
    %989 = memref.load %arg4[%c87_302] : memref<144xf32, #tpu.memory_space<smem>>
    %990 = vector.broadcast %989 : f32 to vector<16x16xf32>
    %991 = arith.mulf %990, %980 : vector<16x16xf32>
    %992 = arith.addf %974, %991 : vector<16x16xf32>
    %c123_303 = arith.constant 123 : index
    %993 = memref.load %arg4[%c123_303] : memref<144xf32, #tpu.memory_space<smem>>
    %994 = vector.broadcast %993 : f32 to vector<16x16xf32>
    %995 = arith.mulf %994, %980 : vector<16x16xf32>
    %996 = arith.addf %978, %995 : vector<16x16xf32>
    %c1_304 = arith.constant 1 : index
    %c2_305 = arith.constant 2 : index
    %c1_306 = arith.constant 1 : index
    %997 = vector.load %arg8[%c1_304, %c2_305, %c1_306] : memref<4x18x18xf32, #tpu.memory_space<vmem>>, vector<1x16x16xf32>
    %998 = vector.shape_cast %997 : vector<1x16x16xf32> to vector<16x16xf32>
    %c16_307 = arith.constant 16 : index
    %999 = memref.load %arg4[%c16_307] : memref<144xf32, #tpu.memory_space<smem>>
    %1000 = vector.broadcast %999 : f32 to vector<16x16xf32>
    %1001 = arith.mulf %1000, %998 : vector<16x16xf32>
    %1002 = arith.addf %984, %1001 : vector<16x16xf32>
    %c52_308 = arith.constant 52 : index
    %1003 = memref.load %arg4[%c52_308] : memref<144xf32, #tpu.memory_space<smem>>
    %1004 = vector.broadcast %1003 : f32 to vector<16x16xf32>
    %1005 = arith.mulf %1004, %998 : vector<16x16xf32>
    %1006 = arith.addf %988, %1005 : vector<16x16xf32>
    %c88_309 = arith.constant 88 : index
    %1007 = memref.load %arg4[%c88_309] : memref<144xf32, #tpu.memory_space<smem>>
    %1008 = vector.broadcast %1007 : f32 to vector<16x16xf32>
    %1009 = arith.mulf %1008, %998 : vector<16x16xf32>
    %1010 = arith.addf %992, %1009 : vector<16x16xf32>
    %c124_310 = arith.constant 124 : index
    %1011 = memref.load %arg4[%c124_310] : memref<144xf32, #tpu.memory_space<smem>>
    %1012 = vector.broadcast %1011 : f32 to vector<16x16xf32>
    %1013 = arith.mulf %1012, %998 : vector<16x16xf32>
    %1014 = arith.addf %996, %1013 : vector<16x16xf32>
    %c1_311 = arith.constant 1 : index
    %c2_312 = arith.constant 2 : index
    %c2_313 = arith.constant 2 : index
    %1015 = vector.load %arg8[%c1_311, %c2_312, %c2_313] : memref<4x18x18xf32, #tpu.memory_space<vmem>>, vector<1x16x16xf32>
    %1016 = vector.shape_cast %1015 : vector<1x16x16xf32> to vector<16x16xf32>
    %c17_314 = arith.constant 17 : index
    %1017 = memref.load %arg4[%c17_314] : memref<144xf32, #tpu.memory_space<smem>>
    %1018 = vector.broadcast %1017 : f32 to vector<16x16xf32>
    %1019 = arith.mulf %1018, %1016 : vector<16x16xf32>
    %1020 = arith.addf %1002, %1019 : vector<16x16xf32>
    %c53_315 = arith.constant 53 : index
    %1021 = memref.load %arg4[%c53_315] : memref<144xf32, #tpu.memory_space<smem>>
    %1022 = vector.broadcast %1021 : f32 to vector<16x16xf32>
    %1023 = arith.mulf %1022, %1016 : vector<16x16xf32>
    %1024 = arith.addf %1006, %1023 : vector<16x16xf32>
    %c89_316 = arith.constant 89 : index
    %1025 = memref.load %arg4[%c89_316] : memref<144xf32, #tpu.memory_space<smem>>
    %1026 = vector.broadcast %1025 : f32 to vector<16x16xf32>
    %1027 = arith.mulf %1026, %1016 : vector<16x16xf32>
    %1028 = arith.addf %1010, %1027 : vector<16x16xf32>
    %c125_317 = arith.constant 125 : index
    %1029 = memref.load %arg4[%c125_317] : memref<144xf32, #tpu.memory_space<smem>>
    %1030 = vector.broadcast %1029 : f32 to vector<16x16xf32>
    %1031 = arith.mulf %1030, %1016 : vector<16x16xf32>
    %1032 = arith.addf %1014, %1031 : vector<16x16xf32>
    %c2_318 = arith.constant 2 : index
    %c0_319 = arith.constant 0 : index
    %c0_320 = arith.constant 0 : index
    %1033 = vector.load %arg8[%c2_318, %c0_319, %c0_320] : memref<4x18x18xf32, #tpu.memory_space<vmem>>, vector<1x16x16xf32>
    %1034 = vector.shape_cast %1033 : vector<1x16x16xf32> to vector<16x16xf32>
    %c18_321 = arith.constant 18 : index
    %1035 = memref.load %arg4[%c18_321] : memref<144xf32, #tpu.memory_space<smem>>
    %1036 = vector.broadcast %1035 : f32 to vector<16x16xf32>
    %1037 = arith.mulf %1036, %1034 : vector<16x16xf32>
    %1038 = arith.addf %1020, %1037 : vector<16x16xf32>
    %c54_322 = arith.constant 54 : index
    %1039 = memref.load %arg4[%c54_322] : memref<144xf32, #tpu.memory_space<smem>>
    %1040 = vector.broadcast %1039 : f32 to vector<16x16xf32>
    %1041 = arith.mulf %1040, %1034 : vector<16x16xf32>
    %1042 = arith.addf %1024, %1041 : vector<16x16xf32>
    %c90_323 = arith.constant 90 : index
    %1043 = memref.load %arg4[%c90_323] : memref<144xf32, #tpu.memory_space<smem>>
    %1044 = vector.broadcast %1043 : f32 to vector<16x16xf32>
    %1045 = arith.mulf %1044, %1034 : vector<16x16xf32>
    %1046 = arith.addf %1028, %1045 : vector<16x16xf32>
    %c126_324 = arith.constant 126 : index
    %1047 = memref.load %arg4[%c126_324] : memref<144xf32, #tpu.memory_space<smem>>
    %1048 = vector.broadcast %1047 : f32 to vector<16x16xf32>
    %1049 = arith.mulf %1048, %1034 : vector<16x16xf32>
    %1050 = arith.addf %1032, %1049 : vector<16x16xf32>
    %c2_325 = arith.constant 2 : index
    %c0_326 = arith.constant 0 : index
    %c1_327 = arith.constant 1 : index
    %1051 = vector.load %arg8[%c2_325, %c0_326, %c1_327] : memref<4x18x18xf32, #tpu.memory_space<vmem>>, vector<1x16x16xf32>
    %1052 = vector.shape_cast %1051 : vector<1x16x16xf32> to vector<16x16xf32>
    %c19_328 = arith.constant 19 : index
    %1053 = memref.load %arg4[%c19_328] : memref<144xf32, #tpu.memory_space<smem>>
    %1054 = vector.broadcast %1053 : f32 to vector<16x16xf32>
    %1055 = arith.mulf %1054, %1052 : vector<16x16xf32>
    %1056 = arith.addf %1038, %1055 : vector<16x16xf32>
    %c55_329 = arith.constant 55 : index
    %1057 = memref.load %arg4[%c55_329] : memref<144xf32, #tpu.memory_space<smem>>
    %1058 = vector.broadcast %1057 : f32 to vector<16x16xf32>
    %1059 = arith.mulf %1058, %1052 : vector<16x16xf32>
    %1060 = arith.addf %1042, %1059 : vector<16x16xf32>
    %c91_330 = arith.constant 91 : index
    %1061 = memref.load %arg4[%c91_330] : memref<144xf32, #tpu.memory_space<smem>>
    %1062 = vector.broadcast %1061 : f32 to vector<16x16xf32>
    %1063 = arith.mulf %1062, %1052 : vector<16x16xf32>
    %1064 = arith.addf %1046, %1063 : vector<16x16xf32>
    %c127_331 = arith.constant 127 : index
    %1065 = memref.load %arg4[%c127_331] : memref<144xf32, #tpu.memory_space<smem>>
    %1066 = vector.broadcast %1065 : f32 to vector<16x16xf32>
    %1067 = arith.mulf %1066, %1052 : vector<16x16xf32>
    %1068 = arith.addf %1050, %1067 : vector<16x16xf32>
    %c2_332 = arith.constant 2 : index
    %c0_333 = arith.constant 0 : index
    %c2_334 = arith.constant 2 : index
    %1069 = vector.load %arg8[%c2_332, %c0_333, %c2_334] : memref<4x18x18xf32, #tpu.memory_space<vmem>>, vector<1x16x16xf32>
    %1070 = vector.shape_cast %1069 : vector<1x16x16xf32> to vector<16x16xf32>
    %c20_335 = arith.constant 20 : index
    %1071 = memref.load %arg4[%c20_335] : memref<144xf32, #tpu.memory_space<smem>>
    %1072 = vector.broadcast %1071 : f32 to vector<16x16xf32>
    %1073 = arith.mulf %1072, %1070 : vector<16x16xf32>
    %1074 = arith.addf %1056, %1073 : vector<16x16xf32>
    %c56_336 = arith.constant 56 : index
    %1075 = memref.load %arg4[%c56_336] : memref<144xf32, #tpu.memory_space<smem>>
    %1076 = vector.broadcast %1075 : f32 to vector<16x16xf32>
    %1077 = arith.mulf %1076, %1070 : vector<16x16xf32>
    %1078 = arith.addf %1060, %1077 : vector<16x16xf32>
    %c92_337 = arith.constant 92 : index
    %1079 = memref.load %arg4[%c92_337] : memref<144xf32, #tpu.memory_space<smem>>
    %1080 = vector.broadcast %1079 : f32 to vector<16x16xf32>
    %1081 = arith.mulf %1080, %1070 : vector<16x16xf32>
    %1082 = arith.addf %1064, %1081 : vector<16x16xf32>
    %c128_338 = arith.constant 128 : index
    %1083 = memref.load %arg4[%c128_338] : memref<144xf32, #tpu.memory_space<smem>>
    %1084 = vector.broadcast %1083 : f32 to vector<16x16xf32>
    %1085 = arith.mulf %1084, %1070 : vector<16x16xf32>
    %1086 = arith.addf %1068, %1085 : vector<16x16xf32>
    %c2_339 = arith.constant 2 : index
    %c1_340 = arith.constant 1 : index
    %c0_341 = arith.constant 0 : index
    %1087 = vector.load %arg8[%c2_339, %c1_340, %c0_341] : memref<4x18x18xf32, #tpu.memory_space<vmem>>, vector<1x16x16xf32>
    %1088 = vector.shape_cast %1087 : vector<1x16x16xf32> to vector<16x16xf32>
    %c21_342 = arith.constant 21 : index
    %1089 = memref.load %arg4[%c21_342] : memref<144xf32, #tpu.memory_space<smem>>
    %1090 = vector.broadcast %1089 : f32 to vector<16x16xf32>
    %1091 = arith.mulf %1090, %1088 : vector<16x16xf32>
    %1092 = arith.addf %1074, %1091 : vector<16x16xf32>
    %c57_343 = arith.constant 57 : index
    %1093 = memref.load %arg4[%c57_343] : memref<144xf32, #tpu.memory_space<smem>>
    %1094 = vector.broadcast %1093 : f32 to vector<16x16xf32>
    %1095 = arith.mulf %1094, %1088 : vector<16x16xf32>
    %1096 = arith.addf %1078, %1095 : vector<16x16xf32>
    %c93_344 = arith.constant 93 : index
    %1097 = memref.load %arg4[%c93_344] : memref<144xf32, #tpu.memory_space<smem>>
    %1098 = vector.broadcast %1097 : f32 to vector<16x16xf32>
    %1099 = arith.mulf %1098, %1088 : vector<16x16xf32>
    %1100 = arith.addf %1082, %1099 : vector<16x16xf32>
    %c129_345 = arith.constant 129 : index
    %1101 = memref.load %arg4[%c129_345] : memref<144xf32, #tpu.memory_space<smem>>
    %1102 = vector.broadcast %1101 : f32 to vector<16x16xf32>
    %1103 = arith.mulf %1102, %1088 : vector<16x16xf32>
    %1104 = arith.addf %1086, %1103 : vector<16x16xf32>
    %c2_346 = arith.constant 2 : index
    %c1_347 = arith.constant 1 : index
    %c1_348 = arith.constant 1 : index
    %1105 = vector.load %arg8[%c2_346, %c1_347, %c1_348] : memref<4x18x18xf32, #tpu.memory_space<vmem>>, vector<1x16x16xf32>
    %1106 = vector.shape_cast %1105 : vector<1x16x16xf32> to vector<16x16xf32>
    %c22_349 = arith.constant 22 : index
    %1107 = memref.load %arg4[%c22_349] : memref<144xf32, #tpu.memory_space<smem>>
    %1108 = vector.broadcast %1107 : f32 to vector<16x16xf32>
    %1109 = arith.mulf %1108, %1106 : vector<16x16xf32>
    %1110 = arith.addf %1092, %1109 : vector<16x16xf32>
    %c58_350 = arith.constant 58 : index
    %1111 = memref.load %arg4[%c58_350] : memref<144xf32, #tpu.memory_space<smem>>
    %1112 = vector.broadcast %1111 : f32 to vector<16x16xf32>
    %1113 = arith.mulf %1112, %1106 : vector<16x16xf32>
    %1114 = arith.addf %1096, %1113 : vector<16x16xf32>
    %c94_351 = arith.constant 94 : index
    %1115 = memref.load %arg4[%c94_351] : memref<144xf32, #tpu.memory_space<smem>>
    %1116 = vector.broadcast %1115 : f32 to vector<16x16xf32>
    %1117 = arith.mulf %1116, %1106 : vector<16x16xf32>
    %1118 = arith.addf %1100, %1117 : vector<16x16xf32>
    %c130_352 = arith.constant 130 : index
    %1119 = memref.load %arg4[%c130_352] : memref<144xf32, #tpu.memory_space<smem>>
    %1120 = vector.broadcast %1119 : f32 to vector<16x16xf32>
    %1121 = arith.mulf %1120, %1106 : vector<16x16xf32>
    %1122 = arith.addf %1104, %1121 : vector<16x16xf32>
    %c2_353 = arith.constant 2 : index
    %c1_354 = arith.constant 1 : index
    %c2_355 = arith.constant 2 : index
    %1123 = vector.load %arg8[%c2_353, %c1_354, %c2_355] : memref<4x18x18xf32, #tpu.memory_space<vmem>>, vector<1x16x16xf32>
    %1124 = vector.shape_cast %1123 : vector<1x16x16xf32> to vector<16x16xf32>
    %c23_356 = arith.constant 23 : index
    %1125 = memref.load %arg4[%c23_356] : memref<144xf32, #tpu.memory_space<smem>>
    %1126 = vector.broadcast %1125 : f32 to vector<16x16xf32>
    %1127 = arith.mulf %1126, %1124 : vector<16x16xf32>
    %1128 = arith.addf %1110, %1127 : vector<16x16xf32>
    %c59_357 = arith.constant 59 : index
    %1129 = memref.load %arg4[%c59_357] : memref<144xf32, #tpu.memory_space<smem>>
    %1130 = vector.broadcast %1129 : f32 to vector<16x16xf32>
    %1131 = arith.mulf %1130, %1124 : vector<16x16xf32>
    %1132 = arith.addf %1114, %1131 : vector<16x16xf32>
    %c95_358 = arith.constant 95 : index
    %1133 = memref.load %arg4[%c95_358] : memref<144xf32, #tpu.memory_space<smem>>
    %1134 = vector.broadcast %1133 : f32 to vector<16x16xf32>
    %1135 = arith.mulf %1134, %1124 : vector<16x16xf32>
    %1136 = arith.addf %1118, %1135 : vector<16x16xf32>
    %c131_359 = arith.constant 131 : index
    %1137 = memref.load %arg4[%c131_359] : memref<144xf32, #tpu.memory_space<smem>>
    %1138 = vector.broadcast %1137 : f32 to vector<16x16xf32>
    %1139 = arith.mulf %1138, %1124 : vector<16x16xf32>
    %1140 = arith.addf %1122, %1139 : vector<16x16xf32>
    %c2_360 = arith.constant 2 : index
    %c2_361 = arith.constant 2 : index
    %c0_362 = arith.constant 0 : index
    %1141 = vector.load %arg8[%c2_360, %c2_361, %c0_362] : memref<4x18x18xf32, #tpu.memory_space<vmem>>, vector<1x16x16xf32>
    %1142 = vector.shape_cast %1141 : vector<1x16x16xf32> to vector<16x16xf32>
    %c24_363 = arith.constant 24 : index
    %1143 = memref.load %arg4[%c24_363] : memref<144xf32, #tpu.memory_space<smem>>
    %1144 = vector.broadcast %1143 : f32 to vector<16x16xf32>
    %1145 = arith.mulf %1144, %1142 : vector<16x16xf32>
    %1146 = arith.addf %1128, %1145 : vector<16x16xf32>
    %c60_364 = arith.constant 60 : index
    %1147 = memref.load %arg4[%c60_364] : memref<144xf32, #tpu.memory_space<smem>>
    %1148 = vector.broadcast %1147 : f32 to vector<16x16xf32>
    %1149 = arith.mulf %1148, %1142 : vector<16x16xf32>
    %1150 = arith.addf %1132, %1149 : vector<16x16xf32>
    %c96_365 = arith.constant 96 : index
    %1151 = memref.load %arg4[%c96_365] : memref<144xf32, #tpu.memory_space<smem>>
    %1152 = vector.broadcast %1151 : f32 to vector<16x16xf32>
    %1153 = arith.mulf %1152, %1142 : vector<16x16xf32>
    %1154 = arith.addf %1136, %1153 : vector<16x16xf32>
    %c132_366 = arith.constant 132 : index
    %1155 = memref.load %arg4[%c132_366] : memref<144xf32, #tpu.memory_space<smem>>
    %1156 = vector.broadcast %1155 : f32 to vector<16x16xf32>
    %1157 = arith.mulf %1156, %1142 : vector<16x16xf32>
    %1158 = arith.addf %1140, %1157 : vector<16x16xf32>
    %c2_367 = arith.constant 2 : index
    %c2_368 = arith.constant 2 : index
    %c1_369 = arith.constant 1 : index
    %1159 = vector.load %arg8[%c2_367, %c2_368, %c1_369] : memref<4x18x18xf32, #tpu.memory_space<vmem>>, vector<1x16x16xf32>
    %1160 = vector.shape_cast %1159 : vector<1x16x16xf32> to vector<16x16xf32>
    %c25_370 = arith.constant 25 : index
    %1161 = memref.load %arg4[%c25_370] : memref<144xf32, #tpu.memory_space<smem>>
    %1162 = vector.broadcast %1161 : f32 to vector<16x16xf32>
    %1163 = arith.mulf %1162, %1160 : vector<16x16xf32>
    %1164 = arith.addf %1146, %1163 : vector<16x16xf32>
    %c61_371 = arith.constant 61 : index
    %1165 = memref.load %arg4[%c61_371] : memref<144xf32, #tpu.memory_space<smem>>
    %1166 = vector.broadcast %1165 : f32 to vector<16x16xf32>
    %1167 = arith.mulf %1166, %1160 : vector<16x16xf32>
    %1168 = arith.addf %1150, %1167 : vector<16x16xf32>
    %c97_372 = arith.constant 97 : index
    %1169 = memref.load %arg4[%c97_372] : memref<144xf32, #tpu.memory_space<smem>>
    %1170 = vector.broadcast %1169 : f32 to vector<16x16xf32>
    %1171 = arith.mulf %1170, %1160 : vector<16x16xf32>
    %1172 = arith.addf %1154, %1171 : vector<16x16xf32>
    %c133_373 = arith.constant 133 : index
    %1173 = memref.load %arg4[%c133_373] : memref<144xf32, #tpu.memory_space<smem>>
    %1174 = vector.broadcast %1173 : f32 to vector<16x16xf32>
    %1175 = arith.mulf %1174, %1160 : vector<16x16xf32>
    %1176 = arith.addf %1158, %1175 : vector<16x16xf32>
    %c2_374 = arith.constant 2 : index
    %c2_375 = arith.constant 2 : index
    %c2_376 = arith.constant 2 : index
    %1177 = vector.load %arg8[%c2_374, %c2_375, %c2_376] : memref<4x18x18xf32, #tpu.memory_space<vmem>>, vector<1x16x16xf32>
    %1178 = vector.shape_cast %1177 : vector<1x16x16xf32> to vector<16x16xf32>
    %c26_377 = arith.constant 26 : index
    %1179 = memref.load %arg4[%c26_377] : memref<144xf32, #tpu.memory_space<smem>>
    %1180 = vector.broadcast %1179 : f32 to vector<16x16xf32>
    %1181 = arith.mulf %1180, %1178 : vector<16x16xf32>
    %1182 = arith.addf %1164, %1181 : vector<16x16xf32>
    %c62_378 = arith.constant 62 : index
    %1183 = memref.load %arg4[%c62_378] : memref<144xf32, #tpu.memory_space<smem>>
    %1184 = vector.broadcast %1183 : f32 to vector<16x16xf32>
    %1185 = arith.mulf %1184, %1178 : vector<16x16xf32>
    %1186 = arith.addf %1168, %1185 : vector<16x16xf32>
    %c98_379 = arith.constant 98 : index
    %1187 = memref.load %arg4[%c98_379] : memref<144xf32, #tpu.memory_space<smem>>
    %1188 = vector.broadcast %1187 : f32 to vector<16x16xf32>
    %1189 = arith.mulf %1188, %1178 : vector<16x16xf32>
    %1190 = arith.addf %1172, %1189 : vector<16x16xf32>
    %c134_380 = arith.constant 134 : index
    %1191 = memref.load %arg4[%c134_380] : memref<144xf32, #tpu.memory_space<smem>>
    %1192 = vector.broadcast %1191 : f32 to vector<16x16xf32>
    %1193 = arith.mulf %1192, %1178 : vector<16x16xf32>
    %1194 = arith.addf %1176, %1193 : vector<16x16xf32>
    %c3_381 = arith.constant 3 : index
    %c0_382 = arith.constant 0 : index
    %c0_383 = arith.constant 0 : index
    %1195 = vector.load %arg8[%c3_381, %c0_382, %c0_383] : memref<4x18x18xf32, #tpu.memory_space<vmem>>, vector<1x16x16xf32>
    %1196 = vector.shape_cast %1195 : vector<1x16x16xf32> to vector<16x16xf32>
    %c27_384 = arith.constant 27 : index
    %1197 = memref.load %arg4[%c27_384] : memref<144xf32, #tpu.memory_space<smem>>
    %1198 = vector.broadcast %1197 : f32 to vector<16x16xf32>
    %1199 = arith.mulf %1198, %1196 : vector<16x16xf32>
    %1200 = arith.addf %1182, %1199 : vector<16x16xf32>
    %c63_385 = arith.constant 63 : index
    %1201 = memref.load %arg4[%c63_385] : memref<144xf32, #tpu.memory_space<smem>>
    %1202 = vector.broadcast %1201 : f32 to vector<16x16xf32>
    %1203 = arith.mulf %1202, %1196 : vector<16x16xf32>
    %1204 = arith.addf %1186, %1203 : vector<16x16xf32>
    %c99_386 = arith.constant 99 : index
    %1205 = memref.load %arg4[%c99_386] : memref<144xf32, #tpu.memory_space<smem>>
    %1206 = vector.broadcast %1205 : f32 to vector<16x16xf32>
    %1207 = arith.mulf %1206, %1196 : vector<16x16xf32>
    %1208 = arith.addf %1190, %1207 : vector<16x16xf32>
    %c135_387 = arith.constant 135 : index
    %1209 = memref.load %arg4[%c135_387] : memref<144xf32, #tpu.memory_space<smem>>
    %1210 = vector.broadcast %1209 : f32 to vector<16x16xf32>
    %1211 = arith.mulf %1210, %1196 : vector<16x16xf32>
    %1212 = arith.addf %1194, %1211 : vector<16x16xf32>
    %c3_388 = arith.constant 3 : index
    %c0_389 = arith.constant 0 : index
    %c1_390 = arith.constant 1 : index
    %1213 = vector.load %arg8[%c3_388, %c0_389, %c1_390] : memref<4x18x18xf32, #tpu.memory_space<vmem>>, vector<1x16x16xf32>
    %1214 = vector.shape_cast %1213 : vector<1x16x16xf32> to vector<16x16xf32>
    %c28_391 = arith.constant 28 : index
    %1215 = memref.load %arg4[%c28_391] : memref<144xf32, #tpu.memory_space<smem>>
    %1216 = vector.broadcast %1215 : f32 to vector<16x16xf32>
    %1217 = arith.mulf %1216, %1214 : vector<16x16xf32>
    %1218 = arith.addf %1200, %1217 : vector<16x16xf32>
    %c64_392 = arith.constant 64 : index
    %1219 = memref.load %arg4[%c64_392] : memref<144xf32, #tpu.memory_space<smem>>
    %1220 = vector.broadcast %1219 : f32 to vector<16x16xf32>
    %1221 = arith.mulf %1220, %1214 : vector<16x16xf32>
    %1222 = arith.addf %1204, %1221 : vector<16x16xf32>
    %c100_393 = arith.constant 100 : index
    %1223 = memref.load %arg4[%c100_393] : memref<144xf32, #tpu.memory_space<smem>>
    %1224 = vector.broadcast %1223 : f32 to vector<16x16xf32>
    %1225 = arith.mulf %1224, %1214 : vector<16x16xf32>
    %1226 = arith.addf %1208, %1225 : vector<16x16xf32>
    %c136_394 = arith.constant 136 : index
    %1227 = memref.load %arg4[%c136_394] : memref<144xf32, #tpu.memory_space<smem>>
    %1228 = vector.broadcast %1227 : f32 to vector<16x16xf32>
    %1229 = arith.mulf %1228, %1214 : vector<16x16xf32>
    %1230 = arith.addf %1212, %1229 : vector<16x16xf32>
    %c3_395 = arith.constant 3 : index
    %c0_396 = arith.constant 0 : index
    %c2_397 = arith.constant 2 : index
    %1231 = vector.load %arg8[%c3_395, %c0_396, %c2_397] : memref<4x18x18xf32, #tpu.memory_space<vmem>>, vector<1x16x16xf32>
    %1232 = vector.shape_cast %1231 : vector<1x16x16xf32> to vector<16x16xf32>
    %c29_398 = arith.constant 29 : index
    %1233 = memref.load %arg4[%c29_398] : memref<144xf32, #tpu.memory_space<smem>>
    %1234 = vector.broadcast %1233 : f32 to vector<16x16xf32>
    %1235 = arith.mulf %1234, %1232 : vector<16x16xf32>
    %1236 = arith.addf %1218, %1235 : vector<16x16xf32>
    %c65_399 = arith.constant 65 : index
    %1237 = memref.load %arg4[%c65_399] : memref<144xf32, #tpu.memory_space<smem>>
    %1238 = vector.broadcast %1237 : f32 to vector<16x16xf32>
    %1239 = arith.mulf %1238, %1232 : vector<16x16xf32>
    %1240 = arith.addf %1222, %1239 : vector<16x16xf32>
    %c101_400 = arith.constant 101 : index
    %1241 = memref.load %arg4[%c101_400] : memref<144xf32, #tpu.memory_space<smem>>
    %1242 = vector.broadcast %1241 : f32 to vector<16x16xf32>
    %1243 = arith.mulf %1242, %1232 : vector<16x16xf32>
    %1244 = arith.addf %1226, %1243 : vector<16x16xf32>
    %c137_401 = arith.constant 137 : index
    %1245 = memref.load %arg4[%c137_401] : memref<144xf32, #tpu.memory_space<smem>>
    %1246 = vector.broadcast %1245 : f32 to vector<16x16xf32>
    %1247 = arith.mulf %1246, %1232 : vector<16x16xf32>
    %1248 = arith.addf %1230, %1247 : vector<16x16xf32>
    %c3_402 = arith.constant 3 : index
    %c1_403 = arith.constant 1 : index
    %c0_404 = arith.constant 0 : index
    %1249 = vector.load %arg8[%c3_402, %c1_403, %c0_404] : memref<4x18x18xf32, #tpu.memory_space<vmem>>, vector<1x16x16xf32>
    %1250 = vector.shape_cast %1249 : vector<1x16x16xf32> to vector<16x16xf32>
    %c30_405 = arith.constant 30 : index
    %1251 = memref.load %arg4[%c30_405] : memref<144xf32, #tpu.memory_space<smem>>
    %1252 = vector.broadcast %1251 : f32 to vector<16x16xf32>
    %1253 = arith.mulf %1252, %1250 : vector<16x16xf32>
    %1254 = arith.addf %1236, %1253 : vector<16x16xf32>
    %c66_406 = arith.constant 66 : index
    %1255 = memref.load %arg4[%c66_406] : memref<144xf32, #tpu.memory_space<smem>>
    %1256 = vector.broadcast %1255 : f32 to vector<16x16xf32>
    %1257 = arith.mulf %1256, %1250 : vector<16x16xf32>
    %1258 = arith.addf %1240, %1257 : vector<16x16xf32>
    %c102_407 = arith.constant 102 : index
    %1259 = memref.load %arg4[%c102_407] : memref<144xf32, #tpu.memory_space<smem>>
    %1260 = vector.broadcast %1259 : f32 to vector<16x16xf32>
    %1261 = arith.mulf %1260, %1250 : vector<16x16xf32>
    %1262 = arith.addf %1244, %1261 : vector<16x16xf32>
    %c138_408 = arith.constant 138 : index
    %1263 = memref.load %arg4[%c138_408] : memref<144xf32, #tpu.memory_space<smem>>
    %1264 = vector.broadcast %1263 : f32 to vector<16x16xf32>
    %1265 = arith.mulf %1264, %1250 : vector<16x16xf32>
    %1266 = arith.addf %1248, %1265 : vector<16x16xf32>
    %c3_409 = arith.constant 3 : index
    %c1_410 = arith.constant 1 : index
    %c1_411 = arith.constant 1 : index
    %1267 = vector.load %arg8[%c3_409, %c1_410, %c1_411] : memref<4x18x18xf32, #tpu.memory_space<vmem>>, vector<1x16x16xf32>
    %1268 = vector.shape_cast %1267 : vector<1x16x16xf32> to vector<16x16xf32>
    %c31_412 = arith.constant 31 : index
    %1269 = memref.load %arg4[%c31_412] : memref<144xf32, #tpu.memory_space<smem>>
    %1270 = vector.broadcast %1269 : f32 to vector<16x16xf32>
    %1271 = arith.mulf %1270, %1268 : vector<16x16xf32>
    %1272 = arith.addf %1254, %1271 : vector<16x16xf32>
    %c67_413 = arith.constant 67 : index
    %1273 = memref.load %arg4[%c67_413] : memref<144xf32, #tpu.memory_space<smem>>
    %1274 = vector.broadcast %1273 : f32 to vector<16x16xf32>
    %1275 = arith.mulf %1274, %1268 : vector<16x16xf32>
    %1276 = arith.addf %1258, %1275 : vector<16x16xf32>
    %c103_414 = arith.constant 103 : index
    %1277 = memref.load %arg4[%c103_414] : memref<144xf32, #tpu.memory_space<smem>>
    %1278 = vector.broadcast %1277 : f32 to vector<16x16xf32>
    %1279 = arith.mulf %1278, %1268 : vector<16x16xf32>
    %1280 = arith.addf %1262, %1279 : vector<16x16xf32>
    %c139_415 = arith.constant 139 : index
    %1281 = memref.load %arg4[%c139_415] : memref<144xf32, #tpu.memory_space<smem>>
    %1282 = vector.broadcast %1281 : f32 to vector<16x16xf32>
    %1283 = arith.mulf %1282, %1268 : vector<16x16xf32>
    %1284 = arith.addf %1266, %1283 : vector<16x16xf32>
    %c3_416 = arith.constant 3 : index
    %c1_417 = arith.constant 1 : index
    %c2_418 = arith.constant 2 : index
    %1285 = vector.load %arg8[%c3_416, %c1_417, %c2_418] : memref<4x18x18xf32, #tpu.memory_space<vmem>>, vector<1x16x16xf32>
    %1286 = vector.shape_cast %1285 : vector<1x16x16xf32> to vector<16x16xf32>
    %c32_419 = arith.constant 32 : index
    %1287 = memref.load %arg4[%c32_419] : memref<144xf32, #tpu.memory_space<smem>>
    %1288 = vector.broadcast %1287 : f32 to vector<16x16xf32>
    %1289 = arith.mulf %1288, %1286 : vector<16x16xf32>
    %1290 = arith.addf %1272, %1289 : vector<16x16xf32>
    %c68_420 = arith.constant 68 : index
    %1291 = memref.load %arg4[%c68_420] : memref<144xf32, #tpu.memory_space<smem>>
    %1292 = vector.broadcast %1291 : f32 to vector<16x16xf32>
    %1293 = arith.mulf %1292, %1286 : vector<16x16xf32>
    %1294 = arith.addf %1276, %1293 : vector<16x16xf32>
    %c104_421 = arith.constant 104 : index
    %1295 = memref.load %arg4[%c104_421] : memref<144xf32, #tpu.memory_space<smem>>
    %1296 = vector.broadcast %1295 : f32 to vector<16x16xf32>
    %1297 = arith.mulf %1296, %1286 : vector<16x16xf32>
    %1298 = arith.addf %1280, %1297 : vector<16x16xf32>
    %c140_422 = arith.constant 140 : index
    %1299 = memref.load %arg4[%c140_422] : memref<144xf32, #tpu.memory_space<smem>>
    %1300 = vector.broadcast %1299 : f32 to vector<16x16xf32>
    %1301 = arith.mulf %1300, %1286 : vector<16x16xf32>
    %1302 = arith.addf %1284, %1301 : vector<16x16xf32>
    %c3_423 = arith.constant 3 : index
    %c2_424 = arith.constant 2 : index
    %c0_425 = arith.constant 0 : index
    %1303 = vector.load %arg8[%c3_423, %c2_424, %c0_425] : memref<4x18x18xf32, #tpu.memory_space<vmem>>, vector<1x16x16xf32>
    %1304 = vector.shape_cast %1303 : vector<1x16x16xf32> to vector<16x16xf32>
    %c33_426 = arith.constant 33 : index
    %1305 = memref.load %arg4[%c33_426] : memref<144xf32, #tpu.memory_space<smem>>
    %1306 = vector.broadcast %1305 : f32 to vector<16x16xf32>
    %1307 = arith.mulf %1306, %1304 : vector<16x16xf32>
    %1308 = arith.addf %1290, %1307 : vector<16x16xf32>
    %c69_427 = arith.constant 69 : index
    %1309 = memref.load %arg4[%c69_427] : memref<144xf32, #tpu.memory_space<smem>>
    %1310 = vector.broadcast %1309 : f32 to vector<16x16xf32>
    %1311 = arith.mulf %1310, %1304 : vector<16x16xf32>
    %1312 = arith.addf %1294, %1311 : vector<16x16xf32>
    %c105_428 = arith.constant 105 : index
    %1313 = memref.load %arg4[%c105_428] : memref<144xf32, #tpu.memory_space<smem>>
    %1314 = vector.broadcast %1313 : f32 to vector<16x16xf32>
    %1315 = arith.mulf %1314, %1304 : vector<16x16xf32>
    %1316 = arith.addf %1298, %1315 : vector<16x16xf32>
    %c141_429 = arith.constant 141 : index
    %1317 = memref.load %arg4[%c141_429] : memref<144xf32, #tpu.memory_space<smem>>
    %1318 = vector.broadcast %1317 : f32 to vector<16x16xf32>
    %1319 = arith.mulf %1318, %1304 : vector<16x16xf32>
    %1320 = arith.addf %1302, %1319 : vector<16x16xf32>
    %c3_430 = arith.constant 3 : index
    %c2_431 = arith.constant 2 : index
    %c1_432 = arith.constant 1 : index
    %1321 = vector.load %arg8[%c3_430, %c2_431, %c1_432] : memref<4x18x18xf32, #tpu.memory_space<vmem>>, vector<1x16x16xf32>
    %1322 = vector.shape_cast %1321 : vector<1x16x16xf32> to vector<16x16xf32>
    %c34_433 = arith.constant 34 : index
    %1323 = memref.load %arg4[%c34_433] : memref<144xf32, #tpu.memory_space<smem>>
    %1324 = vector.broadcast %1323 : f32 to vector<16x16xf32>
    %1325 = arith.mulf %1324, %1322 : vector<16x16xf32>
    %1326 = arith.addf %1308, %1325 : vector<16x16xf32>
    %c70_434 = arith.constant 70 : index
    %1327 = memref.load %arg4[%c70_434] : memref<144xf32, #tpu.memory_space<smem>>
    %1328 = vector.broadcast %1327 : f32 to vector<16x16xf32>
    %1329 = arith.mulf %1328, %1322 : vector<16x16xf32>
    %1330 = arith.addf %1312, %1329 : vector<16x16xf32>
    %c106_435 = arith.constant 106 : index
    %1331 = memref.load %arg4[%c106_435] : memref<144xf32, #tpu.memory_space<smem>>
    %1332 = vector.broadcast %1331 : f32 to vector<16x16xf32>
    %1333 = arith.mulf %1332, %1322 : vector<16x16xf32>
    %1334 = arith.addf %1316, %1333 : vector<16x16xf32>
    %c142_436 = arith.constant 142 : index
    %1335 = memref.load %arg4[%c142_436] : memref<144xf32, #tpu.memory_space<smem>>
    %1336 = vector.broadcast %1335 : f32 to vector<16x16xf32>
    %1337 = arith.mulf %1336, %1322 : vector<16x16xf32>
    %1338 = arith.addf %1320, %1337 : vector<16x16xf32>
    %c3_437 = arith.constant 3 : index
    %c2_438 = arith.constant 2 : index
    %c2_439 = arith.constant 2 : index
    %1339 = vector.load %arg8[%c3_437, %c2_438, %c2_439] : memref<4x18x18xf32, #tpu.memory_space<vmem>>, vector<1x16x16xf32>
    %1340 = vector.shape_cast %1339 : vector<1x16x16xf32> to vector<16x16xf32>
    %c35_440 = arith.constant 35 : index
    %1341 = memref.load %arg4[%c35_440] : memref<144xf32, #tpu.memory_space<smem>>
    %1342 = vector.broadcast %1341 : f32 to vector<16x16xf32>
    %1343 = arith.mulf %1342, %1340 : vector<16x16xf32>
    %1344 = arith.addf %1326, %1343 : vector<16x16xf32>
    %c71_441 = arith.constant 71 : index
    %1345 = memref.load %arg4[%c71_441] : memref<144xf32, #tpu.memory_space<smem>>
    %1346 = vector.broadcast %1345 : f32 to vector<16x16xf32>
    %1347 = arith.mulf %1346, %1340 : vector<16x16xf32>
    %1348 = arith.addf %1330, %1347 : vector<16x16xf32>
    %c107_442 = arith.constant 107 : index
    %1349 = memref.load %arg4[%c107_442] : memref<144xf32, #tpu.memory_space<smem>>
    %1350 = vector.broadcast %1349 : f32 to vector<16x16xf32>
    %1351 = arith.mulf %1350, %1340 : vector<16x16xf32>
    %1352 = arith.addf %1334, %1351 : vector<16x16xf32>
    %c143_443 = arith.constant 143 : index
    %1353 = memref.load %arg4[%c143_443] : memref<144xf32, #tpu.memory_space<smem>>
    %1354 = vector.broadcast %1353 : f32 to vector<16x16xf32>
    %1355 = arith.mulf %1354, %1340 : vector<16x16xf32>
    %1356 = arith.addf %1338, %1355 : vector<16x16xf32>
    %c0_444 = arith.constant 0 : index
    %1357 = memref.load %arg5[%c0_444] : memref<4xf32, #tpu.memory_space<smem>>
    %1358 = vector.broadcast %1357 : f32 to vector<16x16xf32>
    %1359 = arith.addf %1344, %1358 : vector<16x16xf32>
    %c1_445 = arith.constant 1 : index
    %1360 = memref.load %arg5[%c1_445] : memref<4xf32, #tpu.memory_space<smem>>
    %1361 = vector.broadcast %1360 : f32 to vector<16x16xf32>
    %1362 = arith.addf %1348, %1361 : vector<16x16xf32>
    %c2_446 = arith.constant 2 : index
    %1363 = memref.load %arg5[%c2_446] : memref<4xf32, #tpu.memory_space<smem>>
    %1364 = vector.broadcast %1363 : f32 to vector<16x16xf32>
    %1365 = arith.addf %1352, %1364 : vector<16x16xf32>
    %c3_447 = arith.constant 3 : index
    %1366 = memref.load %arg5[%c3_447] : memref<4xf32, #tpu.memory_space<smem>>
    %1367 = vector.broadcast %1366 : f32 to vector<16x16xf32>
    %1368 = arith.addf %1356, %1367 : vector<16x16xf32>
    %c0_448 = arith.constant 0 : index
    %c0_449 = arith.constant 0 : index
    %c0_450 = arith.constant 0 : index
    %c0_451 = arith.constant 0 : index
    %1369 = vector.load %arg1[%c0_448, %c0_449, %c0_450, %c0_451] : memref<1x4x16x16xf32, #tpu.memory_space<vmem>>, vector<1x1x16x16xf32>
    %1370 = vector.shape_cast %1369 : vector<1x1x16x16xf32> to vector<16x16xf32>
    %1371 = arith.addf %1359, %1370 : vector<16x16xf32>
    %cst_452 = arith.constant 0.000000e+00 : f32
    %1372 = vector.broadcast %cst_452 : f32 to vector<16x16xf32>
    %1373 = arith.maximumf %1371, %1372 : vector<16x16xf32>
    %c0_453 = arith.constant 0 : index
    %c0_454 = arith.constant 0 : index
    %c0_455 = arith.constant 0 : index
    %c0_456 = arith.constant 0 : index
    %1374 = vector.load %arg6[%c0_453, %c0_454, %c0_455, %c0_456] : memref<1x4x16x16xf32, #tpu.memory_space<vmem>>, vector<1x1x16x16xf32>
    %1375 = vector.shape_cast %1374 : vector<1x1x16x16xf32> to vector<16x16xf32>
    %1376 = vector.shape_cast %1373 : vector<16x16xf32> to vector<1x1x16x16xf32>
    tpu.vector_store %arg6[%c0_453, %c0_454, %c0_455, %c0_456], %1376 {strides = array<i32>} : memref<1x4x16x16xf32, #tpu.memory_space<vmem>>, vector<1x1x16x16xf32>,
    %c0_457 = arith.constant 0 : index
    %c1_458 = arith.constant 1 : index
    %c0_459 = arith.constant 0 : index
    %c0_460 = arith.constant 0 : index
    %1377 = vector.load %arg1[%c0_457, %c1_458, %c0_459, %c0_460] : memref<1x4x16x16xf32, #tpu.memory_space<vmem>>, vector<1x1x16x16xf32>
    %1378 = vector.shape_cast %1377 : vector<1x1x16x16xf32> to vector<16x16xf32>
    %1379 = arith.addf %1362, %1378 : vector<16x16xf32>
    %cst_461 = arith.constant 0.000000e+00 : f32
    %1380 = vector.broadcast %cst_461 : f32 to vector<16x16xf32>
    %1381 = arith.maximumf %1379, %1380 : vector<16x16xf32>
    %c0_462 = arith.constant 0 : index
    %c1_463 = arith.constant 1 : index
    %c0_464 = arith.constant 0 : index
    %c0_465 = arith.constant 0 : index
    %1382 = vector.load %arg6[%c0_462, %c1_463, %c0_464, %c0_465] : memref<1x4x16x16xf32, #tpu.memory_space<vmem>>, vector<1x1x16x16xf32>
    %1383 = vector.shape_cast %1382 : vector<1x1x16x16xf32> to vector<16x16xf32>
    %1384 = vector.shape_cast %1381 : vector<16x16xf32> to vector<1x1x16x16xf32>
    tpu.vector_store %arg6[%c0_462, %c1_463, %c0_464, %c0_465], %1384 {strides = array<i32>} : memref<1x4x16x16xf32, #tpu.memory_space<vmem>>, vector<1x1x16x16xf32>,
    %c0_466 = arith.constant 0 : index
    %c2_467 = arith.constant 2 : index
    %c0_468 = arith.constant 0 : index
    %c0_469 = arith.constant 0 : index
    %1385 = vector.load %arg1[%c0_466, %c2_467, %c0_468, %c0_469] : memref<1x4x16x16xf32, #tpu.memory_space<vmem>>, vector<1x1x16x16xf32>
    %1386 = vector.shape_cast %1385 : vector<1x1x16x16xf32> to vector<16x16xf32>
    %1387 = arith.addf %1365, %1386 : vector<16x16xf32>
    %cst_470 = arith.constant 0.000000e+00 : f32
    %1388 = vector.broadcast %cst_470 : f32 to vector<16x16xf32>
    %1389 = arith.maximumf %1387, %1388 : vector<16x16xf32>
    %c0_471 = arith.constant 0 : index
    %c2_472 = arith.constant 2 : index
    %c0_473 = arith.constant 0 : index
    %c0_474 = arith.constant 0 : index
    %1390 = vector.load %arg6[%c0_471, %c2_472, %c0_473, %c0_474] : memref<1x4x16x16xf32, #tpu.memory_space<vmem>>, vector<1x1x16x16xf32>
    %1391 = vector.shape_cast %1390 : vector<1x1x16x16xf32> to vector<16x16xf32>
    %1392 = vector.shape_cast %1389 : vector<16x16xf32> to vector<1x1x16x16xf32>
    tpu.vector_store %arg6[%c0_471, %c2_472, %c0_473, %c0_474], %1392 {strides = array<i32>} : memref<1x4x16x16xf32, #tpu.memory_space<vmem>>, vector<1x1x16x16xf32>,
    %c0_475 = arith.constant 0 : index
    %c3_476 = arith.constant 3 : index
    %c0_477 = arith.constant 0 : index
    %c0_478 = arith.constant 0 : index
    %1393 = vector.load %arg1[%c0_475, %c3_476, %c0_477, %c0_478] : memref<1x4x16x16xf32, #tpu.memory_space<vmem>>, vector<1x1x16x16xf32>
    %1394 = vector.shape_cast %1393 : vector<1x1x16x16xf32> to vector<16x16xf32>
    %1395 = arith.addf %1368, %1394 : vector<16x16xf32>
    %cst_479 = arith.constant 0.000000e+00 : f32
    %1396 = vector.broadcast %cst_479 : f32 to vector<16x16xf32>
    %1397 = arith.maximumf %1395, %1396 : vector<16x16xf32>
    %c0_480 = arith.constant 0 : index
    %c3_481 = arith.constant 3 : index
    %c0_482 = arith.constant 0 : index
    %c0_483 = arith.constant 0 : index
    %1398 = vector.load %arg6[%c0_480, %c3_481, %c0_482, %c0_483] : memref<1x4x16x16xf32, #tpu.memory_space<vmem>>, vector<1x1x16x16xf32>
    %1399 = vector.shape_cast %1398 : vector<1x1x16x16xf32> to vector<16x16xf32>
    %1400 = vector.shape_cast %1397 : vector<16x16xf32> to vector<1x1x16x16xf32>
    tpu.vector_store %arg6[%c0_480, %c3_481, %c0_482, %c0_483], %1400 {strides = array<i32>} : memref<1x4x16x16xf32, #tpu.memory_space<vmem>>, vector<1x1x16x16xf32>,
    return
  }
  func.func @transform_0(%arg0: i32) -> (i32, i32, i32, i32) {
    %c0_i32 = arith.constant 0 : i32
    %c0_i32_0 = arith.constant 0 : i32
    %c0_i32_1 = arith.constant 0 : i32
    %c0_i32_2 = arith.constant 0 : i32
    return %arg0, %c0_i32, %c0_i32_0, %c0_i32_1 : i32, i32, i32, i32
  }
  func.func @transform_1(%arg0: i32) -> i32 {
    %c0_i32 = arith.constant 0 : i32
    %c0_i32_0 = arith.constant 0 : i32
    return %c0_i32 : i32
  }
  func.func @transform_2(%arg0: i32) -> i32 {
    %c0_i32 = arith.constant 0 : i32
    %c0_i32_0 = arith.constant 0 : i32
    return %c0_i32 : i32
  }
  func.func @transform_3(%arg0: i32) -> i32 {
    %c0_i32 = arith.constant 0 : i32
    %c0_i32_0 = arith.constant 0 : i32
    return %c0_i32 : i32
  }
  func.func @transform_4(%arg0: i32) -> i32 {
    %c0_i32 = arith.constant 0 : i32
    %c0_i32_0 = arith.constant 0 : i32
    return %c0_i32 : i32
  }
  func.func @transform_5(%arg0: i32) -> (i32, i32, i32, i32) {
    %c0_i32 = arith.constant 0 : i32
    %c0_i32_0 = arith.constant 0 : i32
    %c0_i32_1 = arith.constant 0 : i32
    %c0_i32_2 = arith.constant 0 : i32
    return %arg0, %c0_i32, %c0_i32_0, %c0_i32_1 : i32, i32, i32, i32
  }
}

</mosaic_0001>

<llo_original>
// kernel: residual_block.1
$region0: #{residual_block.1}
  #allocation0 [shape = 'u32[]', space=smem, size = 0x4, offset = 0x4, fixed_abs, tag = 'smem constant byte address 0x4 - core index']
  #allocation1 [shape = 'u32[72,128]{1,0:T(1,128)}', space=vmem, size = 0x9000, scoped, tag = 'internal scratch']
  #allocation2 [shape = 'f32[4,18,18]{2,1,0:T(8,128)}', space=vmem, size = 0xc000, scoped, tag = 'scratch operand']
  #allocation3 [shape = 'f32[4,18,18]{2,1,0:T(8,128)}', space=vmem, size = 0xc000, scoped, tag = 'scratch operand']
  %s0 = inlined_call_operand.hbm [shape: f32[2,4,16,16], index: 0, kind: input, shape index: {}, may-alias: {0,5}]
  %s1 = inlined_call_operand.vmem [shape: f32[144], index: 1, kind: input, shape index: {}]
  %s2 = inlined_call_operand.vmem [shape: f32[4], index: 2, kind: input, shape index: {}]
  %s3 = inlined_call_operand.vmem [shape: f32[144], index: 3, kind: input, shape index: {}]
  %s4 = inlined_call_operand.vmem [shape: f32[4], index: 4, kind: input, shape index: {}]
  %s5 = inlined_call_operand.hbm [shape: f32[2,4,16,16], index: 5, kind: output, shape index: {}, may-alias: {0,5}]
  %s6 = sld [smem:[#allocation0]]
  $region73: #{residual_block.1} parent=0
    _
  %s8 = ssub.s32 1, %s6
  %s9 = scalar_select 0, %s8, %s6
  $region1: #{residual_block.1} parent=0
    #allocation4 [shape = 'u8[65536]{0}', space=vmem, size = 0x10000, scoped, tag = 'input window, operand 0']
    #allocation5 [shape = 's32[2]{0}', space=sflag, size = 0x8, scoped, tag = 'scoped memory for residual_block.1']
    #allocation6 [shape = 's32[2]{0}', space=sflag, size = 0x8, scoped, tag = 'scoped memory for residual_block.1']
    #allocation7 [shape = 's32[2]{0}', space=sflag, size = 0x8, scoped, tag = 'scoped memory for residual_block.1']
    #allocation8 [shape = 'u8[1024]{0}', space=smem, size = 0x400, scoped, tag = 'input window, operand 1, single buffered']
    #allocation9 [shape = 'u8[512]{0}', space=smem, size = 0x200, scoped, tag = 'input window, operand 2, single buffered']
    #allocation10 [shape = 's32[1]{0}', space=sflag, size = 0x4, scoped, tag = 'scoped memory for residual_block.1']
    #allocation11 [shape = 'u8[1024]{0}', space=smem, size = 0x400, scoped, tag = 'input window, operand 3, single buffered']
    #allocation12 [shape = 'u8[512]{0}', space=smem, size = 0x200, scoped, tag = 'input window, operand 4, single buffered']
    #allocation13 [shape = 's32[1]{0}', space=sflag, size = 0x4, scoped, tag = 'scoped memory for residual_block.1']
    #allocation14 [shape = 'u8[65536]{0}', space=vmem, size = 0x10000, scoped, tag = 'output window, operand 0']
    %10 = vsyncpa [#allocation5], 0
    %s11 = scalar_lea.sflag [#allocation5], 1
    %12 = vsyncpa %s11, 0
    %13 = vsyncpa [#allocation7], 0
    %14 = vsyncpa [#allocation10], 0
    %15 = vsyncpa [#allocation13], 0
    %16 = vsyncpa [#allocation6], 0
    %s17 = scalar_lea.sflag [#allocation6], 1
    %18 = vsyncpa %s17, 0
    loop: start=0, step=1, limit=4
    $region2: #{residual_block.1} parent=1 // loop_pre_header
      _
    $region3: #{residual_block.1} parent=1 // loop_header
      %s20 = sphi 0, %s24
      %p21 = scmp.ge.s32.totalorder %s20, 4
      %s30 = sphi 0, %s32
      %s33 = sphi 0, %s30
      %s34 = sphi 0, %s33
      %s50 = sphi 0, %s34
      %s54 = sphi 0, %s54
      %s56 = sphi 0, %s54
      %s57 = sphi 0, %s56
      %s71 = sphi 0, %s57
      %s75 = sphi 0, %s75
      %s77 = sphi 0, %s75
      %s78 = sphi 0, %s77
      %s92 = sphi 0, %s78
      %s96 = sphi 0, %s96
      %s98 = sphi 0, %s96
      %s99 = sphi 0, %s98
      %s113 = sphi 0, %s99
      %s117 = sphi 0, %s117
      %s119 = sphi 0, %s117
      %s120 = sphi 0, %s119
      %s134 = sphi 0, %s120
      %s140 = sphi 0, %s142
      %s143 = sphi 0, %s140
      %s144 = sphi 0, %s143
      %s160 = sphi 0, %s144
    $region4: #{residual_block.1} parent=1 // loop_header_branch
      %23 = sbr.rel (%p21) target = $region8
    $region5: #{residual_block.1} parent=1 // loop_body
      %s25 = ssub.s32 %s20, 1
      %s26 = ssub.s32 %s20, 2
      %s27 = sadd.s32 %s20, 1
      %s28 = ssub.s32 %s20, %s27
      %p29 = scmp.eq.s32.totalorder %s28, 0
      %s31 = sadd.s32 %s30, 1
      %s32 = scalar_select %p29, %s30, %s31
      %p35 = pneg %p29
      %p36 = scmp.eq.s32.totalorder %s20, 1
      %p37 = por %p35, %p36
      %p38 = scmp.ne.s32.totalorder %s30, %s33
      %p39 = scmp.eq.s32.totalorder %s20, 0
      %p40 = por %p38, %p39
      %p41 = scmp.ne.s32.totalorder %s30, %s33
      %p42 = scmp.eq.s32.totalorder %s25, 1
      %p43 = por %p41, %p42
      %p44 = scmp.ne.s32.totalorder %s33, %s34
      %p45 = scmp.eq.s32.totalorder %s25, 0
      %p46 = por %p44, %p45
      %p47 = scmp.ne.s32.totalorder %s33, %s34
      %p48 = scmp.eq.s32.totalorder %s26, 1
      %p49 = por %p47, %p48
      %p51 = scmp.ne.s32.totalorder %s34, %s50
      %p52 = scmp.eq.s32.totalorder %s26, 0
      %p53 = por %p51, %p52
      %s55 = sadd.s32 %s54, 1
      %p58 = scmp.eq.s32.totalorder %s20, 1
      %p59 = scmp.ne.s32.totalorder %s54, %s56
      %p60 = scmp.eq.s32.totalorder %s20, 0
      %p61 = por %p59, %p60
      %p62 = scmp.ne.s32.totalorder %s54, %s56
      %p63 = scmp.eq.s32.totalorder %s25, 1
      %p64 = por %p62, %p63
      %p65 = scmp.ne.s32.totalorder %s56, %s57
      %p66 = scmp.eq.s32.totalorder %s25, 0
      %p67 = por %p65, %p66
      %p68 = scmp.ne.s32.totalorder %s56, %s57
      %p69 = scmp.eq.s32.totalorder %s26, 1
      %p70 = por %p68, %p69
      %p72 = scmp.ne.s32.totalorder %s57, %s71
      %p73 = scmp.eq.s32.totalorder %s26, 0
      %p74 = por %p72, %p73
      %s76 = sadd.s32 %s75, 1
      %p79 = scmp.eq.s32.totalorder %s20, 1
      %p80 = scmp.ne.s32.totalorder %s75, %s77
      %p81 = scmp.eq.s32.totalorder %s20, 0
      %p82 = por %p80, %p81
      %p83 = scmp.ne.s32.totalorder %s75, %s77
      %p84 = scmp.eq.s32.totalorder %s25, 1
      %p85 = por %p83, %p84
      %p86 = scmp.ne.s32.totalorder %s77, %s78
      %p87 = scmp.eq.s32.totalorder %s25, 0
      %p88 = por %p86, %p87
      %p89 = scmp.ne.s32.totalorder %s77, %s78
      %p90 = scmp.eq.s32.totalorder %s26, 1
      %p91 = por %p89, %p90
      %p93 = scmp.ne.s32.totalorder %s78, %s92
      %p94 = scmp.eq.s32.totalorder %s26, 0
      %p95 = por %p93, %p94
      %s97 = sadd.s32 %s96, 1
      %p100 = scmp.eq.s32.totalorder %s20, 1
      %p101 = scmp.ne.s32.totalorder %s96, %s98
      %p102 = scmp.eq.s32.totalorder %s20, 0
      %p103 = por %p101, %p102
      %p104 = scmp.ne.s32.totalorder %s96, %s98
      %p105 = scmp.eq.s32.totalorder %s25, 1
      %p106 = por %p104, %p105
      %p107 = scmp.ne.s32.totalorder %s98, %s99
      %p108 = scmp.eq.s32.totalorder %s25, 0
      %p109 = por %p107, %p108
      %p110 = scmp.ne.s32.totalorder %s98, %s99
      %p111 = scmp.eq.s32.totalorder %s26, 1
      %p112 = por %p110, %p111
      %p114 = scmp.ne.s32.totalorder %s99, %s113
      %p115 = scmp.eq.s32.totalorder %s26, 0
      %p116 = por %p114, %p115
      %s118 = sadd.s32 %s117, 1
      %p121 = scmp.eq.s32.totalorder %s20, 1
      %p122 = scmp.ne.s32.totalorder %s117, %s119
      %p123 = scmp.eq.s32.totalorder %s20, 0
      %p124 = por %p122, %p123
      %p125 = scmp.ne.s32.totalorder %s117, %s119
      %p126 = scmp.eq.s32.totalorder %s25, 1
      %p127 = por %p125, %p126
      %p128 = scmp.ne.s32.totalorder %s119, %s120
      %p129 = scmp.eq.s32.totalorder %s25, 0
      %p130 = por %p128, %p129
      %p131 = scmp.ne.s32.totalorder %s119, %s120
      %p132 = scmp.eq.s32.totalorder %s26, 1
      %p133 = por %p131, %p132
      %p135 = scmp.ne.s32.totalorder %s120, %s134
      %p136 = scmp.eq.s32.totalorder %s26, 0
      %p137 = por %p135, %p136
      %s138 = ssub.s32 %s20, %s27
      %p139 = scmp.eq.s32.totalorder %s138, 0
      %s141 = sadd.s32 %s140, 1
      %s142 = scalar_select %p139, %s140, %s141
      %p145 = pneg %p139
      %p146 = scmp.eq.s32.totalorder %s20, 1
      %p147 = por %p145, %p146
      %p148 = scmp.ne.s32.totalorder %s140, %s143
      %p149 = scmp.eq.s32.totalorder %s20, 0
      %p150 = por %p148, %p149
      %p151 = scmp.ne.s32.totalorder %s140, %s143
      %p152 = scmp.eq.s32.totalorder %s25, 1
      %p153 = por %p151, %p152
      %p154 = scmp.ne.s32.totalorder %s143, %s144
      %p155 = scmp.eq.s32.totalorder %s25, 0
      %p156 = por %p154, %p155
      %p157 = scmp.ne.s32.totalorder %s143, %s144
      %p158 = scmp.eq.s32.totalorder %s26, 1
      %p159 = por %p157, %p158
      %p161 = scmp.ne.s32.totalorder %s144, %s160
      %p162 = scmp.eq.s32.totalorder %s26, 0
      %p163 = por %p161, %p162
      %p164 = scmp.le.s32.totalorder 1, %s20
      %p165 = scmp.lt.s32.totalorder %s20, 3
      %p166 = pnand %p164, %p165
      %p167 = pneg %p166
      // Predicated region
      $region9: #{residual_block.1} parent=5 // pred_check
        _
      $region10: #{residual_block.1} parent=5 // pred_check_branch
        %169 = sbr.rel (%p166) target = $region12
      $region11: #{residual_block.1} parent=5 // pred_region
        %s170 = ssub.s32 %s20, 1
        // Predicated region
        $region13: #{residual_block.1} parent=11 // pred_check
          %p171 = pneg %p67
        $region14: #{residual_block.1} parent=11 // pred_check_branch
          %173 = sbr.rel (%p171) target = $region16
        $region15: #{residual_block.1} parent=11 // pred_region
          %175 = vsyncadd [#allocation7], 0
          %s177 = sshll.u32 %s1, 4
          %s178 = int_to_ptr.vmem [resolvable:$true] %s177
          %180 = dma.vmem_to_smem %s178, 32, [#allocation8], [#allocation7]
        $region16: #{residual_block.1} parent=11 // pred_fallthru
          _
        // Predicated region
        $region17: #{residual_block.1} parent=11 // pred_check
          %p181 = pneg %p88
        $region18: #{residual_block.1} parent=11 // pred_check_branch
          %183 = sbr.rel (%p181) target = $region20
        $region19: #{residual_block.1} parent=11 // pred_region
          %185 = vsyncadd [#allocation10], 0
          %s187 = sshll.u32 %s2, 4
          %s188 = int_to_ptr.vmem [resolvable:$true] %s187
          %190 = dma.vmem_to_smem %s188, 16, [#allocation9], [#allocation10]
        $region20: #{residual_block.1} parent=11 // pred_fallthru
          _
        // Predicated region
        $region21: #{residual_block.1} parent=11 // pred_check
          %p191 = pneg %p109
        $region22: #{residual_block.1} parent=11 // pred_check_branch
          %193 = sbr.rel (%p191) target = $region24
        $region23: #{residual_block.1} parent=11 // pred_region
          %195 = vsyncadd [#allocation10], 0
          %s197 = sshll.u32 %s3, 4
          %s198 = int_to_ptr.vmem [resolvable:$true] %s197
          %200 = dma.vmem_to_smem %s198, 32, [#allocation11], [#allocation10]
        $region24: #{residual_block.1} parent=11 // pred_fallthru
          _
        // Predicated region
        $region25: #{residual_block.1} parent=11 // pred_check
          %p201 = pneg %p130
        $region26: #{residual_block.1} parent=11 // pred_check_branch
          %203 = sbr.rel (%p201) target = $region28
        $region27: #{residual_block.1} parent=11 // pred_region
          %205 = vsyncadd [#allocation13], 0
          %s207 = sshll.u32 %s4, 4
          %s208 = int_to_ptr.vmem [resolvable:$true] %s207
          %210 = dma.vmem_to_smem %s208, 16, [#allocation12], [#allocation13]
        $region28: #{residual_block.1} parent=11 // pred_fallthru
          _
      $region12: #{residual_block.1} parent=5 // pred_fallthru
        _
      %p211 = scmp.lt.s32.totalorder %s20, 2
      // Predicated region
      $region29: #{residual_block.1} parent=5 // pred_check
        %p212 = pneg %p211
      $region30: #{residual_block.1} parent=5 // pred_check_branch
        %214 = sbr.rel (%p212) target = $region32
      $region31: #{residual_block.1} parent=5 // pred_region
        // Predicated region
        $region33: #{residual_block.1} parent=31 // pred_check
          %p215 = pneg %p40
        $region34: #{residual_block.1} parent=31 // pred_check_branch
          %217 = sbr.rel (%p215) target = $region36
        $region35: #{residual_block.1} parent=31 // pred_region
          %s218 = sand.u32 %s30, 1
          %s219 = scalar_lea.sflag [#allocation5], %s218
          %s220 = sand.u32 %s30, 1
          %s221 = smul.addr %s220, 64
          %s222 = scalar_lea.vmem [#allocation4], %s221
          %224 = vsyncadd %s219, 0
          %s225 = smul.addr %s20, 8
          %s226 = smul.addr %s225, 8
          %s227 = scalar_lea.hbm %s0, %s226
          %s228 = sshll.u32 %s227, 4
          %s229 = int_to_ptr.hbm [resolvable:$true] %s228
          %s230 = sshll.u32 %s222, 4
          %s231 = int_to_ptr.vmem [resolvable:$true] %s230
          %236 = dma.hbm_to_vmem [thread:$0]  %s229, 1024, %s231, %s219, 128, 128, 8
        $region36: #{residual_block.1} parent=31 // pred_fallthru
          _
      $region32: #{residual_block.1} parent=5 // pred_fallthru
        _
      %p237 = scmp.le.s32.totalorder 1, %s20
      %p238 = scmp.lt.s32.totalorder %s20, 3
      %p239 = pnand %p237, %p238
      %p240 = pneg %p239
      // Predicated region
      $region37: #{residual_block.1} parent=5 // pred_check
        _
      $region38: #{residual_block.1} parent=5 // pred_check_branch
        %242 = sbr.rel (%p239) target = $region40
      $region39: #{residual_block.1} parent=5 // pred_region
        %s243 = ssub.s32 %s20, 1
        %s244 = sand.u32 %s33, 1
        %s245 = scalar_lea.sflag [#allocation5], %s244
        %s246 = sand.u32 %s33, 1
        %s247 = smul.addr %s246, 64
        %s248 = scalar_lea.vmem [#allocation4], %s247
        // Predicated region
        $region41: #{residual_block.1} parent=39 // pred_check
          %p249 = pneg %p46
        $region42: #{residual_block.1} parent=39 // pred_check_branch
          %251 = sbr.rel (%p249) target = $region44
        $region43: #{residual_block.1} parent=39 // pred_region
          %253 = dma.done %s245, 1024
        $region44: #{residual_block.1} parent=39 // pred_fallthru
          _
        // Predicated region
        $region45: #{residual_block.1} parent=39 // pred_check
          %p254 = pneg %p67
        $region46: #{residual_block.1} parent=39 // pred_check_branch
          %256 = sbr.rel (%p254) target = $region48
        $region47: #{residual_block.1} parent=39 // pred_region
          %258 = dma.done [#allocation7], 32
        $region48: #{residual_block.1} parent=39 // pred_fallthru
          _
        // Predicated region
        $region49: #{residual_block.1} parent=39 // pred_check
          %p259 = pneg %p88
        $region50: #{residual_block.1} parent=39 // pred_check_branch
          %261 = sbr.rel (%p259) target = $region52
        $region51: #{residual_block.1} parent=39 // pred_region
          %263 = dma.done [#allocation10], 16
        $region52: #{residual_block.1} parent=39 // pred_fallthru
          _
        // Predicated region
        $region53: #{residual_block.1} parent=39 // pred_check
          %p264 = pneg %p109
        $region54: #{residual_block.1} parent=39 // pred_check_branch
          %266 = sbr.rel (%p264) target = $region56
        $region55: #{residual_block.1} parent=39 // pred_region
          %268 = dma.done [#allocation10], 32
        $region56: #{residual_block.1} parent=39 // pred_fallthru
          _
        // Predicated region
        $region57: #{residual_block.1} parent=39 // pred_check
          %p269 = pneg %p130
        $region58: #{residual_block.1} parent=39 // pred_check_branch
          %271 = sbr.rel (%p269) target = $region60
        $region59: #{residual_block.1} parent=39 // pred_region
          %273 = dma.done [#allocation13], 16
        $region60: #{residual_block.1} parent=39 // pred_fallthru
          _
        %274 = sfence
        %s275 = sand.u32 %s33, 1
        %s276 = scalar_lea.sflag [#allocation5], %s275
        %s277 = sand.u32 %s33, 1
        %s278 = smul.addr %s277, 64
        %s279 = scalar_lea.vmem [#allocation4], %s278
        %p280 = pneg %p46
        %p281 = pneg %p43
        %p282 = pneg %p67
        %p283 = pneg %p64
        %p284 = pneg %p88
        %p285 = pneg %p85
        %p286 = pneg %p109
        %p287 = pneg %p106
        %p288 = pneg %p130
        %p289 = pneg %p127
        %p290 = pneg %p156
        %p291 = pneg %p153
        %s292 = sand.u32 %s143, 1
        %s293 = scalar_lea.sflag [#allocation6], %s292
        %s294 = sand.u32 %s143, 1
        %s295 = smul.addr %s294, 64
        %s296 = scalar_lea.vmem [#allocation14], %s295
        %v297 = vld [vmem:[%s248] sm:$0xff]
        %v298 = vld [vmem:[%s248 + $0x8] sm:$0xff]
        %v299 = vld [vmem:[%s248 + $0x10] sm:$0xff]
        %v300 = vld [vmem:[%s248 + $0x18] sm:$0xff]
        %v301 = vld [vmem:[%s248 + $0x20] sm:$0xff]
        %v302 = vld [vmem:[%s248 + $0x28] sm:$0xff]
        %v303 = vld [vmem:[%s248 + $0x30] sm:$0xff]
        %v304 = vld [vmem:[%s248 + $0x38] sm:$0xff]
        %313 = vrot.lane.b32.xlu0 %v297, 1
        %v314 = vpop.permute.xlu0 %313
        %315 = vrot.lane.b32.xlu0 %v298, 1
        %v316 = vpop.permute.xlu0 %315
        %317 = vrot.lane.b32.xlu0 %v299, 1
        %v318 = vpop.permute.xlu0 %317
        %319 = vrot.lane.b32.xlu0 %v300, 1
        %v320 = vpop.permute.xlu0 %319
        %321 = vrot.lane.b32.xlu0 %v301, 1
        %v322 = vpop.permute.xlu0 %321
        %323 = vrot.lane.b32.xlu0 %v302, 1
        %v324 = vpop.permute.xlu0 %323
        %325 = vrot.lane.b32.xlu0 %v303, 1
        %v326 = vpop.permute.xlu0 %325
        %327 = vrot.lane.b32.xlu0 %v304, 1
        %v328 = vpop.permute.xlu0 %327
        %vm337 = vcmask 138248
        %338 = vst.msk [vmem:[#allocation2 + $0x1] sm:$0xff] %vm337, %v314
        %339 = vst.msk [vmem:[#allocation2 + $0x9] sm:$0xff] %vm337, %v316
        %340 = vst.msk [vmem:[#allocation2 + $0x19] sm:$0xff] %vm337, %v318
        %341 = vst.msk [vmem:[#allocation2 + $0x21] sm:$0xff] %vm337, %v320
        %342 = vst.msk [vmem:[#allocation2 + $0x31] sm:$0xff] %vm337, %v322
        %343 = vst.msk [vmem:[#allocation2 + $0x39] sm:$0xff] %vm337, %v324
        %344 = vst.msk [vmem:[#allocation2 + $0x49] sm:$0xff] %vm337, %v326
        %345 = vst.msk [vmem:[#allocation2 + $0x51] sm:$0xff] %vm337, %v328
        %v346 = vld [vmem:[%s248 + $0x1] sm:$0x1]
        %v347 = vld [vmem:[%s248 + $0x11] sm:$0x1]
        %v348 = vld [vmem:[%s248 + $0x21] sm:$0x1]
        %v349 = vld [vmem:[%s248 + $0x31] sm:$0x1]
        %354 = vrot.lane.b32.xlu0 %v346, 1
        %v355 = vpop.permute.xlu0 %354
        %356 = vrot.lane.b32.xlu0 %v347, 1
        %v357 = vpop.permute.xlu0 %356
        %358 = vrot.lane.b32.xlu0 %v348, 1
        %v359 = vpop.permute.xlu0 %358
        %360 = vrot.lane.b32.xlu0 %v349, 1
        %v361 = vpop.permute.xlu0 %360
        %vm366 = vcmask 131080
        %367 = vst.msk [vmem:[#allocation2] sm:$0x1] %vm366, %v355
        %368 = vst.msk [vmem:[#allocation2 + $0x18] sm:$0x1] %vm366, %v357
        %369 = vst.msk [vmem:[#allocation2 + $0x30] sm:$0x1] %vm366, %v359
        %370 = vst.msk [vmem:[#allocation2 + $0x48] sm:$0x1] %vm366, %v361
        %v371 = vld [vmem:[%s248 + $0xe] sm:$0x1]
        %v372 = vld [vmem:[%s248 + $0x1e] sm:$0x1]
        %v373 = vld [vmem:[%s248 + $0x2e] sm:$0x1]
        %v374 = vld [vmem:[%s248 + $0x3e] sm:$0x1]
        %379 = vrot.lane.b32.xlu0 %v371, 1
        %v380 = vpop.permute.xlu0 %379
        %381 = vrot.lane.b32.xlu0 %v372, 1
        %v382 = vpop.permute.xlu0 %381
        %383 = vrot.lane.b32.xlu0 %v373, 1
        %v384 = vpop.permute.xlu0 %383
        %385 = vrot.lane.b32.xlu0 %v374, 1
        %v386 = vpop.permute.xlu0 %385
        %391 = vst.msk [vmem:[#allocation2 + $0x11] sm:$0x1] %vm366, %v380
        %392 = vst.msk [vmem:[#allocation2 + $0x29] sm:$0x1] %vm366, %v382
        %393 = vst.msk [vmem:[#allocation2 + $0x41] sm:$0x1] %vm366, %v384
        %394 = vst.msk [vmem:[#allocation2 + $0x59] sm:$0x1] %vm366, %v386
        %v395 = vld [vmem:[#allocation2] sm:$0xff]
        %v396 = vld [vmem:[#allocation2 + $0x8] sm:$0xff]
        %v397 = vld [vmem:[#allocation2 + $0x10] sm:$0x3]
        %v398 = vld [vmem:[#allocation2 + $0x18] sm:$0xff]
        %v399 = vld [vmem:[#allocation2 + $0x20] sm:$0xff]
        %v400 = vld [vmem:[#allocation2 + $0x28] sm:$0x3]
        %v401 = vld [vmem:[#allocation2 + $0x30] sm:$0xff]
        %v402 = vld [vmem:[#allocation2 + $0x38] sm:$0xff]
        %v403 = vld [vmem:[#allocation2 + $0x40] sm:$0x3]
        %v404 = vld [vmem:[#allocation2 + $0x48] sm:$0xff]
        %v405 = vld [vmem:[#allocation2 + $0x50] sm:$0xff]
        %v406 = vld [vmem:[#allocation2 + $0x58] sm:$0x3]
        %419 = vrot.lane.b32.xlu0 %v395, 126
        %v420 = vpop.permute.xlu0 %419
        %421 = vrot.lane.b32.xlu0 %v396, 126
        %v422 = vpop.permute.xlu0 %421
        %423 = vrot.lane.b32.xlu0 %v397, 126
        %v424 = vpop.permute.xlu0 %423
        %425 = vrot.lane.b32.xlu0 %v398, 126
        %v426 = vpop.permute.xlu0 %425
        %427 = vrot.lane.b32.xlu0 %v399, 126
        %v428 = vpop.permute.xlu0 %427
        %429 = vrot.lane.b32.xlu0 %v400, 126
        %v430 = vpop.permute.xlu0 %429
        %431 = vrot.lane.b32.xlu0 %v401, 126
        %v432 = vpop.permute.xlu0 %431
        %433 = vrot.lane.b32.xlu0 %v402, 126
        %v434 = vpop.permute.xlu0 %433
        %435 = vrot.lane.b32.xlu0 %v403, 126
        %v436 = vpop.permute.xlu0 %435
        %437 = vrot.lane.b32.xlu0 %v404, 126
        %v438 = vpop.permute.xlu0 %437
        %439 = vrot.lane.b32.xlu0 %v405, 126
        %v440 = vpop.permute.xlu0 %439
        %441 = vrot.lane.b32.xlu0 %v406, 126
        %v442 = vpop.permute.xlu0 %441
        %vm455 = vcmask 7168
        %456 = vst.msk [vmem:[#allocation2] sm:$0xff] %vm455, %v420
        %457 = vst.msk [vmem:[#allocation2 + $0x8] sm:$0xff] %vm455, %v422
        %vm458 = vcmask 1024
        %459 = vst.msk [vmem:[#allocation2 + $0x10] sm:$0x3] %vm458, %v424
        %460 = vst.msk [vmem:[#allocation2 + $0x18] sm:$0xff] %vm455, %v426
        %461 = vst.msk [vmem:[#allocation2 + $0x20] sm:$0xff] %vm455, %v428
        %462 = vst.msk [vmem:[#allocation2 + $0x28] sm:$0x3] %vm458, %v430
        %463 = vst.msk [vmem:[#allocation2 + $0x30] sm:$0xff] %vm455, %v432
        %464 = vst.msk [vmem:[#allocation2 + $0x38] sm:$0xff] %vm455, %v434
        %465 = vst.msk [vmem:[#allocation2 + $0x40] sm:$0x3] %vm458, %v436
        %466 = vst.msk [vmem:[#allocation2 + $0x48] sm:$0xff] %vm455, %v438
        %467 = vst.msk [vmem:[#allocation2 + $0x50] sm:$0xff] %vm455, %v440
        %468 = vst.msk [vmem:[#allocation2 + $0x58] sm:$0x3] %vm458, %v442
        %v469 = vld [vmem:[#allocation2] sm:$0xff]
        %v470 = vld [vmem:[#allocation2 + $0x8] sm:$0xff]
        %v471 = vld [vmem:[#allocation2 + $0x10] sm:$0x3]
        %v472 = vld [vmem:[#allocation2 + $0x18] sm:$0xff]
        %v473 = vld [vmem:[#allocation2 + $0x20] sm:$0xff]
        %v474 = vld [vmem:[#allocation2 + $0x28] sm:$0x3]
        %v475 = vld [vmem:[#allocation2 + $0x30] sm:$0xff]
        %v476 = vld [vmem:[#allocation2 + $0x38] sm:$0xff]
        %v477 = vld [vmem:[#allocation2 + $0x40] sm:$0x3]
        %v478 = vld [vmem:[#allocation2 + $0x48] sm:$0xff]
        %v479 = vld [vmem:[#allocation2 + $0x50] sm:$0xff]
        %v480 = vld [vmem:[#allocation2 + $0x58] sm:$0x3]
        %493 = vrot.lane.b32.xlu0 %v469, 2
        %v494 = vpop.permute.xlu0 %493
        %495 = vrot.lane.b32.xlu0 %v470, 2
        %v496 = vpop.permute.xlu0 %495
        %497 = vrot.lane.b32.xlu0 %v471, 2
        %v498 = vpop.permute.xlu0 %497
        %499 = vrot.lane.b32.xlu0 %v472, 2
        %v500 = vpop.permute.xlu0 %499
        %501 = vrot.lane.b32.xlu0 %v473, 2
        %v502 = vpop.permute.xlu0 %501
        %503 = vrot.lane.b32.xlu0 %v474, 2
        %v504 = vpop.permute.xlu0 %503
        %505 = vrot.lane.b32.xlu0 %v475, 2
        %v506 = vpop.permute.xlu0 %505
        %507 = vrot.lane.b32.xlu0 %v476, 2
        %v508 = vpop.permute.xlu0 %507
        %509 = vrot.lane.b32.xlu0 %v477, 2
        %v510 = vpop.permute.xlu0 %509
        %511 = vrot.lane.b32.xlu0 %v478, 2
        %v512 = vpop.permute.xlu0 %511
        %513 = vrot.lane.b32.xlu0 %v479, 2
        %v514 = vpop.permute.xlu0 %513
        %515 = vrot.lane.b32.xlu0 %v480, 2
        %v516 = vpop.permute.xlu0 %515
        %vm529 = vcmask 146568
        %530 = vst.msk [vmem:[#allocation2] sm:$0xff] %vm529, %v494
        %531 = vst.msk [vmem:[#allocation2 + $0x8] sm:$0xff] %vm529, %v496
        %vm532 = vcmask 140424
        %533 = vst.msk [vmem:[#allocation2 + $0x10] sm:$0x3] %vm532, %v498
        %534 = vst.msk [vmem:[#allocation2 + $0x18] sm:$0xff] %vm529, %v500
        %535 = vst.msk [vmem:[#allocation2 + $0x20] sm:$0xff] %vm529, %v502
        %536 = vst.msk [vmem:[#allocation2 + $0x28] sm:$0x3] %vm532, %v504
        %537 = vst.msk [vmem:[#allocation2 + $0x30] sm:$0xff] %vm529, %v506
        %538 = vst.msk [vmem:[#allocation2 + $0x38] sm:$0xff] %vm529, %v508
        %539 = vst.msk [vmem:[#allocation2 + $0x40] sm:$0x3] %vm532, %v510
        %540 = vst.msk [vmem:[#allocation2 + $0x48] sm:$0xff] %vm529, %v512
        %541 = vst.msk [vmem:[#allocation2 + $0x50] sm:$0xff] %vm529, %v514
        %542 = vst.msk [vmem:[#allocation2 + $0x58] sm:$0x3] %vm532, %v516
        %v543 = vld [vmem:[#allocation2] sm:$0xff]
        %v544 = vld [vmem:[#allocation2 + $0x8] sm:$0xff]
        %s545 = sld [smem:[#allocation8]]
        %v546 = vstv %s545
        %v547 = vmul.f32 %v546, %v543
        %v548 = vmul.f32 %v546, %v544
        %v549 = vadd.f32 %v547, 0.0
        %v550 = vadd.f32 %v548, 0.0
        %s551 = sld [smem:[#allocation8 + $0x24]]
        %v552 = vstv %s551
        %v553 = vmul.f32 %v552, %v543
        %v554 = vmul.f32 %v552, %v544
        %v555 = vadd.f32 %v553, 0.0
        %v556 = vadd.f32 %v554, 0.0
        %s557 = sld [smem:[#allocation8 + $0x48]]
        %v558 = vstv %s557
        %v559 = vmul.f32 %v558, %v543
        %v560 = vmul.f32 %v558, %v544
        %v561 = vadd.f32 %v559, 0.0
        %v562 = vadd.f32 %v560, 0.0
        %s563 = sld [smem:[#allocation8 + $0x6c]]
        %v564 = vstv %s563
        %v565 = vmul.f32 %v564, %v543
        %v566 = vmul.f32 %v564, %v544
        %v567 = vadd.f32 %v565, 0.0
        %v568 = vadd.f32 %v566, 0.0
        %s569 = sld [smem:[#allocation8 + $0x1]]
        %v570 = vstv %s569
        %v571 = vmul.f32 %v570, %v543
        %v572 = vmul.f32 %v570, %v544
        %575 = vrot.lane.b32.xlu0 %v571, 127
        %v576 = vpop.permute.xlu0 %575
        %577 = vrot.lane.b32.xlu0 %v572, 127
        %v578 = vpop.permute.xlu0 %577
        %v581 = vadd.f32 %v549, %v576
        %v582 = vadd.f32 %v550, %v578
        %s583 = sld [smem:[#allocation8 + $0x25]]
        %v584 = vstv %s583
        %v585 = vmul.f32 %v584, %v543
        %v586 = vmul.f32 %v584, %v544
        %589 = vrot.lane.b32.xlu0 %v585, 127
        %v590 = vpop.permute.xlu0 %589
        %591 = vrot.lane.b32.xlu0 %v586, 127
        %v592 = vpop.permute.xlu0 %591
        %v595 = vadd.f32 %v555, %v590
        %v596 = vadd.f32 %v556, %v592
        %s597 = sld [smem:[#allocation8 + $0x49]]
        %v598 = vstv %s597
        %v599 = vmul.f32 %v598, %v543
        %v600 = vmul.f32 %v598, %v544
        %603 = vrot.lane.b32.xlu0 %v599, 127
        %v604 = vpop.permute.xlu0 %603
        %605 = vrot.lane.b32.xlu0 %v600, 127
        %v606 = vpop.permute.xlu0 %605
        %v609 = vadd.f32 %v561, %v604
        %v610 = vadd.f32 %v562, %v606
        %s611 = sld [smem:[#allocation8 + $0x6d]]
        %v612 = vstv %s611
        %v613 = vmul.f32 %v612, %v543
        %v614 = vmul.f32 %v612, %v544
        %617 = vrot.lane.b32.xlu0 %v613, 127
        %v618 = vpop.permute.xlu0 %617
        %619 = vrot.lane.b32.xlu0 %v614, 127
        %v620 = vpop.permute.xlu0 %619
        %v623 = vadd.f32 %v567, %v618
        %v624 = vadd.f32 %v568, %v620
        %s625 = sld [smem:[#allocation8 + $0x2]]
        %v626 = vstv %s625
        %v627 = vmul.f32 %v626, %v543
        %v628 = vmul.f32 %v626, %v544
        %631 = vrot.lane.b32.xlu0 %v627, 126
        %v632 = vpop.permute.xlu0 %631
        %633 = vrot.lane.b32.xlu0 %v628, 126
        %v634 = vpop.permute.xlu0 %633
        %v637 = vadd.f32 %v581, %v632
        %v638 = vadd.f32 %v582, %v634
        %s639 = sld [smem:[#allocation8 + $0x26]]
        %v640 = vstv %s639
        %v641 = vmul.f32 %v640, %v543
        %v642 = vmul.f32 %v640, %v544
        %645 = vrot.lane.b32.xlu0 %v641, 126
        %v646 = vpop.permute.xlu0 %645
        %647 = vrot.lane.b32.xlu0 %v642, 126
        %v648 = vpop.permute.xlu0 %647
        %v651 = vadd.f32 %v595, %v646
        %v652 = vadd.f32 %v596, %v648
        %s653 = sld [smem:[#allocation8 + $0x4a]]
        %v654 = vstv %s653
        %v655 = vmul.f32 %v654, %v543
        %v656 = vmul.f32 %v654, %v544
        %659 = vrot.lane.b32.xlu0 %v655, 126
        %v660 = vpop.permute.xlu0 %659
        %661 = vrot.lane.b32.xlu0 %v656, 126
        %v662 = vpop.permute.xlu0 %661
        %v665 = vadd.f32 %v609, %v660
        %v666 = vadd.f32 %v610, %v662
        %s667 = sld [smem:[#allocation8 + $0x6e]]
        %v668 = vstv %s667
        %v669 = vmul.f32 %v668, %v543
        %v670 = vmul.f32 %v668, %v544
        %673 = vrot.lane.b32.xlu0 %v669, 126
        %v674 = vpop.permute.xlu0 %673
        %675 = vrot.lane.b32.xlu0 %v670, 126
        %v676 = vpop.permute.xlu0 %675
        %v679 = vadd.f32 %v623, %v674
        %v680 = vadd.f32 %v624, %v676
        %v681 = vld [vmem:[#allocation2 + $0x1] sm:$0xff]
        %v682 = vld [vmem:[#allocation2 + $0x9] sm:$0xff]
        %s683 = sld [smem:[#allocation8 + $0x3]]
        %v684 = vstv %s683
        %v685 = vmul.f32 %v684, %v681
        %v686 = vmul.f32 %v684, %v682
        %v687 = vadd.f32 %v637, %v685
        %v688 = vadd.f32 %v638, %v686
        %s689 = sld [smem:[#allocation8 + $0x27]]
        %v690 = vstv %s689
        %v691 = vmul.f32 %v690, %v681
        %v692 = vmul.f32 %v690, %v682
        %v693 = vadd.f32 %v651, %v691
        %v694 = vadd.f32 %v652, %v692
        %s695 = sld [smem:[#allocation8 + $0x4b]]
        %v696 = vstv %s695
        %v697 = vmul.f32 %v696, %v681
        %v698 = vmul.f32 %v696, %v682
        %v699 = vadd.f32 %v665, %v697
        %v700 = vadd.f32 %v666, %v698
        %s701 = sld [smem:[#allocation8 + $0x6f]]
        %v702 = vstv %s701
        %v703 = vmul.f32 %v702, %v681
        %v704 = vmul.f32 %v702, %v682
        %v705 = vadd.f32 %v679, %v703
        %v706 = vadd.f32 %v680, %v704
        %s707 = sld [smem:[#allocation8 + $0x4]]
        %v708 = vstv %s707
        %v709 = vmul.f32 %v708, %v681
        %v710 = vmul.f32 %v708, %v682
        %713 = vrot.lane.b32.xlu0 %v709, 127
        %v714 = vpop.permute.xlu0 %713
        %715 = vrot.lane.b32.xlu0 %v710, 127
        %v716 = vpop.permute.xlu0 %715
        %v719 = vadd.f32 %v687, %v714
        %v720 = vadd.f32 %v688, %v716
        %s721 = sld [smem:[#allocation8 + $0x28]]
        %v722 = vstv %s721
        %v723 = vmul.f32 %v722, %v681
        %v724 = vmul.f32 %v722, %v682
        %727 = vrot.lane.b32.xlu0 %v723, 127
        %v728 = vpop.permute.xlu0 %727
        %729 = vrot.lane.b32.xlu0 %v724, 127
        %v730 = vpop.permute.xlu0 %729
        %v733 = vadd.f32 %v693, %v728
        %v734 = vadd.f32 %v694, %v730
        %s735 = sld [smem:[#allocation8 + $0x4c]]
        %v736 = vstv %s735
        %v737 = vmul.f32 %v736, %v681
        %v738 = vmul.f32 %v736, %v682
        %741 = vrot.lane.b32.xlu0 %v737, 127
        %v742 = vpop.permute.xlu0 %741
        %743 = vrot.lane.b32.xlu0 %v738, 127
        %v744 = vpop.permute.xlu0 %743
        %v747 = vadd.f32 %v699, %v742
        %v748 = vadd.f32 %v700, %v744
        %s749 = sld [smem:[#allocation8 + $0x70]]
        %v750 = vstv %s749
        %v751 = vmul.f32 %v750, %v681
        %v752 = vmul.f32 %v750, %v682
        %755 = vrot.lane.b32.xlu0 %v751, 127
        %v756 = vpop.permute.xlu0 %755
        %757 = vrot.lane.b32.xlu0 %v752, 127
        %v758 = vpop.permute.xlu0 %757
        %v761 = vadd.f32 %v705, %v756
        %v762 = vadd.f32 %v706, %v758
        %s763 = sld [smem:[#allocation8 + $0x5]]
        %v764 = vstv %s763
        %v765 = vmul.f32 %v764, %v681
        %v766 = vmul.f32 %v764, %v682
        %769 = vrot.lane.b32.xlu0 %v765, 126
        %v770 = vpop.permute.xlu0 %769
        %771 = vrot.lane.b32.xlu0 %v766, 126
        %v772 = vpop.permute.xlu0 %771
        %v775 = vadd.f32 %v719, %v770
        %v776 = vadd.f32 %v720, %v772
        %s777 = sld [smem:[#allocation8 + $0x29]]
        %v778 = vstv %s777
        %v779 = vmul.f32 %v778, %v681
        %v780 = vmul.f32 %v778, %v682
        %783 = vrot.lane.b32.xlu0 %v779, 126
        %v784 = vpop.permute.xlu0 %783
        %785 = vrot.lane.b32.xlu0 %v780, 126
        %v786 = vpop.permute.xlu0 %785
        %v789 = vadd.f32 %v733, %v784
        %v790 = vadd.f32 %v734, %v786
        %s791 = sld [smem:[#allocation8 + $0x4d]]
        %v792 = vstv %s791
        %v793 = vmul.f32 %v792, %v681
        %v794 = vmul.f32 %v792, %v682
        %797 = vrot.lane.b32.xlu0 %v793, 126
        %v798 = vpop.permute.xlu0 %797
        %799 = vrot.lane.b32.xlu0 %v794, 126
        %v800 = vpop.permute.xlu0 %799
        %v803 = vadd.f32 %v747, %v798
        %v804 = vadd.f32 %v748, %v800
        %s805 = sld [smem:[#allocation8 + $0x71]]
        %v806 = vstv %s805
        %v807 = vmul.f32 %v806, %v681
        %v808 = vmul.f32 %v806, %v682
        %811 = vrot.lane.b32.xlu0 %v807, 126
        %v812 = vpop.permute.xlu0 %811
        %813 = vrot.lane.b32.xlu0 %v808, 126
        %v814 = vpop.permute.xlu0 %813
        %v817 = vadd.f32 %v761, %v812
        %v818 = vadd.f32 %v762, %v814
        %v819 = vld [vmem:[#allocation2 + $0x2] sm:$0xff]
        %v820 = vld [vmem:[#allocation2 + $0xa] sm:$0xff]
        %s821 = sld [smem:[#allocation8 + $0x6]]
        %v822 = vstv %s821
        %v823 = vmul.f32 %v822, %v819
        %v824 = vmul.f32 %v822, %v820
        %v825 = vadd.f32 %v775, %v823
        %v826 = vadd.f32 %v776, %v824
        %s827 = sld [smem:[#allocation8 + $0x2a]]
        %v828 = vstv %s827
        %v829 = vmul.f32 %v828, %v819
        %v830 = vmul.f32 %v828, %v820
        %v831 = vadd.f32 %v789, %v829
        %v832 = vadd.f32 %v790, %v830
        %s833 = sld [smem:[#allocation8 + $0x4e]]
        %v834 = vstv %s833
        %v835 = vmul.f32 %v834, %v819
        %v836 = vmul.f32 %v834, %v820
        %v837 = vadd.f32 %v803, %v835
        %v838 = vadd.f32 %v804, %v836
        %s839 = sld [smem:[#allocation8 + $0x72]]
        %v840 = vstv %s839
        %v841 = vmul.f32 %v840, %v819
        %v842 = vmul.f32 %v840, %v820
        %v843 = vadd.f32 %v817, %v841
        %v844 = vadd.f32 %v818, %v842
        %s845 = sld [smem:[#allocation8 + $0x7]]
        %v846 = vstv %s845
        %v847 = vmul.f32 %v846, %v819
        %v848 = vmul.f32 %v846, %v820
        %851 = vrot.lane.b32.xlu0 %v847, 127
        %v852 = vpop.permute.xlu0 %851
        %853 = vrot.lane.b32.xlu0 %v848, 127
        %v854 = vpop.permute.xlu0 %853
        %v857 = vadd.f32 %v825, %v852
        %v858 = vadd.f32 %v826, %v854
        %s859 = sld [smem:[#allocation8 + $0x2b]]
        %v860 = vstv %s859
        %v861 = vmul.f32 %v860, %v819
        %v862 = vmul.f32 %v860, %v820
        %865 = vrot.lane.b32.xlu0 %v861, 127
        %v866 = vpop.permute.xlu0 %865
        %867 = vrot.lane.b32.xlu0 %v862, 127
        %v868 = vpop.permute.xlu0 %867
        %v871 = vadd.f32 %v831, %v866
        %v872 = vadd.f32 %v832, %v868
        %s873 = sld [smem:[#allocation8 + $0x4f]]
        %v874 = vstv %s873
        %v875 = vmul.f32 %v874, %v819
        %v876 = vmul.f32 %v874, %v820
        %879 = vrot.lane.b32.xlu0 %v875, 127
        %v880 = vpop.permute.xlu0 %879
        %881 = vrot.lane.b32.xlu0 %v876, 127
        %v882 = vpop.permute.xlu0 %881
        %v885 = vadd.f32 %v837, %v880
        %v886 = vadd.f32 %v838, %v882
        %s887 = sld [smem:[#allocation8 + $0x73]]
        %v888 = vstv %s887
        %v889 = vmul.f32 %v888, %v819
        %v890 = vmul.f32 %v888, %v820
        %893 = vrot.lane.b32.xlu0 %v889, 127
        %v894 = vpop.permute.xlu0 %893
        %895 = vrot.lane.b32.xlu0 %v890, 127
        %v896 = vpop.permute.xlu0 %895
        %v899 = vadd.f32 %v843, %v894
        %v900 = vadd.f32 %v844, %v896
        %s901 = sld [smem:[#allocation8 + $0x8]]
        %v902 = vstv %s901
        %v903 = vmul.f32 %v902, %v819
        %v904 = vmul.f32 %v902, %v820
        %907 = vrot.lane.b32.xlu0 %v903, 126
        %v908 = vpop.permute.xlu0 %907
        %909 = vrot.lane.b32.xlu0 %v904, 126
        %v910 = vpop.permute.xlu0 %909
        %v913 = vadd.f32 %v857, %v908
        %v914 = vadd.f32 %v858, %v910
        %s915 = sld [smem:[#allocation8 + $0x2c]]
        %v916 = vstv %s915
        %v917 = vmul.f32 %v916, %v819
        %v918 = vmul.f32 %v916, %v820
        %921 = vrot.lane.b32.xlu0 %v917, 126
        %v922 = vpop.permute.xlu0 %921
        %923 = vrot.lane.b32.xlu0 %v918, 126
        %v924 = vpop.permute.xlu0 %923
        %v927 = vadd.f32 %v871, %v922
        %v928 = vadd.f32 %v872, %v924
        %s929 = sld [smem:[#allocation8 + $0x50]]
        %v930 = vstv %s929
        %v931 = vmul.f32 %v930, %v819
        %v932 = vmul.f32 %v930, %v820
        %935 = vrot.lane.b32.xlu0 %v931, 126
        %v936 = vpop.permute.xlu0 %935
        %937 = vrot.lane.b32.xlu0 %v932, 126
        %v938 = vpop.permute.xlu0 %937
        %v941 = vadd.f32 %v885, %v936
        %v942 = vadd.f32 %v886, %v938
        %s943 = sld [smem:[#allocation8 + $0x74]]
        %v944 = vstv %s943
        %v945 = vmul.f32 %v944, %v819
        %v946 = vmul.f32 %v944, %v820
        %949 = vrot.lane.b32.xlu0 %v945, 126
        %v950 = vpop.permute.xlu0 %949
        %951 = vrot.lane.b32.xlu0 %v946, 126
        %v952 = vpop.permute.xlu0 %951
        %v955 = vadd.f32 %v899, %v950
        %v956 = vadd.f32 %v900, %v952
        %s957 = scalar_lea.vmem [#allocation2], 24
        %v958 = vld [vmem:[%s957] sm:$0xff]
        %v959 = vld [vmem:[%s957 + $0x8] sm:$0xff]
        %s960 = sld [smem:[#allocation8 + $0x9]]
        %v961 = vstv %s960
        %v962 = vmul.f32 %v961, %v958
        %v963 = vmul.f32 %v961, %v959
        %v964 = vadd.f32 %v913, %v962
        %v965 = vadd.f32 %v914, %v963
        %s966 = sld [smem:[#allocation8 + $0x2d]]
        %v967 = vstv %s966
        %v968 = vmul.f32 %v967, %v958
        %v969 = vmul.f32 %v967, %v959
        %v970 = vadd.f32 %v927, %v968
        %v971 = vadd.f32 %v928, %v969
        %s972 = sld [smem:[#allocation8 + $0x51]]
        %v973 = vstv %s972
        %v974 = vmul.f32 %v973, %v958
        %v975 = vmul.f32 %v973, %v959
        %v976 = vadd.f32 %v941, %v974
        %v977 = vadd.f32 %v942, %v975
        %s978 = sld [smem:[#allocation8 + $0x75]]
        %v979 = vstv %s978
        %v980 = vmul.f32 %v979, %v958
        %v981 = vmul.f32 %v979, %v959
        %v982 = vadd.f32 %v955, %v980
        %v983 = vadd.f32 %v956, %v981
        %s984 = sld [smem:[#allocation8 + $0xa]]
        %v985 = vstv %s984
        %v986 = vmul.f32 %v985, %v958
        %v987 = vmul.f32 %v985, %v959
        %990 = vrot.lane.b32.xlu0 %v986, 127
        %v991 = vpop.permute.xlu0 %990
        %992 = vrot.lane.b32.xlu0 %v987, 127
        %v993 = vpop.permute.xlu0 %992
        %v996 = vadd.f32 %v964, %v991
        %v997 = vadd.f32 %v965, %v993
        %s998 = sld [smem:[#allocation8 + $0x2e]]
        %v999 = vstv %s998
        %v1000 = vmul.f32 %v999, %v958
        %v1001 = vmul.f32 %v999, %v959
        %1004 = vrot.lane.b32.xlu0 %v1000, 127
        %v1005 = vpop.permute.xlu0 %1004
        %1006 = vrot.lane.b32.xlu0 %v1001, 127
        %v1007 = vpop.permute.xlu0 %1006
        %v1010 = vadd.f32 %v970, %v1005
        %v1011 = vadd.f32 %v971, %v1007
        %s1012 = sld [smem:[#allocation8 + $0x52]]
        %v1013 = vstv %s1012
        %v1014 = vmul.f32 %v1013, %v958
        %v1015 = vmul.f32 %v1013, %v959
        %1018 = vrot.lane.b32.xlu0 %v1014, 127
        %v1019 = vpop.permute.xlu0 %1018
        %1020 = vrot.lane.b32.xlu0 %v1015, 127
        %v1021 = vpop.permute.xlu0 %1020
        %v1024 = vadd.f32 %v976, %v1019
        %v1025 = vadd.f32 %v977, %v1021
        %s1026 = sld [smem:[#allocation8 + $0x76]]
        %v1027 = vstv %s1026
        %v1028 = vmul.f32 %v1027, %v958
        %v1029 = vmul.f32 %v1027, %v959
        %1032 = vrot.lane.b32.xlu0 %v1028, 127
        %v1033 = vpop.permute.xlu0 %1032
        %1034 = vrot.lane.b32.xlu0 %v1029, 127
        %v1035 = vpop.permute.xlu0 %1034
        %v1038 = vadd.f32 %v982, %v1033
        %v1039 = vadd.f32 %v983, %v1035
        %s1040 = sld [smem:[#allocation8 + $0xb]]
        %v1041 = vstv %s1040
        %v1042 = vmul.f32 %v1041, %v958
        %v1043 = vmul.f32 %v1041, %v959
        %1046 = vrot.lane.b32.xlu0 %v1042, 126
        %v1047 = vpop.permute.xlu0 %1046
        %1048 = vrot.lane.b32.xlu0 %v1043, 126
        %v1049 = vpop.permute.xlu0 %1048
        %v1052 = vadd.f32 %v996, %v1047
        %v1053 = vadd.f32 %v997, %v1049
        %s1054 = sld [smem:[#allocation8 + $0x2f]]
        %v1055 = vstv %s1054
        %v1056 = vmul.f32 %v1055, %v958
        %v1057 = vmul.f32 %v1055, %v959
        %1060 = vrot.lane.b32.xlu0 %v1056, 126
        %v1061 = vpop.permute.xlu0 %1060
        %1062 = vrot.lane.b32.xlu0 %v1057, 126
        %v1063 = vpop.permute.xlu0 %1062
        %v1066 = vadd.f32 %v1010, %v1061
        %v1067 = vadd.f32 %v1011, %v1063
        %s1068 = sld [smem:[#allocation8 + $0x53]]
        %v1069 = vstv %s1068
        %v1070 = vmul.f32 %v1069, %v958
        %v1071 = vmul.f32 %v1069, %v959
        %1074 = vrot.lane.b32.xlu0 %v1070, 126
        %v1075 = vpop.permute.xlu0 %1074
        %1076 = vrot.lane.b32.xlu0 %v1071, 126
        %v1077 = vpop.permute.xlu0 %1076
        %v1080 = vadd.f32 %v1024, %v1075
        %v1081 = vadd.f32 %v1025, %v1077
        %s1082 = sld [smem:[#allocation8 + $0x77]]
        %v1083 = vstv %s1082
        %v1084 = vmul.f32 %v1083, %v958
        %v1085 = vmul.f32 %v1083, %v959
        %1088 = vrot.lane.b32.xlu0 %v1084, 126
        %v1089 = vpop.permute.xlu0 %1088
        %1090 = vrot.lane.b32.xlu0 %v1085, 126
        %v1091 = vpop.permute.xlu0 %1090
        %v1094 = vadd.f32 %v1038, %v1089
        %v1095 = vadd.f32 %v1039, %v1091
        %v1096 = vld [vmem:[%s957 + $0x1] sm:$0xff]
        %v1097 = vld [vmem:[%s957 + $0x9] sm:$0xff]
        %s1098 = sld [smem:[#allocation8 + $0xc]]
        %v1099 = vstv %s1098
        %v1100 = vmul.f32 %v1099, %v1096
        %v1101 = vmul.f32 %v1099, %v1097
        %v1102 = vadd.f32 %v1052, %v1100
        %v1103 = vadd.f32 %v1053, %v1101
        %s1104 = sld [smem:[#allocation8 + $0x30]]
        %v1105 = vstv %s1104
        %v1106 = vmul.f32 %v1105, %v1096
        %v1107 = vmul.f32 %v1105, %v1097
        %v1108 = vadd.f32 %v1066, %v1106
        %v1109 = vadd.f32 %v1067, %v1107
        %s1110 = sld [smem:[#allocation8 + $0x54]]
        %v1111 = vstv %s1110
        %v1112 = vmul.f32 %v1111, %v1096
        %v1113 = vmul.f32 %v1111, %v1097
        %v1114 = vadd.f32 %v1080, %v1112
        %v1115 = vadd.f32 %v1081, %v1113
        %s1116 = sld [smem:[#allocation8 + $0x78]]
        %v1117 = vstv %s1116
        %v1118 = vmul.f32 %v1117, %v1096
        %v1119 = vmul.f32 %v1117, %v1097
        %v1120 = vadd.f32 %v1094, %v1118
        %v1121 = vadd.f32 %v1095, %v1119
        %s1122 = sld [smem:[#allocation8 + $0xd]]
        %v1123 = vstv %s1122
        %v1124 = vmul.f32 %v1123, %v1096
        %v1125 = vmul.f32 %v1123, %v1097
        %1128 = vrot.lane.b32.xlu0 %v1124, 127
        %v1129 = vpop.permute.xlu0 %1128
        %1130 = vrot.lane.b32.xlu0 %v1125, 127
        %v1131 = vpop.permute.xlu0 %1130
        %v1134 = vadd.f32 %v1102, %v1129
        %v1135 = vadd.f32 %v1103, %v1131
        %s1136 = sld [smem:[#allocation8 + $0x31]]
        %v1137 = vstv %s1136
        %v1138 = vmul.f32 %v1137, %v1096
        %v1139 = vmul.f32 %v1137, %v1097
        %1142 = vrot.lane.b32.xlu0 %v1138, 127
        %v1143 = vpop.permute.xlu0 %1142
        %1144 = vrot.lane.b32.xlu0 %v1139, 127
        %v1145 = vpop.permute.xlu0 %1144
        %v1148 = vadd.f32 %v1108, %v1143
        %v1149 = vadd.f32 %v1109, %v1145
        %s1150 = sld [smem:[#allocation8 + $0x55]]
        %v1151 = vstv %s1150
        %v1152 = vmul.f32 %v1151, %v1096
        %v1153 = vmul.f32 %v1151, %v1097
        %1156 = vrot.lane.b32.xlu0 %v1152, 127
        %v1157 = vpop.permute.xlu0 %1156
        %1158 = vrot.lane.b32.xlu0 %v1153, 127
        %v1159 = vpop.permute.xlu0 %1158
        %v1162 = vadd.f32 %v1114, %v1157
        %v1163 = vadd.f32 %v1115, %v1159
        %s1164 = sld [smem:[#allocation8 + $0x79]]
        %v1165 = vstv %s1164
        %v1166 = vmul.f32 %v1165, %v1096
        %v1167 = vmul.f32 %v1165, %v1097
        %1170 = vrot.lane.b32.xlu0 %v1166, 127
        %v1171 = vpop.permute.xlu0 %1170
        %1172 = vrot.lane.b32.xlu0 %v1167, 127
        %v1173 = vpop.permute.xlu0 %1172
        %v1176 = vadd.f32 %v1120, %v1171
        %v1177 = vadd.f32 %v1121, %v1173
        %s1178 = sld [smem:[#allocation8 + $0xe]]
        %v1179 = vstv %s1178
        %v1180 = vmul.f32 %v1179, %v1096
        %v1181 = vmul.f32 %v1179, %v1097
        %1184 = vrot.lane.b32.xlu0 %v1180, 126
        %v1185 = vpop.permute.xlu0 %1184
        %1186 = vrot.lane.b32.xlu0 %v1181, 126
        %v1187 = vpop.permute.xlu0 %1186
        %v1190 = vadd.f32 %v1134, %v1185
        %v1191 = vadd.f32 %v1135, %v1187
        %s1192 = sld [smem:[#allocation8 + $0x32]]
        %v1193 = vstv %s1192
        %v1194 = vmul.f32 %v1193, %v1096
        %v1195 = vmul.f32 %v1193, %v1097
        %1198 = vrot.lane.b32.xlu0 %v1194, 126
        %v1199 = vpop.permute.xlu0 %1198
        %1200 = vrot.lane.b32.xlu0 %v1195, 126
        %v1201 = vpop.permute.xlu0 %1200
        %v1204 = vadd.f32 %v1148, %v1199
        %v1205 = vadd.f32 %v1149, %v1201
        %s1206 = sld [smem:[#allocation8 + $0x56]]
        %v1207 = vstv %s1206
        %v1208 = vmul.f32 %v1207, %v1096
        %v1209 = vmul.f32 %v1207, %v1097
        %1212 = vrot.lane.b32.xlu0 %v1208, 126
        %v1213 = vpop.permute.xlu0 %1212
        %1214 = vrot.lane.b32.xlu0 %v1209, 126
        %v1215 = vpop.permute.xlu0 %1214
        %v1218 = vadd.f32 %v1162, %v1213
        %v1219 = vadd.f32 %v1163, %v1215
        %s1220 = sld [smem:[#allocation8 + $0x7a]]
        %v1221 = vstv %s1220
        %v1222 = vmul.f32 %v1221, %v1096
        %v1223 = vmul.f32 %v1221, %v1097
        %1226 = vrot.lane.b32.xlu0 %v1222, 126
        %v1227 = vpop.permute.xlu0 %1226
        %1228 = vrot.lane.b32.xlu0 %v1223, 126
        %v1229 = vpop.permute.xlu0 %1228
        %v1232 = vadd.f32 %v1176, %v1227
        %v1233 = vadd.f32 %v1177, %v1229
        %v1234 = vld [vmem:[%s957 + $0x2] sm:$0xff]
        %v1235 = vld [vmem:[%s957 + $0xa] sm:$0xff]
        %s1236 = sld [smem:[#allocation8 + $0xf]]
        %v1237 = vstv %s1236
        %v1238 = vmul.f32 %v1237, %v1234
        %v1239 = vmul.f32 %v1237, %v1235
        %v1240 = vadd.f32 %v1190, %v1238
        %v1241 = vadd.f32 %v1191, %v1239
        %s1242 = sld [smem:[#allocation8 + $0x33]]
        %v1243 = vstv %s1242
        %v1244 = vmul.f32 %v1243, %v1234
        %v1245 = vmul.f32 %v1243, %v1235
        %v1246 = vadd.f32 %v1204, %v1244
        %v1247 = vadd.f32 %v1205, %v1245
        %s1248 = sld [smem:[#allocation8 + $0x57]]
        %v1249 = vstv %s1248
        %v1250 = vmul.f32 %v1249, %v1234
        %v1251 = vmul.f32 %v1249, %v1235
        %v1252 = vadd.f32 %v1218, %v1250
        %v1253 = vadd.f32 %v1219, %v1251
        %s1254 = sld [smem:[#allocation8 + $0x7b]]
        %v1255 = vstv %s1254
        %v1256 = vmul.f32 %v1255, %v1234
        %v1257 = vmul.f32 %v1255, %v1235
        %v1258 = vadd.f32 %v1232, %v1256
        %v1259 = vadd.f32 %v1233, %v1257
        %s1260 = sld [smem:[#allocation8 + $0x10]]
        %v1261 = vstv %s1260
        %v1262 = vmul.f32 %v1261, %v1234
        %v1263 = vmul.f32 %v1261, %v1235
        %1266 = vrot.lane.b32.xlu0 %v1262, 127
        %v1267 = vpop.permute.xlu0 %1266
        %1268 = vrot.lane.b32.xlu0 %v1263, 127
        %v1269 = vpop.permute.xlu0 %1268
        %v1272 = vadd.f32 %v1240, %v1267
        %v1273 = vadd.f32 %v1241, %v1269
        %s1274 = sld [smem:[#allocation8 + $0x34]]
        %v1275 = vstv %s1274
        %v1276 = vmul.f32 %v1275, %v1234
        %v1277 = vmul.f32 %v1275, %v1235
        %1280 = vrot.lane.b32.xlu0 %v1276, 127
        %v1281 = vpop.permute.xlu0 %1280
        %1282 = vrot.lane.b32.xlu0 %v1277, 127
        %v1283 = vpop.permute.xlu0 %1282
        %v1286 = vadd.f32 %v1246, %v1281
        %v1287 = vadd.f32 %v1247, %v1283
        %s1288 = sld [smem:[#allocation8 + $0x58]]
        %v1289 = vstv %s1288
        %v1290 = vmul.f32 %v1289, %v1234
        %v1291 = vmul.f32 %v1289, %v1235
        %1294 = vrot.lane.b32.xlu0 %v1290, 127
        %v1295 = vpop.permute.xlu0 %1294
        %1296 = vrot.lane.b32.xlu0 %v1291, 127
        %v1297 = vpop.permute.xlu0 %1296
        %v1300 = vadd.f32 %v1252, %v1295
        %v1301 = vadd.f32 %v1253, %v1297
        %s1302 = sld [smem:[#allocation8 + $0x7c]]
        %v1303 = vstv %s1302
        %v1304 = vmul.f32 %v1303, %v1234
        %v1305 = vmul.f32 %v1303, %v1235
        %1308 = vrot.lane.b32.xlu0 %v1304, 127
        %v1309 = vpop.permute.xlu0 %1308
        %1310 = vrot.lane.b32.xlu0 %v1305, 127
        %v1311 = vpop.permute.xlu0 %1310
        %v1314 = vadd.f32 %v1258, %v1309
        %v1315 = vadd.f32 %v1259, %v1311
        %s1316 = sld [smem:[#allocation8 + $0x11]]
        %v1317 = vstv %s1316
        %v1318 = vmul.f32 %v1317, %v1234
        %v1319 = vmul.f32 %v1317, %v1235
        %1322 = vrot.lane.b32.xlu0 %v1318, 126
        %v1323 = vpop.permute.xlu0 %1322
        %1324 = vrot.lane.b32.xlu0 %v1319, 126
        %v1325 = vpop.permute.xlu0 %1324
        %v1328 = vadd.f32 %v1272, %v1323
        %v1329 = vadd.f32 %v1273, %v1325
        %s1330 = sld [smem:[#allocation8 + $0x35]]
        %v1331 = vstv %s1330
        %v1332 = vmul.f32 %v1331, %v1234
        %v1333 = vmul.f32 %v1331, %v1235
        %1336 = vrot.lane.b32.xlu0 %v1332, 126
        %v1337 = vpop.permute.xlu0 %1336
        %1338 = vrot.lane.b32.xlu0 %v1333, 126
        %v1339 = vpop.permute.xlu0 %1338
        %v1342 = vadd.f32 %v1286, %v1337
        %v1343 = vadd.f32 %v1287, %v1339
        %s1344 = sld [smem:[#allocation8 + $0x59]]
        %v1345 = vstv %s1344
        %v1346 = vmul.f32 %v1345, %v1234
        %v1347 = vmul.f32 %v1345, %v1235
        %1350 = vrot.lane.b32.xlu0 %v1346, 126
        %v1351 = vpop.permute.xlu0 %1350
        %1352 = vrot.lane.b32.xlu0 %v1347, 126
        %v1353 = vpop.permute.xlu0 %1352
        %v1356 = vadd.f32 %v1300, %v1351
        %v1357 = vadd.f32 %v1301, %v1353
        %s1358 = sld [smem:[#allocation8 + $0x7d]]
        %v1359 = vstv %s1358
        %v1360 = vmul.f32 %v1359, %v1234
        %v1361 = vmul.f32 %v1359, %v1235
        %1364 = vrot.lane.b32.xlu0 %v1360, 126
        %v1365 = vpop.permute.xlu0 %1364
        %1366 = vrot.lane.b32.xlu0 %v1361, 126
        %v1367 = vpop.permute.xlu0 %1366
        %v1370 = vadd.f32 %v1314, %v1365
        %v1371 = vadd.f32 %v1315, %v1367
        %s1372 = scalar_lea.vmem [#allocation2], 48
        %v1373 = vld [vmem:[%s1372] sm:$0xff]
        %v1374 = vld [vmem:[%s1372 + $0x8] sm:$0xff]
        %s1375 = sld [smem:[#allocation8 + $0x12]]
        %v1376 = vstv %s1375
        %v1377 = vmul.f32 %v1376, %v1373
        %v1378 = vmul.f32 %v1376, %v1374
        %v1379 = vadd.f32 %v1328, %v1377
        %v1380 = vadd.f32 %v1329, %v1378
        %s1381 = sld [smem:[#allocation8 + $0x36]]
        %v1382 = vstv %s1381
        %v1383 = vmul.f32 %v1382, %v1373
        %v1384 = vmul.f32 %v1382, %v1374
        %v1385 = vadd.f32 %v1342, %v1383
        %v1386 = vadd.f32 %v1343, %v1384
        %s1387 = sld [smem:[#allocation8 + $0x5a]]
        %v1388 = vstv %s1387
        %v1389 = vmul.f32 %v1388, %v1373
        %v1390 = vmul.f32 %v1388, %v1374
        %v1391 = vadd.f32 %v1356, %v1389
        %v1392 = vadd.f32 %v1357, %v1390
        %s1393 = sld [smem:[#allocation8 + $0x7e]]
        %v1394 = vstv %s1393
        %v1395 = vmul.f32 %v1394, %v1373
        %v1396 = vmul.f32 %v1394, %v1374
        %v1397 = vadd.f32 %v1370, %v1395
        %v1398 = vadd.f32 %v1371, %v1396
        %s1399 = sld [smem:[#allocation8 + $0x13]]
        %v1400 = vstv %s1399
        %v1401 = vmul.f32 %v1400, %v1373
        %v1402 = vmul.f32 %v1400, %v1374
        %1405 = vrot.lane.b32.xlu0 %v1401, 127
        %v1406 = vpop.permute.xlu0 %1405
        %1407 = vrot.lane.b32.xlu0 %v1402, 127
        %v1408 = vpop.permute.xlu0 %1407
        %v1411 = vadd.f32 %v1379, %v1406
        %v1412 = vadd.f32 %v1380, %v1408
        %s1413 = sld [smem:[#allocation8 + $0x37]]
        %v1414 = vstv %s1413
        %v1415 = vmul.f32 %v1414, %v1373
        %v1416 = vmul.f32 %v1414, %v1374
        %1419 = vrot.lane.b32.xlu0 %v1415, 127
        %v1420 = vpop.permute.xlu0 %1419
        %1421 = vrot.lane.b32.xlu0 %v1416, 127
        %v1422 = vpop.permute.xlu0 %1421
        %v1425 = vadd.f32 %v1385, %v1420
        %v1426 = vadd.f32 %v1386, %v1422
        %s1427 = sld [smem:[#allocation8 + $0x5b]]
        %v1428 = vstv %s1427
        %v1429 = vmul.f32 %v1428, %v1373
        %v1430 = vmul.f32 %v1428, %v1374
        %1433 = vrot.lane.b32.xlu0 %v1429, 127
        %v1434 = vpop.permute.xlu0 %1433
        %1435 = vrot.lane.b32.xlu0 %v1430, 127
        %v1436 = vpop.permute.xlu0 %1435
        %v1439 = vadd.f32 %v1391, %v1434
        %v1440 = vadd.f32 %v1392, %v1436
        %s1441 = sld [smem:[#allocation8 + $0x7f]]
        %v1442 = vstv %s1441
        %v1443 = vmul.f32 %v1442, %v1373
        %v1444 = vmul.f32 %v1442, %v1374
        %1447 = vrot.lane.b32.xlu0 %v1443, 127
        %v1448 = vpop.permute.xlu0 %1447
        %1449 = vrot.lane.b32.xlu0 %v1444, 127
        %v1450 = vpop.permute.xlu0 %1449
        %v1453 = vadd.f32 %v1397, %v1448
        %v1454 = vadd.f32 %v1398, %v1450
        %s1455 = sld [smem:[#allocation8 + $0x14]]
        %v1456 = vstv %s1455
        %v1457 = vmul.f32 %v1456, %v1373
        %v1458 = vmul.f32 %v1456, %v1374
        %1461 = vrot.lane.b32.xlu0 %v1457, 126
        %v1462 = vpop.permute.xlu0 %1461
        %1463 = vrot.lane.b32.xlu0 %v1458, 126
        %v1464 = vpop.permute.xlu0 %1463
        %v1467 = vadd.f32 %v1411, %v1462
        %v1468 = vadd.f32 %v1412, %v1464
        %s1469 = sld [smem:[#allocation8 + $0x38]]
        %v1470 = vstv %s1469
        %v1471 = vmul.f32 %v1470, %v1373
        %v1472 = vmul.f32 %v1470, %v1374
        %1475 = vrot.lane.b32.xlu0 %v1471, 126
        %v1476 = vpop.permute.xlu0 %1475
        %1477 = vrot.lane.b32.xlu0 %v1472, 126
        %v1478 = vpop.permute.xlu0 %1477
        %v1481 = vadd.f32 %v1425, %v1476
        %v1482 = vadd.f32 %v1426, %v1478
        %s1483 = sld [smem:[#allocation8 + $0x5c]]
        %v1484 = vstv %s1483
        %v1485 = vmul.f32 %v1484, %v1373
        %v1486 = vmul.f32 %v1484, %v1374
        %1489 = vrot.lane.b32.xlu0 %v1485, 126
        %v1490 = vpop.permute.xlu0 %1489
        %1491 = vrot.lane.b32.xlu0 %v1486, 126
        %v1492 = vpop.permute.xlu0 %1491
        %v1495 = vadd.f32 %v1439, %v1490
        %v1496 = vadd.f32 %v1440, %v1492
        %s1497 = sld [smem:[#allocation8 + $0x80]]
        %v1498 = vstv %s1497
        %v1499 = vmul.f32 %v1498, %v1373
        %v1500 = vmul.f32 %v1498, %v1374
        %1503 = vrot.lane.b32.xlu0 %v1499, 126
        %v1504 = vpop.permute.xlu0 %1503
        %1505 = vrot.lane.b32.xlu0 %v1500, 126
        %v1506 = vpop.permute.xlu0 %1505
        %v1509 = vadd.f32 %v1453, %v1504
        %v1510 = vadd.f32 %v1454, %v1506
        %v1511 = vld [vmem:[%s1372 + $0x1] sm:$0xff]
        %v1512 = vld [vmem:[%s1372 + $0x9] sm:$0xff]
        %s1513 = sld [smem:[#allocation8 + $0x15]]
        %v1514 = vstv %s1513
        %v1515 = vmul.f32 %v1514, %v1511
        %v1516 = vmul.f32 %v1514, %v1512
        %v1517 = vadd.f32 %v1467, %v1515
        %v1518 = vadd.f32 %v1468, %v1516
        %s1519 = sld [smem:[#allocation8 + $0x39]]
        %v1520 = vstv %s1519
        %v1521 = vmul.f32 %v1520, %v1511
        %v1522 = vmul.f32 %v1520, %v1512
        %v1523 = vadd.f32 %v1481, %v1521
        %v1524 = vadd.f32 %v1482, %v1522
        %s1525 = sld [smem:[#allocation8 + $0x5d]]
        %v1526 = vstv %s1525
        %v1527 = vmul.f32 %v1526, %v1511
        %v1528 = vmul.f32 %v1526, %v1512
        %v1529 = vadd.f32 %v1495, %v1527
        %v1530 = vadd.f32 %v1496, %v1528
        %s1531 = sld [smem:[#allocation8 + $0x81]]
        %v1532 = vstv %s1531
        %v1533 = vmul.f32 %v1532, %v1511
        %v1534 = vmul.f32 %v1532, %v1512
        %v1535 = vadd.f32 %v1509, %v1533
        %v1536 = vadd.f32 %v1510, %v1534
        %s1537 = sld [smem:[#allocation8 + $0x16]]
        %v1538 = vstv %s1537
        %v1539 = vmul.f32 %v1538, %v1511
        %v1540 = vmul.f32 %v1538, %v1512
        %1543 = vrot.lane.b32.xlu0 %v1539, 127
        %v1544 = vpop.permute.xlu0 %1543
        %1545 = vrot.lane.b32.xlu0 %v1540, 127
        %v1546 = vpop.permute.xlu0 %1545
        %v1549 = vadd.f32 %v1517, %v1544
        %v1550 = vadd.f32 %v1518, %v1546
        %s1551 = sld [smem:[#allocation8 + $0x3a]]
        %v1552 = vstv %s1551
        %v1553 = vmul.f32 %v1552, %v1511
        %v1554 = vmul.f32 %v1552, %v1512
        %1557 = vrot.lane.b32.xlu0 %v1553, 127
        %v1558 = vpop.permute.xlu0 %1557
        %1559 = vrot.lane.b32.xlu0 %v1554, 127
        %v1560 = vpop.permute.xlu0 %1559
        %v1563 = vadd.f32 %v1523, %v1558
        %v1564 = vadd.f32 %v1524, %v1560
        %s1565 = sld [smem:[#allocation8 + $0x5e]]
        %v1566 = vstv %s1565
        %v1567 = vmul.f32 %v1566, %v1511
        %v1568 = vmul.f32 %v1566, %v1512
        %1571 = vrot.lane.b32.xlu0 %v1567, 127
        %v1572 = vpop.permute.xlu0 %1571
        %1573 = vrot.lane.b32.xlu0 %v1568, 127
        %v1574 = vpop.permute.xlu0 %1573
        %v1577 = vadd.f32 %v1529, %v1572
        %v1578 = vadd.f32 %v1530, %v1574
        %s1579 = sld [smem:[#allocation8 + $0x82]]
        %v1580 = vstv %s1579
        %v1581 = vmul.f32 %v1580, %v1511
        %v1582 = vmul.f32 %v1580, %v1512
        %1585 = vrot.lane.b32.xlu0 %v1581, 127
        %v1586 = vpop.permute.xlu0 %1585
        %1587 = vrot.lane.b32.xlu0 %v1582, 127
        %v1588 = vpop.permute.xlu0 %1587
        %v1591 = vadd.f32 %v1535, %v1586
        %v1592 = vadd.f32 %v1536, %v1588
        %s1593 = sld [smem:[#allocation8 + $0x17]]
        %v1594 = vstv %s1593
        %v1595 = vmul.f32 %v1594, %v1511
        %v1596 = vmul.f32 %v1594, %v1512
        %1599 = vrot.lane.b32.xlu0 %v1595, 126
        %v1600 = vpop.permute.xlu0 %1599
        %1601 = vrot.lane.b32.xlu0 %v1596, 126
        %v1602 = vpop.permute.xlu0 %1601
        %v1605 = vadd.f32 %v1549, %v1600
        %v1606 = vadd.f32 %v1550, %v1602
        %s1607 = sld [smem:[#allocation8 + $0x3b]]
        %v1608 = vstv %s1607
        %v1609 = vmul.f32 %v1608, %v1511
        %v1610 = vmul.f32 %v1608, %v1512
        %1613 = vrot.lane.b32.xlu0 %v1609, 126
        %v1614 = vpop.permute.xlu0 %1613
        %1615 = vrot.lane.b32.xlu0 %v1610, 126
        %v1616 = vpop.permute.xlu0 %1615
        %v1619 = vadd.f32 %v1563, %v1614
        %v1620 = vadd.f32 %v1564, %v1616
        %s1621 = sld [smem:[#allocation8 + $0x5f]]
        %v1622 = vstv %s1621
        %v1623 = vmul.f32 %v1622, %v1511
        %v1624 = vmul.f32 %v1622, %v1512
        %1627 = vrot.lane.b32.xlu0 %v1623, 126
        %v1628 = vpop.permute.xlu0 %1627
        %1629 = vrot.lane.b32.xlu0 %v1624, 126
        %v1630 = vpop.permute.xlu0 %1629
        %v1633 = vadd.f32 %v1577, %v1628
        %v1634 = vadd.f32 %v1578, %v1630
        %s1635 = sld [smem:[#allocation8 + $0x83]]
        %v1636 = vstv %s1635
        %v1637 = vmul.f32 %v1636, %v1511
        %v1638 = vmul.f32 %v1636, %v1512
        %1641 = vrot.lane.b32.xlu0 %v1637, 126
        %v1642 = vpop.permute.xlu0 %1641
        %1643 = vrot.lane.b32.xlu0 %v1638, 126
        %v1644 = vpop.permute.xlu0 %1643
        %v1647 = vadd.f32 %v1591, %v1642
        %v1648 = vadd.f32 %v1592, %v1644
        %v1649 = vld [vmem:[%s1372 + $0x2] sm:$0xff]
        %v1650 = vld [vmem:[%s1372 + $0xa] sm:$0xff]
        %s1651 = sld [smem:[#allocation8 + $0x18]]
        %v1652 = vstv %s1651
        %v1653 = vmul.f32 %v1652, %v1649
        %v1654 = vmul.f32 %v1652, %v1650
        %v1655 = vadd.f32 %v1605, %v1653
        %v1656 = vadd.f32 %v1606, %v1654
        %s1657 = sld [smem:[#allocation8 + $0x3c]]
        %v1658 = vstv %s1657
        %v1659 = vmul.f32 %v1658, %v1649
        %v1660 = vmul.f32 %v1658, %v1650
        %v1661 = vadd.f32 %v1619, %v1659
        %v1662 = vadd.f32 %v1620, %v1660
        %s1663 = sld [smem:[#allocation8 + $0x60]]
        %v1664 = vstv %s1663
        %v1665 = vmul.f32 %v1664, %v1649
        %v1666 = vmul.f32 %v1664, %v1650
        %v1667 = vadd.f32 %v1633, %v1665
        %v1668 = vadd.f32 %v1634, %v1666
        %s1669 = sld [smem:[#allocation8 + $0x84]]
        %v1670 = vstv %s1669
        %v1671 = vmul.f32 %v1670, %v1649
        %v1672 = vmul.f32 %v1670, %v1650
        %v1673 = vadd.f32 %v1647, %v1671
        %v1674 = vadd.f32 %v1648, %v1672
        %s1675 = sld [smem:[#allocation8 + $0x19]]
        %v1676 = vstv %s1675
        %v1677 = vmul.f32 %v1676, %v1649
        %v1678 = vmul.f32 %v1676, %v1650
        %1681 = vrot.lane.b32.xlu0 %v1677, 127
        %v1682 = vpop.permute.xlu0 %1681
        %1683 = vrot.lane.b32.xlu0 %v1678, 127
        %v1684 = vpop.permute.xlu0 %1683
        %v1687 = vadd.f32 %v1655, %v1682
        %v1688 = vadd.f32 %v1656, %v1684
        %s1689 = sld [smem:[#allocation8 + $0x3d]]
        %v1690 = vstv %s1689
        %v1691 = vmul.f32 %v1690, %v1649
        %v1692 = vmul.f32 %v1690, %v1650
        %1695 = vrot.lane.b32.xlu0 %v1691, 127
        %v1696 = vpop.permute.xlu0 %1695
        %1697 = vrot.lane.b32.xlu0 %v1692, 127
        %v1698 = vpop.permute.xlu0 %1697
        %v1701 = vadd.f32 %v1661, %v1696
        %v1702 = vadd.f32 %v1662, %v1698
        %s1703 = sld [smem:[#allocation8 + $0x61]]
        %v1704 = vstv %s1703
        %v1705 = vmul.f32 %v1704, %v1649
        %v1706 = vmul.f32 %v1704, %v1650
        %1709 = vrot.lane.b32.xlu0 %v1705, 127
        %v1710 = vpop.permute.xlu0 %1709
        %1711 = vrot.lane.b32.xlu0 %v1706, 127
        %v1712 = vpop.permute.xlu0 %1711
        %v1715 = vadd.f32 %v1667, %v1710
        %v1716 = vadd.f32 %v1668, %v1712
        %s1717 = sld [smem:[#allocation8 + $0x85]]
        %v1718 = vstv %s1717
        %v1719 = vmul.f32 %v1718, %v1649
        %v1720 = vmul.f32 %v1718, %v1650
        %1723 = vrot.lane.b32.xlu0 %v1719, 127
        %v1724 = vpop.permute.xlu0 %1723
        %1725 = vrot.lane.b32.xlu0 %v1720, 127
        %v1726 = vpop.permute.xlu0 %1725
        %v1729 = vadd.f32 %v1673, %v1724
        %v1730 = vadd.f32 %v1674, %v1726
        %s1731 = sld [smem:[#allocation8 + $0x1a]]
        %v1732 = vstv %s1731
        %v1733 = vmul.f32 %v1732, %v1649
        %v1734 = vmul.f32 %v1732, %v1650
        %1737 = vrot.lane.b32.xlu0 %v1733, 126
        %v1738 = vpop.permute.xlu0 %1737
        %1739 = vrot.lane.b32.xlu0 %v1734, 126
        %v1740 = vpop.permute.xlu0 %1739
        %v1743 = vadd.f32 %v1687, %v1738
        %v1744 = vadd.f32 %v1688, %v1740
        %s1745 = sld [smem:[#allocation8 + $0x3e]]
        %v1746 = vstv %s1745
        %v1747 = vmul.f32 %v1746, %v1649
        %v1748 = vmul.f32 %v1746, %v1650
        %1751 = vrot.lane.b32.xlu0 %v1747, 126
        %v1752 = vpop.permute.xlu0 %1751
        %1753 = vrot.lane.b32.xlu0 %v1748, 126
        %v1754 = vpop.permute.xlu0 %1753
        %v1757 = vadd.f32 %v1701, %v1752
        %v1758 = vadd.f32 %v1702, %v1754
        %s1759 = sld [smem:[#allocation8 + $0x62]]
        %v1760 = vstv %s1759
        %v1761 = vmul.f32 %v1760, %v1649
        %v1762 = vmul.f32 %v1760, %v1650
        %1765 = vrot.lane.b32.xlu0 %v1761, 126
        %v1766 = vpop.permute.xlu0 %1765
        %1767 = vrot.lane.b32.xlu0 %v1762, 126
        %v1768 = vpop.permute.xlu0 %1767
        %v1771 = vadd.f32 %v1715, %v1766
        %v1772 = vadd.f32 %v1716, %v1768
        %s1773 = sld [smem:[#allocation8 + $0x86]]
        %v1774 = vstv %s1773
        %v1775 = vmul.f32 %v1774, %v1649
        %v1776 = vmul.f32 %v1774, %v1650
        %1779 = vrot.lane.b32.xlu0 %v1775, 126
        %v1780 = vpop.permute.xlu0 %1779
        %1781 = vrot.lane.b32.xlu0 %v1776, 126
        %v1782 = vpop.permute.xlu0 %1781
        %v1785 = vadd.f32 %v1729, %v1780
        %v1786 = vadd.f32 %v1730, %v1782
        %s1787 = scalar_lea.vmem [#allocation2], 72
        %v1788 = vld [vmem:[%s1787] sm:$0xff]
        %v1789 = vld [vmem:[%s1787 + $0x8] sm:$0xff]
        %s1790 = sld [smem:[#allocation8 + $0x1b]]
        %v1791 = vstv %s1790
        %v1792 = vmul.f32 %v1791, %v1788
        %v1793 = vmul.f32 %v1791, %v1789
        %v1794 = vadd.f32 %v1743, %v1792
        %v1795 = vadd.f32 %v1744, %v1793
        %s1796 = sld [smem:[#allocation8 + $0x3f]]
        %v1797 = vstv %s1796
        %v1798 = vmul.f32 %v1797, %v1788
        %v1799 = vmul.f32 %v1797, %v1789
        %v1800 = vadd.f32 %v1757, %v1798
        %v1801 = vadd.f32 %v1758, %v1799
        %s1802 = sld [smem:[#allocation8 + $0x63]]
        %v1803 = vstv %s1802
        %v1804 = vmul.f32 %v1803, %v1788
        %v1805 = vmul.f32 %v1803, %v1789
        %v1806 = vadd.f32 %v1771, %v1804
        %v1807 = vadd.f32 %v1772, %v1805
        %s1808 = sld [smem:[#allocation8 + $0x87]]
        %v1809 = vstv %s1808
        %v1810 = vmul.f32 %v1809, %v1788
        %v1811 = vmul.f32 %v1809, %v1789
        %v1812 = vadd.f32 %v1785, %v1810
        %v1813 = vadd.f32 %v1786, %v1811
        %s1814 = sld [smem:[#allocation8 + $0x1c]]
        %v1815 = vstv %s1814
        %v1816 = vmul.f32 %v1815, %v1788
        %v1817 = vmul.f32 %v1815, %v1789
        %1820 = vrot.lane.b32.xlu0 %v1816, 127
        %v1821 = vpop.permute.xlu0 %1820
        %1822 = vrot.lane.b32.xlu0 %v1817, 127
        %v1823 = vpop.permute.xlu0 %1822
        %v1826 = vadd.f32 %v1794, %v1821
        %v1827 = vadd.f32 %v1795, %v1823
        %s1828 = sld [smem:[#allocation8 + $0x40]]
        %v1829 = vstv %s1828
        %v1830 = vmul.f32 %v1829, %v1788
        %v1831 = vmul.f32 %v1829, %v1789
        %1834 = vrot.lane.b32.xlu0 %v1830, 127
        %v1835 = vpop.permute.xlu0 %1834
        %1836 = vrot.lane.b32.xlu0 %v1831, 127
        %v1837 = vpop.permute.xlu0 %1836
        %v1840 = vadd.f32 %v1800, %v1835
        %v1841 = vadd.f32 %v1801, %v1837
        %s1842 = sld [smem:[#allocation8 + $0x64]]
        %v1843 = vstv %s1842
        %v1844 = vmul.f32 %v1843, %v1788
        %v1845 = vmul.f32 %v1843, %v1789
        %1848 = vrot.lane.b32.xlu0 %v1844, 127
        %v1849 = vpop.permute.xlu0 %1848
        %1850 = vrot.lane.b32.xlu0 %v1845, 127
        %v1851 = vpop.permute.xlu0 %1850
        %v1854 = vadd.f32 %v1806, %v1849
        %v1855 = vadd.f32 %v1807, %v1851
        %s1856 = sld [smem:[#allocation8 + $0x88]]
        %v1857 = vstv %s1856
        %v1858 = vmul.f32 %v1857, %v1788
        %v1859 = vmul.f32 %v1857, %v1789
        %1862 = vrot.lane.b32.xlu0 %v1858, 127
        %v1863 = vpop.permute.xlu0 %1862
        %1864 = vrot.lane.b32.xlu0 %v1859, 127
        %v1865 = vpop.permute.xlu0 %1864
        %v1868 = vadd.f32 %v1812, %v1863
        %v1869 = vadd.f32 %v1813, %v1865
        %s1870 = sld [smem:[#allocation8 + $0x1d]]
        %v1871 = vstv %s1870
        %v1872 = vmul.f32 %v1871, %v1788
        %v1873 = vmul.f32 %v1871, %v1789
        %1876 = vrot.lane.b32.xlu0 %v1872, 126
        %v1877 = vpop.permute.xlu0 %1876
        %1878 = vrot.lane.b32.xlu0 %v1873, 126
        %v1879 = vpop.permute.xlu0 %1878
        %v1882 = vadd.f32 %v1826, %v1877
        %v1883 = vadd.f32 %v1827, %v1879
        %s1884 = sld [smem:[#allocation8 + $0x41]]
        %v1885 = vstv %s1884
        %v1886 = vmul.f32 %v1885, %v1788
        %v1887 = vmul.f32 %v1885, %v1789
        %1890 = vrot.lane.b32.xlu0 %v1886, 126
        %v1891 = vpop.permute.xlu0 %1890
        %1892 = vrot.lane.b32.xlu0 %v1887, 126
        %v1893 = vpop.permute.xlu0 %1892
        %v1896 = vadd.f32 %v1840, %v1891
        %v1897 = vadd.f32 %v1841, %v1893
        %s1898 = sld [smem:[#allocation8 + $0x65]]
        %v1899 = vstv %s1898
        %v1900 = vmul.f32 %v1899, %v1788
        %v1901 = vmul.f32 %v1899, %v1789
        %1904 = vrot.lane.b32.xlu0 %v1900, 126
        %v1905 = vpop.permute.xlu0 %1904
        %1906 = vrot.lane.b32.xlu0 %v1901, 126
        %v1907 = vpop.permute.xlu0 %1906
        %v1910 = vadd.f32 %v1854, %v1905
        %v1911 = vadd.f32 %v1855, %v1907
        %s1912 = sld [smem:[#allocation8 + $0x89]]
        %v1913 = vstv %s1912
        %v1914 = vmul.f32 %v1913, %v1788
        %v1915 = vmul.f32 %v1913, %v1789
        %1918 = vrot.lane.b32.xlu0 %v1914, 126
        %v1919 = vpop.permute.xlu0 %1918
        %1920 = vrot.lane.b32.xlu0 %v1915, 126
        %v1921 = vpop.permute.xlu0 %1920
        %v1924 = vadd.f32 %v1868, %v1919
        %v1925 = vadd.f32 %v1869, %v1921
        %v1926 = vld [vmem:[%s1787 + $0x1] sm:$0xff]
        %v1927 = vld [vmem:[%s1787 + $0x9] sm:$0xff]
        %s1928 = sld [smem:[#allocation8 + $0x1e]]
        %v1929 = vstv %s1928
        %v1930 = vmul.f32 %v1929, %v1926
        %v1931 = vmul.f32 %v1929, %v1927
        %v1932 = vadd.f32 %v1882, %v1930
        %v1933 = vadd.f32 %v1883, %v1931
        %s1934 = sld [smem:[#allocation8 + $0x42]]
        %v1935 = vstv %s1934
        %v1936 = vmul.f32 %v1935, %v1926
        %v1937 = vmul.f32 %v1935, %v1927
        %v1938 = vadd.f32 %v1896, %v1936
        %v1939 = vadd.f32 %v1897, %v1937
        %s1940 = sld [smem:[#allocation8 + $0x66]]
        %v1941 = vstv %s1940
        %v1942 = vmul.f32 %v1941, %v1926
        %v1943 = vmul.f32 %v1941, %v1927
        %v1944 = vadd.f32 %v1910, %v1942
        %v1945 = vadd.f32 %v1911, %v1943
        %s1946 = sld [smem:[#allocation8 + $0x8a]]
        %v1947 = vstv %s1946
        %v1948 = vmul.f32 %v1947, %v1926
        %v1949 = vmul.f32 %v1947, %v1927
        %v1950 = vadd.f32 %v1924, %v1948
        %v1951 = vadd.f32 %v1925, %v1949
        %s1952 = sld [smem:[#allocation8 + $0x1f]]
        %v1953 = vstv %s1952
        %v1954 = vmul.f32 %v1953, %v1926
        %v1955 = vmul.f32 %v1953, %v1927
        %1958 = vrot.lane.b32.xlu0 %v1954, 127
        %v1959 = vpop.permute.xlu0 %1958
        %1960 = vrot.lane.b32.xlu0 %v1955, 127
        %v1961 = vpop.permute.xlu0 %1960
        %v1964 = vadd.f32 %v1932, %v1959
        %v1965 = vadd.f32 %v1933, %v1961
        %s1966 = sld [smem:[#allocation8 + $0x43]]
        %v1967 = vstv %s1966
        %v1968 = vmul.f32 %v1967, %v1926
        %v1969 = vmul.f32 %v1967, %v1927
        %1972 = vrot.lane.b32.xlu0 %v1968, 127
        %v1973 = vpop.permute.xlu0 %1972
        %1974 = vrot.lane.b32.xlu0 %v1969, 127
        %v1975 = vpop.permute.xlu0 %1974
        %v1978 = vadd.f32 %v1938, %v1973
        %v1979 = vadd.f32 %v1939, %v1975
        %s1980 = sld [smem:[#allocation8 + $0x67]]
        %v1981 = vstv %s1980
        %v1982 = vmul.f32 %v1981, %v1926
        %v1983 = vmul.f32 %v1981, %v1927
        %1986 = vrot.lane.b32.xlu0 %v1982, 127
        %v1987 = vpop.permute.xlu0 %1986
        %1988 = vrot.lane.b32.xlu0 %v1983, 127
        %v1989 = vpop.permute.xlu0 %1988
        %v1992 = vadd.f32 %v1944, %v1987
        %v1993 = vadd.f32 %v1945, %v1989
        %s1994 = sld [smem:[#allocation8 + $0x8b]]
        %v1995 = vstv %s1994
        %v1996 = vmul.f32 %v1995, %v1926
        %v1997 = vmul.f32 %v1995, %v1927
        %2000 = vrot.lane.b32.xlu0 %v1996, 127
        %v2001 = vpop.permute.xlu0 %2000
        %2002 = vrot.lane.b32.xlu0 %v1997, 127
        %v2003 = vpop.permute.xlu0 %2002
        %v2006 = vadd.f32 %v1950, %v2001
        %v2007 = vadd.f32 %v1951, %v2003
        %s2008 = sld [smem:[#allocation8 + $0x20]]
        %v2009 = vstv %s2008
        %v2010 = vmul.f32 %v2009, %v1926
        %v2011 = vmul.f32 %v2009, %v1927
        %2014 = vrot.lane.b32.xlu0 %v2010, 126
        %v2015 = vpop.permute.xlu0 %2014
        %2016 = vrot.lane.b32.xlu0 %v2011, 126
        %v2017 = vpop.permute.xlu0 %2016
        %v2020 = vadd.f32 %v1964, %v2015
        %v2021 = vadd.f32 %v1965, %v2017
        %s2022 = sld [smem:[#allocation8 + $0x44]]
        %v2023 = vstv %s2022
        %v2024 = vmul.f32 %v2023, %v1926
        %v2025 = vmul.f32 %v2023, %v1927
        %2028 = vrot.lane.b32.xlu0 %v2024, 126
        %v2029 = vpop.permute.xlu0 %2028
        %2030 = vrot.lane.b32.xlu0 %v2025, 126
        %v2031 = vpop.permute.xlu0 %2030
        %v2034 = vadd.f32 %v1978, %v2029
        %v2035 = vadd.f32 %v1979, %v2031
        %s2036 = sld [smem:[#allocation8 + $0x68]]
        %v2037 = vstv %s2036
        %v2038 = vmul.f32 %v2037, %v1926
        %v2039 = vmul.f32 %v2037, %v1927
        %2042 = vrot.lane.b32.xlu0 %v2038, 126
        %v2043 = vpop.permute.xlu0 %2042
        %2044 = vrot.lane.b32.xlu0 %v2039, 126
        %v2045 = vpop.permute.xlu0 %2044
        %v2048 = vadd.f32 %v1992, %v2043
        %v2049 = vadd.f32 %v1993, %v2045
        %s2050 = sld [smem:[#allocation8 + $0x8c]]
        %v2051 = vstv %s2050
        %v2052 = vmul.f32 %v2051, %v1926
        %v2053 = vmul.f32 %v2051, %v1927
        %2056 = vrot.lane.b32.xlu0 %v2052, 126
        %v2057 = vpop.permute.xlu0 %2056
        %2058 = vrot.lane.b32.xlu0 %v2053, 126
        %v2059 = vpop.permute.xlu0 %2058
        %v2062 = vadd.f32 %v2006, %v2057
        %v2063 = vadd.f32 %v2007, %v2059
        %v2064 = vld [vmem:[%s1787 + $0x2] sm:$0xff]
        %v2065 = vld [vmem:[%s1787 + $0xa] sm:$0xff]
        %s2066 = sld [smem:[#allocation8 + $0x21]]
        %v2067 = vstv %s2066
        %v2068 = vmul.f32 %v2067, %v2064
        %v2069 = vmul.f32 %v2067, %v2065
        %v2070 = vadd.f32 %v2020, %v2068
        %v2071 = vadd.f32 %v2021, %v2069
        %s2072 = sld [smem:[#allocation8 + $0x45]]
        %v2073 = vstv %s2072
        %v2074 = vmul.f32 %v2073, %v2064
        %v2075 = vmul.f32 %v2073, %v2065
        %v2076 = vadd.f32 %v2034, %v2074
        %v2077 = vadd.f32 %v2035, %v2075
        %s2078 = sld [smem:[#allocation8 + $0x69]]
        %v2079 = vstv %s2078
        %v2080 = vmul.f32 %v2079, %v2064
        %v2081 = vmul.f32 %v2079, %v2065
        %v2082 = vadd.f32 %v2048, %v2080
        %v2083 = vadd.f32 %v2049, %v2081
        %s2084 = sld [smem:[#allocation8 + $0x8d]]
        %v2085 = vstv %s2084
        %v2086 = vmul.f32 %v2085, %v2064
        %v2087 = vmul.f32 %v2085, %v2065
        %v2088 = vadd.f32 %v2062, %v2086
        %v2089 = vadd.f32 %v2063, %v2087
        %s2090 = sld [smem:[#allocation8 + $0x22]]
        %v2091 = vstv %s2090
        %v2092 = vmul.f32 %v2091, %v2064
        %v2093 = vmul.f32 %v2091, %v2065
        %2096 = vrot.lane.b32.xlu0 %v2092, 127
        %v2097 = vpop.permute.xlu0 %2096
        %2098 = vrot.lane.b32.xlu0 %v2093, 127
        %v2099 = vpop.permute.xlu0 %2098
        %v2102 = vadd.f32 %v2070, %v2097
        %v2103 = vadd.f32 %v2071, %v2099
        %s2104 = sld [smem:[#allocation8 + $0x46]]
        %v2105 = vstv %s2104
        %v2106 = vmul.f32 %v2105, %v2064
        %v2107 = vmul.f32 %v2105, %v2065
        %2110 = vrot.lane.b32.xlu0 %v2106, 127
        %v2111 = vpop.permute.xlu0 %2110
        %2112 = vrot.lane.b32.xlu0 %v2107, 127
        %v2113 = vpop.permute.xlu0 %2112
        %v2116 = vadd.f32 %v2076, %v2111
        %v2117 = vadd.f32 %v2077, %v2113
        %s2118 = sld [smem:[#allocation8 + $0x6a]]
        %v2119 = vstv %s2118
        %v2120 = vmul.f32 %v2119, %v2064
        %v2121 = vmul.f32 %v2119, %v2065
        %2124 = vrot.lane.b32.xlu0 %v2120, 127
        %v2125 = vpop.permute.xlu0 %2124
        %2126 = vrot.lane.b32.xlu0 %v2121, 127
        %v2127 = vpop.permute.xlu0 %2126
        %v2130 = vadd.f32 %v2082, %v2125
        %v2131 = vadd.f32 %v2083, %v2127
        %s2132 = sld [smem:[#allocation8 + $0x8e]]
        %v2133 = vstv %s2132
        %v2134 = vmul.f32 %v2133, %v2064
        %v2135 = vmul.f32 %v2133, %v2065
        %2138 = vrot.lane.b32.xlu0 %v2134, 127
        %v2139 = vpop.permute.xlu0 %2138
        %2140 = vrot.lane.b32.xlu0 %v2135, 127
        %v2141 = vpop.permute.xlu0 %2140
        %v2144 = vadd.f32 %v2088, %v2139
        %v2145 = vadd.f32 %v2089, %v2141
        %s2146 = sld [smem:[#allocation8 + $0x23]]
        %v2147 = vstv %s2146
        %v2148 = vmul.f32 %v2147, %v2064
        %v2149 = vmul.f32 %v2147, %v2065
        %2152 = vrot.lane.b32.xlu0 %v2148, 126
        %v2153 = vpop.permute.xlu0 %2152
        %2154 = vrot.lane.b32.xlu0 %v2149, 126
        %v2155 = vpop.permute.xlu0 %2154
        %v2158 = vadd.f32 %v2102, %v2153
        %v2159 = vadd.f32 %v2103, %v2155
        %s2160 = sld [smem:[#allocation8 + $0x47]]
        %v2161 = vstv %s2160
        %v2162 = vmul.f32 %v2161, %v2064
        %v2163 = vmul.f32 %v2161, %v2065
        %2166 = vrot.lane.b32.xlu0 %v2162, 126
        %v2167 = vpop.permute.xlu0 %2166
        %2168 = vrot.lane.b32.xlu0 %v2163, 126
        %v2169 = vpop.permute.xlu0 %2168
        %v2172 = vadd.f32 %v2116, %v2167
        %v2173 = vadd.f32 %v2117, %v2169
        %s2174 = sld [smem:[#allocation8 + $0x6b]]
        %v2175 = vstv %s2174
        %v2176 = vmul.f32 %v2175, %v2064
        %v2177 = vmul.f32 %v2175, %v2065
        %2180 = vrot.lane.b32.xlu0 %v2176, 126
        %v2181 = vpop.permute.xlu0 %2180
        %2182 = vrot.lane.b32.xlu0 %v2177, 126
        %v2183 = vpop.permute.xlu0 %2182
        %v2186 = vadd.f32 %v2130, %v2181
        %v2187 = vadd.f32 %v2131, %v2183
        %s2188 = sld [smem:[#allocation8 + $0x8f]]
        %v2189 = vstv %s2188
        %v2190 = vmul.f32 %v2189, %v2064
        %v2191 = vmul.f32 %v2189, %v2065
        %2194 = vrot.lane.b32.xlu0 %v2190, 126
        %v2195 = vpop.permute.xlu0 %2194
        %2196 = vrot.lane.b32.xlu0 %v2191, 126
        %v2197 = vpop.permute.xlu0 %2196
        %v2200 = vadd.f32 %v2144, %v2195
        %v2201 = vadd.f32 %v2145, %v2197
        %s2202 = sld [smem:[#allocation9]]
        %v2203 = vstv %s2202
        %v2204 = vadd.f32 %v2158, %v2203
        %v2205 = vadd.f32 %v2159, %v2203
        %s2206 = sld [smem:[#allocation9 + $0x1]]
        %v2207 = vstv %s2206
        %v2208 = vadd.f32 %v2172, %v2207
        %v2209 = vadd.f32 %v2173, %v2207
        %s2210 = sld [smem:[#allocation9 + $0x2]]
        %v2211 = vstv %s2210
        %v2212 = vadd.f32 %v2186, %v2211
        %v2213 = vadd.f32 %v2187, %v2211
        %s2214 = sld [smem:[#allocation9 + $0x3]]
        %v2215 = vstv %s2214
        %v2216 = vadd.f32 %v2200, %v2215
        %v2217 = vadd.f32 %v2201, %v2215
        %v2218 = vmax.f32 %v2204, 0.0
        %v2219 = vmax.f32 %v2205, 0.0
        %2222 = vrot.lane.b32.xlu0 %v2218, 1
        %v2223 = vpop.permute.xlu0 %2222
        %2224 = vrot.lane.b32.xlu0 %v2219, 1
        %v2225 = vpop.permute.xlu0 %2224
        %2228 = vst.msk [vmem:[#allocation3 + $0x1] sm:$0xff] %vm337, %v2223
        %2229 = vst.msk [vmem:[#allocation3 + $0x9] sm:$0xff] %vm337, %v2225
        %v2230 = vmax.f32 %v2208, 0.0
        %v2231 = vmax.f32 %v2209, 0.0
        %2234 = vrot.lane.b32.xlu0 %v2230, 1
        %v2235 = vpop.permute.xlu0 %2234
        %2236 = vrot.lane.b32.xlu0 %v2231, 1
        %v2237 = vpop.permute.xlu0 %2236
        %s2240 = scalar_lea.vmem [#allocation3], 24
        %2241 = vst.msk [vmem:[%s2240 + $0x1] sm:$0xff] %vm337, %v2235
        %2242 = vst.msk [vmem:[%s2240 + $0x9] sm:$0xff] %vm337, %v2237
        %v2243 = vmax.f32 %v2212, 0.0
        %v2244 = vmax.f32 %v2213, 0.0
        %2247 = vrot.lane.b32.xlu0 %v2243, 1
        %v2248 = vpop.permute.xlu0 %2247
        %2249 = vrot.lane.b32.xlu0 %v2244, 1
        %v2250 = vpop.permute.xlu0 %2249
        %s2253 = scalar_lea.vmem [#allocation3], 48
        %2254 = vst.msk [vmem:[%s2253 + $0x1] sm:$0xff] %vm337, %v2248
        %2255 = vst.msk [vmem:[%s2253 + $0x9] sm:$0xff] %vm337, %v2250
        %v2256 = vmax.f32 %v2216, 0.0
        %v2257 = vmax.f32 %v2217, 0.0
        %2260 = vrot.lane.b32.xlu0 %v2256, 1
        %v2261 = vpop.permute.xlu0 %2260
        %2262 = vrot.lane.b32.xlu0 %v2257, 1
        %v2263 = vpop.permute.xlu0 %2262
        %s2266 = scalar_lea.vmem [#allocation3], 72
        %2267 = vst.msk [vmem:[%s2266 + $0x1] sm:$0xff] %vm337, %v2261
        %2268 = vst.msk [vmem:[%s2266 + $0x9] sm:$0xff] %vm337, %v2263
        %v2269 = vld [vmem:[#allocation3 + $0x2] sm:$0x1]
        %v2270 = vld [vmem:[#allocation3 + $0x1a] sm:$0x1]
        %v2271 = vld [vmem:[#allocation3 + $0x32] sm:$0x1]
        %v2272 = vld [vmem:[#allocation3 + $0x4a] sm:$0x1]
        %2273 = vst.msk [vmem:[#allocation3] sm:$0x1] %vm366, %v2269
        %2274 = vst.msk [vmem:[#allocation3 + $0x18] sm:$0x1] %vm366, %v2270
        %2275 = vst.msk [vmem:[#allocation3 + $0x30] sm:$0x1] %vm366, %v2271
        %2276 = vst.msk [vmem:[#allocation3 + $0x48] sm:$0x1] %vm366, %v2272
        %v2277 = vld [vmem:[#allocation3 + $0xf] sm:$0x1]
        %v2278 = vld [vmem:[#allocation3 + $0x27] sm:$0x1]
        %v2279 = vld [vmem:[#allocation3 + $0x3f] sm:$0x1]
        %v2280 = vld [vmem:[#allocation3 + $0x57] sm:$0x1]
        %2281 = vst.msk [vmem:[#allocation3 + $0x11] sm:$0x1] %vm366, %v2277
        %2282 = vst.msk [vmem:[#allocation3 + $0x29] sm:$0x1] %vm366, %v2278
        %2283 = vst.msk [vmem:[#allocation3 + $0x41] sm:$0x1] %vm366, %v2279
        %2284 = vst.msk [vmem:[#allocation3 + $0x59] sm:$0x1] %vm366, %v2280
        %v2285 = vld [vmem:[#allocation3] sm:$0xff]
        %v2286 = vld [vmem:[#allocation3 + $0x8] sm:$0xff]
        %v2287 = vld [vmem:[#allocation3 + $0x10] sm:$0x3]
        %v2288 = vld [vmem:[#allocation3 + $0x18] sm:$0xff]
        %v2289 = vld [vmem:[#allocation3 + $0x20] sm:$0xff]
        %v2290 = vld [vmem:[#allocation3 + $0x28] sm:$0x3]
        %v2291 = vld [vmem:[#allocation3 + $0x30] sm:$0xff]
        %v2292 = vld [vmem:[#allocation3 + $0x38] sm:$0xff]
        %v2293 = vld [vmem:[#allocation3 + $0x40] sm:$0x3]
        %v2294 = vld [vmem:[#allocation3 + $0x48] sm:$0xff]
        %v2295 = vld [vmem:[#allocation3 + $0x50] sm:$0xff]
        %v2296 = vld [vmem:[#allocation3 + $0x58] sm:$0x3]
        %2309 = vrot.lane.b32.xlu0 %v2285, 126
        %v2310 = vpop.permute.xlu0 %2309
        %2311 = vrot.lane.b32.xlu0 %v2286, 126
        %v2312 = vpop.permute.xlu0 %2311
        %2313 = vrot.lane.b32.xlu0 %v2287, 126
        %v2314 = vpop.permute.xlu0 %2313
        %2315 = vrot.lane.b32.xlu0 %v2288, 126
        %v2316 = vpop.permute.xlu0 %2315
        %2317 = vrot.lane.b32.xlu0 %v2289, 126
        %v2318 = vpop.permute.xlu0 %2317
        %2319 = vrot.lane.b32.xlu0 %v2290, 126
        %v2320 = vpop.permute.xlu0 %2319
        %2321 = vrot.lane.b32.xlu0 %v2291, 126
        %v2322 = vpop.permute.xlu0 %2321
        %2323 = vrot.lane.b32.xlu0 %v2292, 126
        %v2324 = vpop.permute.xlu0 %2323
        %2325 = vrot.lane.b32.xlu0 %v2293, 126
        %v2326 = vpop.permute.xlu0 %2325
        %2327 = vrot.lane.b32.xlu0 %v2294, 126
        %v2328 = vpop.permute.xlu0 %2327
        %2329 = vrot.lane.b32.xlu0 %v2295, 126
        %v2330 = vpop.permute.xlu0 %2329
        %2331 = vrot.lane.b32.xlu0 %v2296, 126
        %v2332 = vpop.permute.xlu0 %2331
        %2345 = vst.msk [vmem:[#allocation3] sm:$0xff] %vm455, %v2310
        %2346 = vst.msk [vmem:[#allocation3 + $0x8] sm:$0xff] %vm455, %v2312
        %2347 = vst.msk [vmem:[#allocation3 + $0x10] sm:$0x3] %vm458, %v2314
        %2348 = vst.msk [vmem:[#allocation3 + $0x18] sm:$0xff] %vm455, %v2316
        %2349 = vst.msk [vmem:[#allocation3 + $0x20] sm:$0xff] %vm455, %v2318
        %2350 = vst.msk [vmem:[#allocation3 + $0x28] sm:$0x3] %vm458, %v2320
        %2351 = vst.msk [vmem:[#allocation3 + $0x30] sm:$0xff] %vm455, %v2322
        %2352 = vst.msk [vmem:[#allocation3 + $0x38] sm:$0xff] %vm455, %v2324
        %2353 = vst.msk [vmem:[#allocation3 + $0x40] sm:$0x3] %vm458, %v2326
        %2354 = vst.msk [vmem:[#allocation3 + $0x48] sm:$0xff] %vm455, %v2328
        %2355 = vst.msk [vmem:[#allocation3 + $0x50] sm:$0xff] %vm455, %v2330
        %2356 = vst.msk [vmem:[#allocation3 + $0x58] sm:$0x3] %vm458, %v2332
        %v2357 = vld [vmem:[#allocation3] sm:$0xff]
        %v2358 = vld [vmem:[#allocation3 + $0x8] sm:$0xff]
        %v2359 = vld [vmem:[#allocation3 + $0x10] sm:$0x3]
        %v2360 = vld [vmem:[#allocation3 + $0x18] sm:$0xff]
        %v2361 = vld [vmem:[#allocation3 + $0x20] sm:$0xff]
        %v2362 = vld [vmem:[#allocation3 + $0x28] sm:$0x3]
        %v2363 = vld [vmem:[#allocation3 + $0x30] sm:$0xff]
        %v2364 = vld [vmem:[#allocation3 + $0x38] sm:$0xff]
        %v2365 = vld [vmem:[#allocation3 + $0x40] sm:$0x3]
        %v2366 = vld [vmem:[#allocation3 + $0x48] sm:$0xff]
        %v2367 = vld [vmem:[#allocation3 + $0x50] sm:$0xff]
        %v2368 = vld [vmem:[#allocation3 + $0x58] sm:$0x3]
        %2381 = vrot.lane.b32.xlu0 %v2357, 2
        %v2382 = vpop.permute.xlu0 %2381
        %2383 = vrot.lane.b32.xlu0 %v2358, 2
        %v2384 = vpop.permute.xlu0 %2383
        %2385 = vrot.lane.b32.xlu0 %v2359, 2
        %v2386 = vpop.permute.xlu0 %2385
        %2387 = vrot.lane.b32.xlu0 %v2360, 2
        %v2388 = vpop.permute.xlu0 %2387
        %2389 = vrot.lane.b32.xlu0 %v2361, 2
        %v2390 = vpop.permute.xlu0 %2389
        %2391 = vrot.lane.b32.xlu0 %v2362, 2
        %v2392 = vpop.permute.xlu0 %2391
        %2393 = vrot.lane.b32.xlu0 %v2363, 2
        %v2394 = vpop.permute.xlu0 %2393
        %2395 = vrot.lane.b32.xlu0 %v2364, 2
        %v2396 = vpop.permute.xlu0 %2395
        %2397 = vrot.lane.b32.xlu0 %v2365, 2
        %v2398 = vpop.permute.xlu0 %2397
        %2399 = vrot.lane.b32.xlu0 %v2366, 2
        %v2400 = vpop.permute.xlu0 %2399
        %2401 = vrot.lane.b32.xlu0 %v2367, 2
        %v2402 = vpop.permute.xlu0 %2401
        %2403 = vrot.lane.b32.xlu0 %v2368, 2
        %v2404 = vpop.permute.xlu0 %2403
        %2417 = vst.msk [vmem:[#allocation3] sm:$0xff] %vm529, %v2382
        %2418 = vst.msk [vmem:[#allocation3 + $0x8] sm:$0xff] %vm529, %v2384
        %2419 = vst.msk [vmem:[#allocation3 + $0x10] sm:$0x3] %vm532, %v2386
        %2420 = vst.msk [vmem:[#allocation3 + $0x18] sm:$0xff] %vm529, %v2388
        %2421 = vst.msk [vmem:[#allocation3 + $0x20] sm:$0xff] %vm529, %v2390
        %2422 = vst.msk [vmem:[#allocation3 + $0x28] sm:$0x3] %vm532, %v2392
        %2423 = vst.msk [vmem:[#allocation3 + $0x30] sm:$0xff] %vm529, %v2394
        %2424 = vst.msk [vmem:[#allocation3 + $0x38] sm:$0xff] %vm529, %v2396
        %2425 = vst.msk [vmem:[#allocation3 + $0x40] sm:$0x3] %vm532, %v2398
        %2426 = vst.msk [vmem:[#allocation3 + $0x48] sm:$0xff] %vm529, %v2400
        %2427 = vst.msk [vmem:[#allocation3 + $0x50] sm:$0xff] %vm529, %v2402
        %2428 = vst.msk [vmem:[#allocation3 + $0x58] sm:$0x3] %vm532, %v2404
        %v2429 = vld [vmem:[#allocation3] sm:$0xff]
        %v2430 = vld [vmem:[#allocation3 + $0x8] sm:$0xff]
        %s2431 = sld [smem:[#allocation11]]
        %v2432 = vstv %s2431
        %v2433 = vmul.f32 %v2432, %v2429
        %v2434 = vmul.f32 %v2432, %v2430
        %v2435 = vadd.f32 %v2433, 0.0
        %v2436 = vadd.f32 %v2434, 0.0
        %s2437 = sld [smem:[#allocation11 + $0x24]]
        %v2438 = vstv %s2437
        %v2439 = vmul.f32 %v2438, %v2429
        %v2440 = vmul.f32 %v2438, %v2430
        %v2441 = vadd.f32 %v2439, 0.0
        %v2442 = vadd.f32 %v2440, 0.0
        %s2443 = sld [smem:[#allocation11 + $0x48]]
        %v2444 = vstv %s2443
        %v2445 = vmul.f32 %v2444, %v2429
        %v2446 = vmul.f32 %v2444, %v2430
        %v2447 = vadd.f32 %v2445, 0.0
        %v2448 = vadd.f32 %v2446, 0.0
        %s2449 = sld [smem:[#allocation11 + $0x6c]]
        %v2450 = vstv %s2449
        %v2451 = vmul.f32 %v2450, %v2429
        %v2452 = vmul.f32 %v2450, %v2430
        %v2453 = vadd.f32 %v2451, 0.0
        %v2454 = vadd.f32 %v2452, 0.0
        %s2455 = sld [smem:[#allocation11 + $0x1]]
        %v2456 = vstv %s2455
        %v2457 = vmul.f32 %v2456, %v2429
        %v2458 = vmul.f32 %v2456, %v2430
        %2461 = vrot.lane.b32.xlu0 %v2457, 127
        %v2462 = vpop.permute.xlu0 %2461
        %2463 = vrot.lane.b32.xlu0 %v2458, 127
        %v2464 = vpop.permute.xlu0 %2463
        %v2467 = vadd.f32 %v2435, %v2462
        %v2468 = vadd.f32 %v2436, %v2464
        %s2469 = sld [smem:[#allocation11 + $0x25]]
        %v2470 = vstv %s2469
        %v2471 = vmul.f32 %v2470, %v2429
        %v2472 = vmul.f32 %v2470, %v2430
        %2475 = vrot.lane.b32.xlu0 %v2471, 127
        %v2476 = vpop.permute.xlu0 %2475
        %2477 = vrot.lane.b32.xlu0 %v2472, 127
        %v2478 = vpop.permute.xlu0 %2477
        %v2481 = vadd.f32 %v2441, %v2476
        %v2482 = vadd.f32 %v2442, %v2478
        %s2483 = sld [smem:[#allocation11 + $0x49]]
        %v2484 = vstv %s2483
        %v2485 = vmul.f32 %v2484, %v2429
        %v2486 = vmul.f32 %v2484, %v2430
        %2489 = vrot.lane.b32.xlu0 %v2485, 127
        %v2490 = vpop.permute.xlu0 %2489
        %2491 = vrot.lane.b32.xlu0 %v2486, 127
        %v2492 = vpop.permute.xlu0 %2491
        %v2495 = vadd.f32 %v2447, %v2490
        %v2496 = vadd.f32 %v2448, %v2492
        %s2497 = sld [smem:[#allocation11 + $0x6d]]
        %v2498 = vstv %s2497
        %v2499 = vmul.f32 %v2498, %v2429
        %v2500 = vmul.f32 %v2498, %v2430
        %2503 = vrot.lane.b32.xlu0 %v2499, 127
        %v2504 = vpop.permute.xlu0 %2503
        %2505 = vrot.lane.b32.xlu0 %v2500, 127
        %v2506 = vpop.permute.xlu0 %2505
        %v2509 = vadd.f32 %v2453, %v2504
        %v2510 = vadd.f32 %v2454, %v2506
        %s2511 = sld [smem:[#allocation11 + $0x2]]
        %v2512 = vstv %s2511
        %v2513 = vmul.f32 %v2512, %v2429
        %v2514 = vmul.f32 %v2512, %v2430
        %2517 = vrot.lane.b32.xlu0 %v2513, 126
        %v2518 = vpop.permute.xlu0 %2517
        %2519 = vrot.lane.b32.xlu0 %v2514, 126
        %v2520 = vpop.permute.xlu0 %2519
        %v2523 = vadd.f32 %v2467, %v2518
        %v2524 = vadd.f32 %v2468, %v2520
        %s2525 = sld [smem:[#allocation11 + $0x26]]
        %v2526 = vstv %s2525
        %v2527 = vmul.f32 %v2526, %v2429
        %v2528 = vmul.f32 %v2526, %v2430
        %2531 = vrot.lane.b32.xlu0 %v2527, 126
        %v2532 = vpop.permute.xlu0 %2531
        %2533 = vrot.lane.b32.xlu0 %v2528, 126
        %v2534 = vpop.permute.xlu0 %2533
        %v2537 = vadd.f32 %v2481, %v2532
        %v2538 = vadd.f32 %v2482, %v2534
        %s2539 = sld [smem:[#allocation11 + $0x4a]]
        %v2540 = vstv %s2539
        %v2541 = vmul.f32 %v2540, %v2429
        %v2542 = vmul.f32 %v2540, %v2430
        %2545 = vrot.lane.b32.xlu0 %v2541, 126
        %v2546 = vpop.permute.xlu0 %2545
        %2547 = vrot.lane.b32.xlu0 %v2542, 126
        %v2548 = vpop.permute.xlu0 %2547
        %v2551 = vadd.f32 %v2495, %v2546
        %v2552 = vadd.f32 %v2496, %v2548
        %s2553 = sld [smem:[#allocation11 + $0x6e]]
        %v2554 = vstv %s2553
        %v2555 = vmul.f32 %v2554, %v2429
        %v2556 = vmul.f32 %v2554, %v2430
        %2559 = vrot.lane.b32.xlu0 %v2555, 126
        %v2560 = vpop.permute.xlu0 %2559
        %2561 = vrot.lane.b32.xlu0 %v2556, 126
        %v2562 = vpop.permute.xlu0 %2561
        %v2565 = vadd.f32 %v2509, %v2560
        %v2566 = vadd.f32 %v2510, %v2562
        %v2567 = vld [vmem:[#allocation3 + $0x1] sm:$0xff]
        %v2568 = vld [vmem:[#allocation3 + $0x9] sm:$0xff]
        %s2569 = sld [smem:[#allocation11 + $0x3]]
        %v2570 = vstv %s2569
        %v2571 = vmul.f32 %v2570, %v2567
        %v2572 = vmul.f32 %v2570, %v2568
        %v2573 = vadd.f32 %v2523, %v2571
        %v2574 = vadd.f32 %v2524, %v2572
        %s2575 = sld [smem:[#allocation11 + $0x27]]
        %v2576 = vstv %s2575
        %v2577 = vmul.f32 %v2576, %v2567
        %v2578 = vmul.f32 %v2576, %v2568
        %v2579 = vadd.f32 %v2537, %v2577
        %v2580 = vadd.f32 %v2538, %v2578
        %s2581 = sld [smem:[#allocation11 + $0x4b]]
        %v2582 = vstv %s2581
        %v2583 = vmul.f32 %v2582, %v2567
        %v2584 = vmul.f32 %v2582, %v2568
        %v2585 = vadd.f32 %v2551, %v2583
        %v2586 = vadd.f32 %v2552, %v2584
        %s2587 = sld [smem:[#allocation11 + $0x6f]]
        %v2588 = vstv %s2587
        %v2589 = vmul.f32 %v2588, %v2567
        %v2590 = vmul.f32 %v2588, %v2568
        %v2591 = vadd.f32 %v2565, %v2589
        %v2592 = vadd.f32 %v2566, %v2590
        %s2593 = sld [smem:[#allocation11 + $0x4]]
        %v2594 = vstv %s2593
        %v2595 = vmul.f32 %v2594, %v2567
        %v2596 = vmul.f32 %v2594, %v2568
        %2599 = vrot.lane.b32.xlu0 %v2595, 127
        %v2600 = vpop.permute.xlu0 %2599
        %2601 = vrot.lane.b32.xlu0 %v2596, 127
        %v2602 = vpop.permute.xlu0 %2601
        %v2605 = vadd.f32 %v2573, %v2600
        %v2606 = vadd.f32 %v2574, %v2602
        %s2607 = sld [smem:[#allocation11 + $0x28]]
        %v2608 = vstv %s2607
        %v2609 = vmul.f32 %v2608, %v2567
        %v2610 = vmul.f32 %v2608, %v2568
        %2613 = vrot.lane.b32.xlu0 %v2609, 127
        %v2614 = vpop.permute.xlu0 %2613
        %2615 = vrot.lane.b32.xlu0 %v2610, 127
        %v2616 = vpop.permute.xlu0 %2615
        %v2619 = vadd.f32 %v2579, %v2614
        %v2620 = vadd.f32 %v2580, %v2616
        %s2621 = sld [smem:[#allocation11 + $0x4c]]
        %v2622 = vstv %s2621
        %v2623 = vmul.f32 %v2622, %v2567
        %v2624 = vmul.f32 %v2622, %v2568
        %2627 = vrot.lane.b32.xlu0 %v2623, 127
        %v2628 = vpop.permute.xlu0 %2627
        %2629 = vrot.lane.b32.xlu0 %v2624, 127
        %v2630 = vpop.permute.xlu0 %2629
        %v2633 = vadd.f32 %v2585, %v2628
        %v2634 = vadd.f32 %v2586, %v2630
        %s2635 = sld [smem:[#allocation11 + $0x70]]
        %v2636 = vstv %s2635
        %v2637 = vmul.f32 %v2636, %v2567
        %v2638 = vmul.f32 %v2636, %v2568
        %2641 = vrot.lane.b32.xlu0 %v2637, 127
        %v2642 = vpop.permute.xlu0 %2641
        %2643 = vrot.lane.b32.xlu0 %v2638, 127
        %v2644 = vpop.permute.xlu0 %2643
        %v2647 = vadd.f32 %v2591, %v2642
        %v2648 = vadd.f32 %v2592, %v2644
        %s2649 = sld [smem:[#allocation11 + $0x5]]
        %v2650 = vstv %s2649
        %v2651 = vmul.f32 %v2650, %v2567
        %v2652 = vmul.f32 %v2650, %v2568
        %2655 = vrot.lane.b32.xlu0 %v2651, 126
        %v2656 = vpop.permute.xlu0 %2655
        %2657 = vrot.lane.b32.xlu0 %v2652, 126
        %v2658 = vpop.permute.xlu0 %2657
        %v2661 = vadd.f32 %v2605, %v2656
        %v2662 = vadd.f32 %v2606, %v2658
        %s2663 = sld [smem:[#allocation11 + $0x29]]
        %v2664 = vstv %s2663
        %v2665 = vmul.f32 %v2664, %v2567
        %v2666 = vmul.f32 %v2664, %v2568
        %2669 = vrot.lane.b32.xlu0 %v2665, 126
        %v2670 = vpop.permute.xlu0 %2669
        %2671 = vrot.lane.b32.xlu0 %v2666, 126
        %v2672 = vpop.permute.xlu0 %2671
        %v2675 = vadd.f32 %v2619, %v2670
        %v2676 = vadd.f32 %v2620, %v2672
        %s2677 = sld [smem:[#allocation11 + $0x4d]]
        %v2678 = vstv %s2677
        %v2679 = vmul.f32 %v2678, %v2567
        %v2680 = vmul.f32 %v2678, %v2568
        %2683 = vrot.lane.b32.xlu0 %v2679, 126
        %v2684 = vpop.permute.xlu0 %2683
        %2685 = vrot.lane.b32.xlu0 %v2680, 126
        %v2686 = vpop.permute.xlu0 %2685
        %v2689 = vadd.f32 %v2633, %v2684
        %v2690 = vadd.f32 %v2634, %v2686
        %s2691 = sld [smem:[#allocation11 + $0x71]]
        %v2692 = vstv %s2691
        %v2693 = vmul.f32 %v2692, %v2567
        %v2694 = vmul.f32 %v2692, %v2568
        %2697 = vrot.lane.b32.xlu0 %v2693, 126
        %v2698 = vpop.permute.xlu0 %2697
        %2699 = vrot.lane.b32.xlu0 %v2694, 126
        %v2700 = vpop.permute.xlu0 %2699
        %v2703 = vadd.f32 %v2647, %v2698
        %v2704 = vadd.f32 %v2648, %v2700
        %v2705 = vld [vmem:[#allocation3 + $0x2] sm:$0xff]
        %v2706 = vld [vmem:[#allocation3 + $0xa] sm:$0xff]
        %s2707 = sld [smem:[#allocation11 + $0x6]]
        %v2708 = vstv %s2707
        %v2709 = vmul.f32 %v2708, %v2705
        %v2710 = vmul.f32 %v2708, %v2706
        %v2711 = vadd.f32 %v2661, %v2709
        %v2712 = vadd.f32 %v2662, %v2710
        %s2713 = sld [smem:[#allocation11 + $0x2a]]
        %v2714 = vstv %s2713
        %v2715 = vmul.f32 %v2714, %v2705
        %v2716 = vmul.f32 %v2714, %v2706
        %v2717 = vadd.f32 %v2675, %v2715
        %v2718 = vadd.f32 %v2676, %v2716
        %s2719 = sld [smem:[#allocation11 + $0x4e]]
        %v2720 = vstv %s2719
        %v2721 = vmul.f32 %v2720, %v2705
        %v2722 = vmul.f32 %v2720, %v2706
        %v2723 = vadd.f32 %v2689, %v2721
        %v2724 = vadd.f32 %v2690, %v2722
        %s2725 = sld [smem:[#allocation11 + $0x72]]
        %v2726 = vstv %s2725
        %v2727 = vmul.f32 %v2726, %v2705
        %v2728 = vmul.f32 %v2726, %v2706
        %v2729 = vadd.f32 %v2703, %v2727
        %v2730 = vadd.f32 %v2704, %v2728
        %s2731 = sld [smem:[#allocation11 + $0x7]]
        %v2732 = vstv %s2731
        %v2733 = vmul.f32 %v2732, %v2705
        %v2734 = vmul.f32 %v2732, %v2706
        %2737 = vrot.lane.b32.xlu0 %v2733, 127
        %v2738 = vpop.permute.xlu0 %2737
        %2739 = vrot.lane.b32.xlu0 %v2734, 127
        %v2740 = vpop.permute.xlu0 %2739
        %v2743 = vadd.f32 %v2711, %v2738
        %v2744 = vadd.f32 %v2712, %v2740
        %s2745 = sld [smem:[#allocation11 + $0x2b]]
        %v2746 = vstv %s2745
        %v2747 = vmul.f32 %v2746, %v2705
        %v2748 = vmul.f32 %v2746, %v2706
        %2751 = vrot.lane.b32.xlu0 %v2747, 127
        %v2752 = vpop.permute.xlu0 %2751
        %2753 = vrot.lane.b32.xlu0 %v2748, 127
        %v2754 = vpop.permute.xlu0 %2753
        %v2757 = vadd.f32 %v2717, %v2752
        %v2758 = vadd.f32 %v2718, %v2754
        %s2759 = sld [smem:[#allocation11 + $0x4f]]
        %v2760 = vstv %s2759
        %v2761 = vmul.f32 %v2760, %v2705
        %v2762 = vmul.f32 %v2760, %v2706
        %2765 = vrot.lane.b32.xlu0 %v2761, 127
        %v2766 = vpop.permute.xlu0 %2765
        %2767 = vrot.lane.b32.xlu0 %v2762, 127
        %v2768 = vpop.permute.xlu0 %2767
        %v2771 = vadd.f32 %v2723, %v2766
        %v2772 = vadd.f32 %v2724, %v2768
        %s2773 = sld [smem:[#allocation11 + $0x73]]
        %v2774 = vstv %s2773
        %v2775 = vmul.f32 %v2774, %v2705
        %v2776 = vmul.f32 %v2774, %v2706
        %2779 = vrot.lane.b32.xlu0 %v2775, 127
        %v2780 = vpop.permute.xlu0 %2779
        %2781 = vrot.lane.b32.xlu0 %v2776, 127
        %v2782 = vpop.permute.xlu0 %2781
        %v2785 = vadd.f32 %v2729, %v2780
        %v2786 = vadd.f32 %v2730, %v2782
        %s2787 = sld [smem:[#allocation11 + $0x8]]
        %v2788 = vstv %s2787
        %v2789 = vmul.f32 %v2788, %v2705
        %v2790 = vmul.f32 %v2788, %v2706
        %2793 = vrot.lane.b32.xlu0 %v2789, 126
        %v2794 = vpop.permute.xlu0 %2793
        %2795 = vrot.lane.b32.xlu0 %v2790, 126
        %v2796 = vpop.permute.xlu0 %2795
        %v2799 = vadd.f32 %v2743, %v2794
        %v2800 = vadd.f32 %v2744, %v2796
        %s2801 = sld [smem:[#allocation11 + $0x2c]]
        %v2802 = vstv %s2801
        %v2803 = vmul.f32 %v2802, %v2705
        %v2804 = vmul.f32 %v2802, %v2706
        %2807 = vrot.lane.b32.xlu0 %v2803, 126
        %v2808 = vpop.permute.xlu0 %2807
        %2809 = vrot.lane.b32.xlu0 %v2804, 126
        %v2810 = vpop.permute.xlu0 %2809
        %v2813 = vadd.f32 %v2757, %v2808
        %v2814 = vadd.f32 %v2758, %v2810
        %s2815 = sld [smem:[#allocation11 + $0x50]]
        %v2816 = vstv %s2815
        %v2817 = vmul.f32 %v2816, %v2705
        %v2818 = vmul.f32 %v2816, %v2706
        %2821 = vrot.lane.b32.xlu0 %v2817, 126
        %v2822 = vpop.permute.xlu0 %2821
        %2823 = vrot.lane.b32.xlu0 %v2818, 126
        %v2824 = vpop.permute.xlu0 %2823
        %v2827 = vadd.f32 %v2771, %v2822
        %v2828 = vadd.f32 %v2772, %v2824
        %s2829 = sld [smem:[#allocation11 + $0x74]]
        %v2830 = vstv %s2829
        %v2831 = vmul.f32 %v2830, %v2705
        %v2832 = vmul.f32 %v2830, %v2706
        %2835 = vrot.lane.b32.xlu0 %v2831, 126
        %v2836 = vpop.permute.xlu0 %2835
        %2837 = vrot.lane.b32.xlu0 %v2832, 126
        %v2838 = vpop.permute.xlu0 %2837
        %v2841 = vadd.f32 %v2785, %v2836
        %v2842 = vadd.f32 %v2786, %v2838
        %v2843 = vld [vmem:[%s2240] sm:$0xff]
        %v2844 = vld [vmem:[%s2240 + $0x8] sm:$0xff]
        %s2845 = sld [smem:[#allocation11 + $0x9]]
        %v2846 = vstv %s2845
        %v2847 = vmul.f32 %v2846, %v2843
        %v2848 = vmul.f32 %v2846, %v2844
        %v2849 = vadd.f32 %v2799, %v2847
        %v2850 = vadd.f32 %v2800, %v2848
        %s2851 = sld [smem:[#allocation11 + $0x2d]]
        %v2852 = vstv %s2851
        %v2853 = vmul.f32 %v2852, %v2843
        %v2854 = vmul.f32 %v2852, %v2844
        %v2855 = vadd.f32 %v2813, %v2853
        %v2856 = vadd.f32 %v2814, %v2854
        %s2857 = sld [smem:[#allocation11 + $0x51]]
        %v2858 = vstv %s2857
        %v2859 = vmul.f32 %v2858, %v2843
        %v2860 = vmul.f32 %v2858, %v2844
        %v2861 = vadd.f32 %v2827, %v2859
        %v2862 = vadd.f32 %v2828, %v2860
        %s2863 = sld [smem:[#allocation11 + $0x75]]
        %v2864 = vstv %s2863
        %v2865 = vmul.f32 %v2864, %v2843
        %v2866 = vmul.f32 %v2864, %v2844
        %v2867 = vadd.f32 %v2841, %v2865
        %v2868 = vadd.f32 %v2842, %v2866
        %s2869 = sld [smem:[#allocation11 + $0xa]]
        %v2870 = vstv %s2869
        %v2871 = vmul.f32 %v2870, %v2843
        %v2872 = vmul.f32 %v2870, %v2844
        %2875 = vrot.lane.b32.xlu0 %v2871, 127
        %v2876 = vpop.permute.xlu0 %2875
        %2877 = vrot.lane.b32.xlu0 %v2872, 127
        %v2878 = vpop.permute.xlu0 %2877
        %v2881 = vadd.f32 %v2849, %v2876
        %v2882 = vadd.f32 %v2850, %v2878
        %s2883 = sld [smem:[#allocation11 + $0x2e]]
        %v2884 = vstv %s2883
        %v2885 = vmul.f32 %v2884, %v2843
        %v2886 = vmul.f32 %v2884, %v2844
        %2889 = vrot.lane.b32.xlu0 %v2885, 127
        %v2890 = vpop.permute.xlu0 %2889
        %2891 = vrot.lane.b32.xlu0 %v2886, 127
        %v2892 = vpop.permute.xlu0 %2891
        %v2895 = vadd.f32 %v2855, %v2890
        %v2896 = vadd.f32 %v2856, %v2892
        %s2897 = sld [smem:[#allocation11 + $0x52]]
        %v2898 = vstv %s2897
        %v2899 = vmul.f32 %v2898, %v2843
        %v2900 = vmul.f32 %v2898, %v2844
        %2903 = vrot.lane.b32.xlu0 %v2899, 127
        %v2904 = vpop.permute.xlu0 %2903
        %2905 = vrot.lane.b32.xlu0 %v2900, 127
        %v2906 = vpop.permute.xlu0 %2905
        %v2909 = vadd.f32 %v2861, %v2904
        %v2910 = vadd.f32 %v2862, %v2906
        %s2911 = sld [smem:[#allocation11 + $0x76]]
        %v2912 = vstv %s2911
        %v2913 = vmul.f32 %v2912, %v2843
        %v2914 = vmul.f32 %v2912, %v2844
        %2917 = vrot.lane.b32.xlu0 %v2913, 127
        %v2918 = vpop.permute.xlu0 %2917
        %2919 = vrot.lane.b32.xlu0 %v2914, 127
        %v2920 = vpop.permute.xlu0 %2919
        %v2923 = vadd.f32 %v2867, %v2918
        %v2924 = vadd.f32 %v2868, %v2920
        %s2925 = sld [smem:[#allocation11 + $0xb]]
        %v2926 = vstv %s2925
        %v2927 = vmul.f32 %v2926, %v2843
        %v2928 = vmul.f32 %v2926, %v2844
        %2931 = vrot.lane.b32.xlu0 %v2927, 126
        %v2932 = vpop.permute.xlu0 %2931
        %2933 = vrot.lane.b32.xlu0 %v2928, 126
        %v2934 = vpop.permute.xlu0 %2933
        %v2937 = vadd.f32 %v2881, %v2932
        %v2938 = vadd.f32 %v2882, %v2934
        %s2939 = sld [smem:[#allocation11 + $0x2f]]
        %v2940 = vstv %s2939
        %v2941 = vmul.f32 %v2940, %v2843
        %v2942 = vmul.f32 %v2940, %v2844
        %2945 = vrot.lane.b32.xlu0 %v2941, 126
        %v2946 = vpop.permute.xlu0 %2945
        %2947 = vrot.lane.b32.xlu0 %v2942, 126
        %v2948 = vpop.permute.xlu0 %2947
        %v2951 = vadd.f32 %v2895, %v2946
        %v2952 = vadd.f32 %v2896, %v2948
        %s2953 = sld [smem:[#allocation11 + $0x53]]
        %v2954 = vstv %s2953
        %v2955 = vmul.f32 %v2954, %v2843
        %v2956 = vmul.f32 %v2954, %v2844
        %2959 = vrot.lane.b32.xlu0 %v2955, 126
        %v2960 = vpop.permute.xlu0 %2959
        %2961 = vrot.lane.b32.xlu0 %v2956, 126
        %v2962 = vpop.permute.xlu0 %2961
        %v2965 = vadd.f32 %v2909, %v2960
        %v2966 = vadd.f32 %v2910, %v2962
        %s2967 = sld [smem:[#allocation11 + $0x77]]
        %v2968 = vstv %s2967
        %v2969 = vmul.f32 %v2968, %v2843
        %v2970 = vmul.f32 %v2968, %v2844
        %2973 = vrot.lane.b32.xlu0 %v2969, 126
        %v2974 = vpop.permute.xlu0 %2973
        %2975 = vrot.lane.b32.xlu0 %v2970, 126
        %v2976 = vpop.permute.xlu0 %2975
        %v2979 = vadd.f32 %v2923, %v2974
        %v2980 = vadd.f32 %v2924, %v2976
        %v2981 = vld [vmem:[%s2240 + $0x1] sm:$0xff]
        %v2982 = vld [vmem:[%s2240 + $0x9] sm:$0xff]
        %s2983 = sld [smem:[#allocation11 + $0xc]]
        %v2984 = vstv %s2983
        %v2985 = vmul.f32 %v2984, %v2981
        %v2986 = vmul.f32 %v2984, %v2982
        %v2987 = vadd.f32 %v2937, %v2985
        %v2988 = vadd.f32 %v2938, %v2986
        %s2989 = sld [smem:[#allocation11 + $0x30]]
        %v2990 = vstv %s2989
        %v2991 = vmul.f32 %v2990, %v2981
        %v2992 = vmul.f32 %v2990, %v2982
        %v2993 = vadd.f32 %v2951, %v2991
        %v2994 = vadd.f32 %v2952, %v2992
        %s2995 = sld [smem:[#allocation11 + $0x54]]
        %v2996 = vstv %s2995
        %v2997 = vmul.f32 %v2996, %v2981
        %v2998 = vmul.f32 %v2996, %v2982
        %v2999 = vadd.f32 %v2965, %v2997
        %v3000 = vadd.f32 %v2966, %v2998
        %s3001 = sld [smem:[#allocation11 + $0x78]]
        %v3002 = vstv %s3001
        %v3003 = vmul.f32 %v3002, %v2981
        %v3004 = vmul.f32 %v3002, %v2982
        %v3005 = vadd.f32 %v2979, %v3003
        %v3006 = vadd.f32 %v2980, %v3004
        %s3007 = sld [smem:[#allocation11 + $0xd]]
        %v3008 = vstv %s3007
        %v3009 = vmul.f32 %v3008, %v2981
        %v3010 = vmul.f32 %v3008, %v2982
        %3013 = vrot.lane.b32.xlu0 %v3009, 127
        %v3014 = vpop.permute.xlu0 %3013
        %3015 = vrot.lane.b32.xlu0 %v3010, 127
        %v3016 = vpop.permute.xlu0 %3015
        %v3019 = vadd.f32 %v2987, %v3014
        %v3020 = vadd.f32 %v2988, %v3016
        %s3021 = sld [smem:[#allocation11 + $0x31]]
        %v3022 = vstv %s3021
        %v3023 = vmul.f32 %v3022, %v2981
        %v3024 = vmul.f32 %v3022, %v2982
        %3027 = vrot.lane.b32.xlu0 %v3023, 127
        %v3028 = vpop.permute.xlu0 %3027
        %3029 = vrot.lane.b32.xlu0 %v3024, 127
        %v3030 = vpop.permute.xlu0 %3029
        %v3033 = vadd.f32 %v2993, %v3028
        %v3034 = vadd.f32 %v2994, %v3030
        %s3035 = sld [smem:[#allocation11 + $0x55]]
        %v3036 = vstv %s3035
        %v3037 = vmul.f32 %v3036, %v2981
        %v3038 = vmul.f32 %v3036, %v2982
        %3041 = vrot.lane.b32.xlu0 %v3037, 127
        %v3042 = vpop.permute.xlu0 %3041
        %3043 = vrot.lane.b32.xlu0 %v3038, 127
        %v3044 = vpop.permute.xlu0 %3043
        %v3047 = vadd.f32 %v2999, %v3042
        %v3048 = vadd.f32 %v3000, %v3044
        %s3049 = sld [smem:[#allocation11 + $0x79]]
        %v3050 = vstv %s3049
        %v3051 = vmul.f32 %v3050, %v2981
        %v3052 = vmul.f32 %v3050, %v2982
        %3055 = vrot.lane.b32.xlu0 %v3051, 127
        %v3056 = vpop.permute.xlu0 %3055
        %3057 = vrot.lane.b32.xlu0 %v3052, 127
        %v3058 = vpop.permute.xlu0 %3057
        %v3061 = vadd.f32 %v3005, %v3056
        %v3062 = vadd.f32 %v3006, %v3058
        %s3063 = sld [smem:[#allocation11 + $0xe]]
        %v3064 = vstv %s3063
        %v3065 = vmul.f32 %v3064, %v2981
        %v3066 = vmul.f32 %v3064, %v2982
        %3069 = vrot.lane.b32.xlu0 %v3065, 126
        %v3070 = vpop.permute.xlu0 %3069
        %3071 = vrot.lane.b32.xlu0 %v3066, 126
        %v3072 = vpop.permute.xlu0 %3071
        %v3075 = vadd.f32 %v3019, %v3070
        %v3076 = vadd.f32 %v3020, %v3072
        %s3077 = sld [smem:[#allocation11 + $0x32]]
        %v3078 = vstv %s3077
        %v3079 = vmul.f32 %v3078, %v2981
        %v3080 = vmul.f32 %v3078, %v2982
        %3083 = vrot.lane.b32.xlu0 %v3079, 126
        %v3084 = vpop.permute.xlu0 %3083
        %3085 = vrot.lane.b32.xlu0 %v3080, 126
        %v3086 = vpop.permute.xlu0 %3085
        %v3089 = vadd.f32 %v3033, %v3084
        %v3090 = vadd.f32 %v3034, %v3086
        %s3091 = sld [smem:[#allocation11 + $0x56]]
        %v3092 = vstv %s3091
        %v3093 = vmul.f32 %v3092, %v2981
        %v3094 = vmul.f32 %v3092, %v2982
        %3097 = vrot.lane.b32.xlu0 %v3093, 126
        %v3098 = vpop.permute.xlu0 %3097
        %3099 = vrot.lane.b32.xlu0 %v3094, 126
        %v3100 = vpop.permute.xlu0 %3099
        %v3103 = vadd.f32 %v3047, %v3098
        %v3104 = vadd.f32 %v3048, %v3100
        %s3105 = sld [smem:[#allocation11 + $0x7a]]
        %v3106 = vstv %s3105
        %v3107 = vmul.f32 %v3106, %v2981
        %v3108 = vmul.f32 %v3106, %v2982
        %3111 = vrot.lane.b32.xlu0 %v3107, 126
        %v3112 = vpop.permute.xlu0 %3111
        %3113 = vrot.lane.b32.xlu0 %v3108, 126
        %v3114 = vpop.permute.xlu0 %3113
        %v3117 = vadd.f32 %v3061, %v3112
        %v3118 = vadd.f32 %v3062, %v3114
        %v3119 = vld [vmem:[%s2240 + $0x2] sm:$0xff]
        %v3120 = vld [vmem:[%s2240 + $0xa] sm:$0xff]
        %s3121 = sld [smem:[#allocation11 + $0xf]]
        %v3122 = vstv %s3121
        %v3123 = vmul.f32 %v3122, %v3119
        %v3124 = vmul.f32 %v3122, %v3120
        %v3125 = vadd.f32 %v3075, %v3123
        %v3126 = vadd.f32 %v3076, %v3124
        %s3127 = sld [smem:[#allocation11 + $0x33]]
        %v3128 = vstv %s3127
        %v3129 = vmul.f32 %v3128, %v3119
        %v3130 = vmul.f32 %v3128, %v3120
        %v3131 = vadd.f32 %v3089, %v3129
        %v3132 = vadd.f32 %v3090, %v3130
        %s3133 = sld [smem:[#allocation11 + $0x57]]
        %v3134 = vstv %s3133
        %v3135 = vmul.f32 %v3134, %v3119
        %v3136 = vmul.f32 %v3134, %v3120
        %v3137 = vadd.f32 %v3103, %v3135
        %v3138 = vadd.f32 %v3104, %v3136
        %s3139 = sld [smem:[#allocation11 + $0x7b]]
        %v3140 = vstv %s3139
        %v3141 = vmul.f32 %v3140, %v3119
        %v3142 = vmul.f32 %v3140, %v3120
        %v3143 = vadd.f32 %v3117, %v3141
        %v3144 = vadd.f32 %v3118, %v3142
        %s3145 = sld [smem:[#allocation11 + $0x10]]
        %v3146 = vstv %s3145
        %v3147 = vmul.f32 %v3146, %v3119
        %v3148 = vmul.f32 %v3146, %v3120
        %3151 = vrot.lane.b32.xlu0 %v3147, 127
        %v3152 = vpop.permute.xlu0 %3151
        %3153 = vrot.lane.b32.xlu0 %v3148, 127
        %v3154 = vpop.permute.xlu0 %3153
        %v3157 = vadd.f32 %v3125, %v3152
        %v3158 = vadd.f32 %v3126, %v3154
        %s3159 = sld [smem:[#allocation11 + $0x34]]
        %v3160 = vstv %s3159
        %v3161 = vmul.f32 %v3160, %v3119
        %v3162 = vmul.f32 %v3160, %v3120
        %3165 = vrot.lane.b32.xlu0 %v3161, 127
        %v3166 = vpop.permute.xlu0 %3165
        %3167 = vrot.lane.b32.xlu0 %v3162, 127
        %v3168 = vpop.permute.xlu0 %3167
        %v3171 = vadd.f32 %v3131, %v3166
        %v3172 = vadd.f32 %v3132, %v3168
        %s3173 = sld [smem:[#allocation11 + $0x58]]
        %v3174 = vstv %s3173
        %v3175 = vmul.f32 %v3174, %v3119
        %v3176 = vmul.f32 %v3174, %v3120
        %3179 = vrot.lane.b32.xlu0 %v3175, 127
        %v3180 = vpop.permute.xlu0 %3179
        %3181 = vrot.lane.b32.xlu0 %v3176, 127
        %v3182 = vpop.permute.xlu0 %3181
        %v3185 = vadd.f32 %v3137, %v3180
        %v3186 = vadd.f32 %v3138, %v3182
        %s3187 = sld [smem:[#allocation11 + $0x7c]]
        %v3188 = vstv %s3187
        %v3189 = vmul.f32 %v3188, %v3119
        %v3190 = vmul.f32 %v3188, %v3120
        %3193 = vrot.lane.b32.xlu0 %v3189, 127
        %v3194 = vpop.permute.xlu0 %3193
        %3195 = vrot.lane.b32.xlu0 %v3190, 127
        %v3196 = vpop.permute.xlu0 %3195
        %v3199 = vadd.f32 %v3143, %v3194
        %v3200 = vadd.f32 %v3144, %v3196
        %s3201 = sld [smem:[#allocation11 + $0x11]]
        %v3202 = vstv %s3201
        %v3203 = vmul.f32 %v3202, %v3119
        %v3204 = vmul.f32 %v3202, %v3120
        %3207 = vrot.lane.b32.xlu0 %v3203, 126
        %v3208 = vpop.permute.xlu0 %3207
        %3209 = vrot.lane.b32.xlu0 %v3204, 126
        %v3210 = vpop.permute.xlu0 %3209
        %v3213 = vadd.f32 %v3157, %v3208
        %v3214 = vadd.f32 %v3158, %v3210
        %s3215 = sld [smem:[#allocation11 + $0x35]]
        %v3216 = vstv %s3215
        %v3217 = vmul.f32 %v3216, %v3119
        %v3218 = vmul.f32 %v3216, %v3120
        %3221 = vrot.lane.b32.xlu0 %v3217, 126
        %v3222 = vpop.permute.xlu0 %3221
        %3223 = vrot.lane.b32.xlu0 %v3218, 126
        %v3224 = vpop.permute.xlu0 %3223
        %v3227 = vadd.f32 %v3171, %v3222
        %v3228 = vadd.f32 %v3172, %v3224
        %s3229 = sld [smem:[#allocation11 + $0x59]]
        %v3230 = vstv %s3229
        %v3231 = vmul.f32 %v3230, %v3119
        %v3232 = vmul.f32 %v3230, %v3120
        %3235 = vrot.lane.b32.xlu0 %v3231, 126
        %v3236 = vpop.permute.xlu0 %3235
        %3237 = vrot.lane.b32.xlu0 %v3232, 126
        %v3238 = vpop.permute.xlu0 %3237
        %v3241 = vadd.f32 %v3185, %v3236
        %v3242 = vadd.f32 %v3186, %v3238
        %s3243 = sld [smem:[#allocation11 + $0x7d]]
        %v3244 = vstv %s3243
        %v3245 = vmul.f32 %v3244, %v3119
        %v3246 = vmul.f32 %v3244, %v3120
        %3249 = vrot.lane.b32.xlu0 %v3245, 126
        %v3250 = vpop.permute.xlu0 %3249
        %3251 = vrot.lane.b32.xlu0 %v3246, 126
        %v3252 = vpop.permute.xlu0 %3251
        %v3255 = vadd.f32 %v3199, %v3250
        %v3256 = vadd.f32 %v3200, %v3252
        %v3257 = vld [vmem:[%s2253] sm:$0xff]
        %v3258 = vld [vmem:[%s2253 + $0x8] sm:$0xff]
        %s3259 = sld [smem:[#allocation11 + $0x12]]
        %v3260 = vstv %s3259
        %v3261 = vmul.f32 %v3260, %v3257
        %v3262 = vmul.f32 %v3260, %v3258
        %v3263 = vadd.f32 %v3213, %v3261
        %v3264 = vadd.f32 %v3214, %v3262
        %s3265 = sld [smem:[#allocation11 + $0x36]]
        %v3266 = vstv %s3265
        %v3267 = vmul.f32 %v3266, %v3257
        %v3268 = vmul.f32 %v3266, %v3258
        %v3269 = vadd.f32 %v3227, %v3267
        %v3270 = vadd.f32 %v3228, %v3268
        %s3271 = sld [smem:[#allocation11 + $0x5a]]
        %v3272 = vstv %s3271
        %v3273 = vmul.f32 %v3272, %v3257
        %v3274 = vmul.f32 %v3272, %v3258
        %v3275 = vadd.f32 %v3241, %v3273
        %v3276 = vadd.f32 %v3242, %v3274
        %s3277 = sld [smem:[#allocation11 + $0x7e]]
        %v3278 = vstv %s3277
        %v3279 = vmul.f32 %v3278, %v3257
        %v3280 = vmul.f32 %v3278, %v3258
        %v3281 = vadd.f32 %v3255, %v3279
        %v3282 = vadd.f32 %v3256, %v3280
        %s3283 = sld [smem:[#allocation11 + $0x13]]
        %v3284 = vstv %s3283
        %v3285 = vmul.f32 %v3284, %v3257
        %v3286 = vmul.f32 %v3284, %v3258
        %3289 = vrot.lane.b32.xlu0 %v3285, 127
        %v3290 = vpop.permute.xlu0 %3289
        %3291 = vrot.lane.b32.xlu0 %v3286, 127
        %v3292 = vpop.permute.xlu0 %3291
        %v3295 = vadd.f32 %v3263, %v3290
        %v3296 = vadd.f32 %v3264, %v3292
        %s3297 = sld [smem:[#allocation11 + $0x37]]
        %v3298 = vstv %s3297
        %v3299 = vmul.f32 %v3298, %v3257
        %v3300 = vmul.f32 %v3298, %v3258
        %3303 = vrot.lane.b32.xlu0 %v3299, 127
        %v3304 = vpop.permute.xlu0 %3303
        %3305 = vrot.lane.b32.xlu0 %v3300, 127
        %v3306 = vpop.permute.xlu0 %3305
        %v3309 = vadd.f32 %v3269, %v3304
        %v3310 = vadd.f32 %v3270, %v3306
        %s3311 = sld [smem:[#allocation11 + $0x5b]]
        %v3312 = vstv %s3311
        %v3313 = vmul.f32 %v3312, %v3257
        %v3314 = vmul.f32 %v3312, %v3258
        %3317 = vrot.lane.b32.xlu0 %v3313, 127
        %v3318 = vpop.permute.xlu0 %3317
        %3319 = vrot.lane.b32.xlu0 %v3314, 127
        %v3320 = vpop.permute.xlu0 %3319
        %v3323 = vadd.f32 %v3275, %v3318
        %v3324 = vadd.f32 %v3276, %v3320
        %s3325 = sld [smem:[#allocation11 + $0x7f]]
        %v3326 = vstv %s3325
        %v3327 = vmul.f32 %v3326, %v3257
        %v3328 = vmul.f32 %v3326, %v3258
        %3331 = vrot.lane.b32.xlu0 %v3327, 127
        %v3332 = vpop.permute.xlu0 %3331
        %3333 = vrot.lane.b32.xlu0 %v3328, 127
        %v3334 = vpop.permute.xlu0 %3333
        %v3337 = vadd.f32 %v3281, %v3332
        %v3338 = vadd.f32 %v3282, %v3334
        %s3339 = sld [smem:[#allocation11 + $0x14]]
        %v3340 = vstv %s3339
        %v3341 = vmul.f32 %v3340, %v3257
        %v3342 = vmul.f32 %v3340, %v3258
        %3345 = vrot.lane.b32.xlu0 %v3341, 126
        %v3346 = vpop.permute.xlu0 %3345
        %3347 = vrot.lane.b32.xlu0 %v3342, 126
        %v3348 = vpop.permute.xlu0 %3347
        %v3351 = vadd.f32 %v3295, %v3346
        %v3352 = vadd.f32 %v3296, %v3348
        %s3353 = sld [smem:[#allocation11 + $0x38]]
        %v3354 = vstv %s3353
        %v3355 = vmul.f32 %v3354, %v3257
        %v3356 = vmul.f32 %v3354, %v3258
        %3359 = vrot.lane.b32.xlu0 %v3355, 126
        %v3360 = vpop.permute.xlu0 %3359
        %3361 = vrot.lane.b32.xlu0 %v3356, 126
        %v3362 = vpop.permute.xlu0 %3361
        %v3365 = vadd.f32 %v3309, %v3360
        %v3366 = vadd.f32 %v3310, %v3362
        %s3367 = sld [smem:[#allocation11 + $0x5c]]
        %v3368 = vstv %s3367
        %v3369 = vmul.f32 %v3368, %v3257
        %v3370 = vmul.f32 %v3368, %v3258
        %3373 = vrot.lane.b32.xlu0 %v3369, 126
        %v3374 = vpop.permute.xlu0 %3373
        %3375 = vrot.lane.b32.xlu0 %v3370, 126
        %v3376 = vpop.permute.xlu0 %3375
        %v3379 = vadd.f32 %v3323, %v3374
        %v3380 = vadd.f32 %v3324, %v3376
        %s3381 = sld [smem:[#allocation11 + $0x80]]
        %v3382 = vstv %s3381
        %v3383 = vmul.f32 %v3382, %v3257
        %v3384 = vmul.f32 %v3382, %v3258
        %3387 = vrot.lane.b32.xlu0 %v3383, 126
        %v3388 = vpop.permute.xlu0 %3387
        %3389 = vrot.lane.b32.xlu0 %v3384, 126
        %v3390 = vpop.permute.xlu0 %3389
        %v3393 = vadd.f32 %v3337, %v3388
        %v3394 = vadd.f32 %v3338, %v3390
        %v3395 = vld [vmem:[%s2253 + $0x1] sm:$0xff]
        %v3396 = vld [vmem:[%s2253 + $0x9] sm:$0xff]
        %s3397 = sld [smem:[#allocation11 + $0x15]]
        %v3398 = vstv %s3397
        %v3399 = vmul.f32 %v3398, %v3395
        %v3400 = vmul.f32 %v3398, %v3396
        %v3401 = vadd.f32 %v3351, %v3399
        %v3402 = vadd.f32 %v3352, %v3400
        %s3403 = sld [smem:[#allocation11 + $0x39]]
        %v3404 = vstv %s3403
        %v3405 = vmul.f32 %v3404, %v3395
        %v3406 = vmul.f32 %v3404, %v3396
        %v3407 = vadd.f32 %v3365, %v3405
        %v3408 = vadd.f32 %v3366, %v3406
        %s3409 = sld [smem:[#allocation11 + $0x5d]]
        %v3410 = vstv %s3409
        %v3411 = vmul.f32 %v3410, %v3395
        %v3412 = vmul.f32 %v3410, %v3396
        %v3413 = vadd.f32 %v3379, %v3411
        %v3414 = vadd.f32 %v3380, %v3412
        %s3415 = sld [smem:[#allocation11 + $0x81]]
        %v3416 = vstv %s3415
        %v3417 = vmul.f32 %v3416, %v3395
        %v3418 = vmul.f32 %v3416, %v3396
        %v3419 = vadd.f32 %v3393, %v3417
        %v3420 = vadd.f32 %v3394, %v3418
        %s3421 = sld [smem:[#allocation11 + $0x16]]
        %v3422 = vstv %s3421
        %v3423 = vmul.f32 %v3422, %v3395
        %v3424 = vmul.f32 %v3422, %v3396
        %3427 = vrot.lane.b32.xlu0 %v3423, 127
        %v3428 = vpop.permute.xlu0 %3427
        %3429 = vrot.lane.b32.xlu0 %v3424, 127
        %v3430 = vpop.permute.xlu0 %3429
        %v3433 = vadd.f32 %v3401, %v3428
        %v3434 = vadd.f32 %v3402, %v3430
        %s3435 = sld [smem:[#allocation11 + $0x3a]]
        %v3436 = vstv %s3435
        %v3437 = vmul.f32 %v3436, %v3395
        %v3438 = vmul.f32 %v3436, %v3396
        %3441 = vrot.lane.b32.xlu0 %v3437, 127
        %v3442 = vpop.permute.xlu0 %3441
        %3443 = vrot.lane.b32.xlu0 %v3438, 127
        %v3444 = vpop.permute.xlu0 %3443
        %v3447 = vadd.f32 %v3407, %v3442
        %v3448 = vadd.f32 %v3408, %v3444
        %s3449 = sld [smem:[#allocation11 + $0x5e]]
        %v3450 = vstv %s3449
        %v3451 = vmul.f32 %v3450, %v3395
        %v3452 = vmul.f32 %v3450, %v3396
        %3455 = vrot.lane.b32.xlu0 %v3451, 127
        %v3456 = vpop.permute.xlu0 %3455
        %3457 = vrot.lane.b32.xlu0 %v3452, 127
        %v3458 = vpop.permute.xlu0 %3457
        %v3461 = vadd.f32 %v3413, %v3456
        %v3462 = vadd.f32 %v3414, %v3458
        %s3463 = sld [smem:[#allocation11 + $0x82]]
        %v3464 = vstv %s3463
        %v3465 = vmul.f32 %v3464, %v3395
        %v3466 = vmul.f32 %v3464, %v3396
        %3469 = vrot.lane.b32.xlu0 %v3465, 127
        %v3470 = vpop.permute.xlu0 %3469
        %3471 = vrot.lane.b32.xlu0 %v3466, 127
        %v3472 = vpop.permute.xlu0 %3471
        %v3475 = vadd.f32 %v3419, %v3470
        %v3476 = vadd.f32 %v3420, %v3472
        %s3477 = sld [smem:[#allocation11 + $0x17]]
        %v3478 = vstv %s3477
        %v3479 = vmul.f32 %v3478, %v3395
        %v3480 = vmul.f32 %v3478, %v3396
        %3483 = vrot.lane.b32.xlu0 %v3479, 126
        %v3484 = vpop.permute.xlu0 %3483
        %3485 = vrot.lane.b32.xlu0 %v3480, 126
        %v3486 = vpop.permute.xlu0 %3485
        %v3489 = vadd.f32 %v3433, %v3484
        %v3490 = vadd.f32 %v3434, %v3486
        %s3491 = sld [smem:[#allocation11 + $0x3b]]
        %v3492 = vstv %s3491
        %v3493 = vmul.f32 %v3492, %v3395
        %v3494 = vmul.f32 %v3492, %v3396
        %3497 = vrot.lane.b32.xlu0 %v3493, 126
        %v3498 = vpop.permute.xlu0 %3497
        %3499 = vrot.lane.b32.xlu0 %v3494, 126
        %v3500 = vpop.permute.xlu0 %3499
        %v3503 = vadd.f32 %v3447, %v3498
        %v3504 = vadd.f32 %v3448, %v3500
        %s3505 = sld [smem:[#allocation11 + $0x5f]]
        %v3506 = vstv %s3505
        %v3507 = vmul.f32 %v3506, %v3395
        %v3508 = vmul.f32 %v3506, %v3396
        %3511 = vrot.lane.b32.xlu0 %v3507, 126
        %v3512 = vpop.permute.xlu0 %3511
        %3513 = vrot.lane.b32.xlu0 %v3508, 126
        %v3514 = vpop.permute.xlu0 %3513
        %v3517 = vadd.f32 %v3461, %v3512
        %v3518 = vadd.f32 %v3462, %v3514
        %s3519 = sld [smem:[#allocation11 + $0x83]]
        %v3520 = vstv %s3519
        %v3521 = vmul.f32 %v3520, %v3395
        %v3522 = vmul.f32 %v3520, %v3396
        %3525 = vrot.lane.b32.xlu0 %v3521, 126
        %v3526 = vpop.permute.xlu0 %3525
        %3527 = vrot.lane.b32.xlu0 %v3522, 126
        %v3528 = vpop.permute.xlu0 %3527
        %v3531 = vadd.f32 %v3475, %v3526
        %v3532 = vadd.f32 %v3476, %v3528
        %v3533 = vld [vmem:[%s2253 + $0x2] sm:$0xff]
        %v3534 = vld [vmem:[%s2253 + $0xa] sm:$0xff]
        %s3535 = sld [smem:[#allocation11 + $0x18]]
        %v3536 = vstv %s3535
        %v3537 = vmul.f32 %v3536, %v3533
        %v3538 = vmul.f32 %v3536, %v3534
        %v3539 = vadd.f32 %v3489, %v3537
        %v3540 = vadd.f32 %v3490, %v3538
        %s3541 = sld [smem:[#allocation11 + $0x3c]]
        %v3542 = vstv %s3541
        %v3543 = vmul.f32 %v3542, %v3533
        %v3544 = vmul.f32 %v3542, %v3534
        %v3545 = vadd.f32 %v3503, %v3543
        %v3546 = vadd.f32 %v3504, %v3544
        %s3547 = sld [smem:[#allocation11 + $0x60]]
        %v3548 = vstv %s3547
        %v3549 = vmul.f32 %v3548, %v3533
        %v3550 = vmul.f32 %v3548, %v3534
        %v3551 = vadd.f32 %v3517, %v3549
        %v3552 = vadd.f32 %v3518, %v3550
        %s3553 = sld [smem:[#allocation11 + $0x84]]
        %v3554 = vstv %s3553
        %v3555 = vmul.f32 %v3554, %v3533
        %v3556 = vmul.f32 %v3554, %v3534
        %v3557 = vadd.f32 %v3531, %v3555
        %v3558 = vadd.f32 %v3532, %v3556
        %s3559 = sld [smem:[#allocation11 + $0x19]]
        %v3560 = vstv %s3559
        %v3561 = vmul.f32 %v3560, %v3533
        %v3562 = vmul.f32 %v3560, %v3534
        %3565 = vrot.lane.b32.xlu0 %v3561, 127
        %v3566 = vpop.permute.xlu0 %3565
        %3567 = vrot.lane.b32.xlu0 %v3562, 127
        %v3568 = vpop.permute.xlu0 %3567
        %v3571 = vadd.f32 %v3539, %v3566
        %v3572 = vadd.f32 %v3540, %v3568
        %s3573 = sld [smem:[#allocation11 + $0x3d]]
        %v3574 = vstv %s3573
        %v3575 = vmul.f32 %v3574, %v3533
        %v3576 = vmul.f32 %v3574, %v3534
        %3579 = vrot.lane.b32.xlu0 %v3575, 127
        %v3580 = vpop.permute.xlu0 %3579
        %3581 = vrot.lane.b32.xlu0 %v3576, 127
        %v3582 = vpop.permute.xlu0 %3581
        %v3585 = vadd.f32 %v3545, %v3580
        %v3586 = vadd.f32 %v3546, %v3582
        %s3587 = sld [smem:[#allocation11 + $0x61]]
        %v3588 = vstv %s3587
        %v3589 = vmul.f32 %v3588, %v3533
        %v3590 = vmul.f32 %v3588, %v3534
        %3593 = vrot.lane.b32.xlu0 %v3589, 127
        %v3594 = vpop.permute.xlu0 %3593
        %3595 = vrot.lane.b32.xlu0 %v3590, 127
        %v3596 = vpop.permute.xlu0 %3595
        %v3599 = vadd.f32 %v3551, %v3594
        %v3600 = vadd.f32 %v3552, %v3596
        %s3601 = sld [smem:[#allocation11 + $0x85]]
        %v3602 = vstv %s3601
        %v3603 = vmul.f32 %v3602, %v3533
        %v3604 = vmul.f32 %v3602, %v3534
        %3607 = vrot.lane.b32.xlu0 %v3603, 127
        %v3608 = vpop.permute.xlu0 %3607
        %3609 = vrot.lane.b32.xlu0 %v3604, 127
        %v3610 = vpop.permute.xlu0 %3609
        %v3613 = vadd.f32 %v3557, %v3608
        %v3614 = vadd.f32 %v3558, %v3610
        %s3615 = sld [smem:[#allocation11 + $0x1a]]
        %v3616 = vstv %s3615
        %v3617 = vmul.f32 %v3616, %v3533
        %v3618 = vmul.f32 %v3616, %v3534
        %3621 = vrot.lane.b32.xlu0 %v3617, 126
        %v3622 = vpop.permute.xlu0 %3621
        %3623 = vrot.lane.b32.xlu0 %v3618, 126
        %v3624 = vpop.permute.xlu0 %3623
        %v3627 = vadd.f32 %v3571, %v3622
        %v3628 = vadd.f32 %v3572, %v3624
        %s3629 = sld [smem:[#allocation11 + $0x3e]]
        %v3630 = vstv %s3629
        %v3631 = vmul.f32 %v3630, %v3533
        %v3632 = vmul.f32 %v3630, %v3534
        %3635 = vrot.lane.b32.xlu0 %v3631, 126
        %v3636 = vpop.permute.xlu0 %3635
        %3637 = vrot.lane.b32.xlu0 %v3632, 126
        %v3638 = vpop.permute.xlu0 %3637
        %v3641 = vadd.f32 %v3585, %v3636
        %v3642 = vadd.f32 %v3586, %v3638
        %s3643 = sld [smem:[#allocation11 + $0x62]]
        %v3644 = vstv %s3643
        %v3645 = vmul.f32 %v3644, %v3533
        %v3646 = vmul.f32 %v3644, %v3534
        %3649 = vrot.lane.b32.xlu0 %v3645, 126
        %v3650 = vpop.permute.xlu0 %3649
        %3651 = vrot.lane.b32.xlu0 %v3646, 126
        %v3652 = vpop.permute.xlu0 %3651
        %v3655 = vadd.f32 %v3599, %v3650
        %v3656 = vadd.f32 %v3600, %v3652
        %s3657 = sld [smem:[#allocation11 + $0x86]]
        %v3658 = vstv %s3657
        %v3659 = vmul.f32 %v3658, %v3533
        %v3660 = vmul.f32 %v3658, %v3534
        %3663 = vrot.lane.b32.xlu0 %v3659, 126
        %v3664 = vpop.permute.xlu0 %3663
        %3665 = vrot.lane.b32.xlu0 %v3660, 126
        %v3666 = vpop.permute.xlu0 %3665
        %v3669 = vadd.f32 %v3613, %v3664
        %v3670 = vadd.f32 %v3614, %v3666
        %v3671 = vld [vmem:[%s2266] sm:$0xff]
        %v3672 = vld [vmem:[%s2266 + $0x8] sm:$0xff]
        %s3673 = sld [smem:[#allocation11 + $0x1b]]
        %v3674 = vstv %s3673
        %v3675 = vmul.f32 %v3674, %v3671
        %v3676 = vmul.f32 %v3674, %v3672
        %v3677 = vadd.f32 %v3627, %v3675
        %v3678 = vadd.f32 %v3628, %v3676
        %s3679 = sld [smem:[#allocation11 + $0x3f]]
        %v3680 = vstv %s3679
        %v3681 = vmul.f32 %v3680, %v3671
        %v3682 = vmul.f32 %v3680, %v3672
        %v3683 = vadd.f32 %v3641, %v3681
        %v3684 = vadd.f32 %v3642, %v3682
        %s3685 = sld [smem:[#allocation11 + $0x63]]
        %v3686 = vstv %s3685
        %v3687 = vmul.f32 %v3686, %v3671
        %v3688 = vmul.f32 %v3686, %v3672
        %v3689 = vadd.f32 %v3655, %v3687
        %v3690 = vadd.f32 %v3656, %v3688
        %s3691 = sld [smem:[#allocation11 + $0x87]]
        %v3692 = vstv %s3691
        %v3693 = vmul.f32 %v3692, %v3671
        %v3694 = vmul.f32 %v3692, %v3672
        %v3695 = vadd.f32 %v3669, %v3693
        %v3696 = vadd.f32 %v3670, %v3694
        %s3697 = sld [smem:[#allocation11 + $0x1c]]
        %v3698 = vstv %s3697
        %v3699 = vmul.f32 %v3698, %v3671
        %v3700 = vmul.f32 %v3698, %v3672
        %3703 = vrot.lane.b32.xlu0 %v3699, 127
        %v3704 = vpop.permute.xlu0 %3703
        %3705 = vrot.lane.b32.xlu0 %v3700, 127
        %v3706 = vpop.permute.xlu0 %3705
        %v3709 = vadd.f32 %v3677, %v3704
        %v3710 = vadd.f32 %v3678, %v3706
        %s3711 = sld [smem:[#allocation11 + $0x40]]
        %v3712 = vstv %s3711
        %v3713 = vmul.f32 %v3712, %v3671
        %v3714 = vmul.f32 %v3712, %v3672
        %3717 = vrot.lane.b32.xlu0 %v3713, 127
        %v3718 = vpop.permute.xlu0 %3717
        %3719 = vrot.lane.b32.xlu0 %v3714, 127
        %v3720 = vpop.permute.xlu0 %3719
        %v3723 = vadd.f32 %v3683, %v3718
        %v3724 = vadd.f32 %v3684, %v3720
        %s3725 = sld [smem:[#allocation11 + $0x64]]
        %v3726 = vstv %s3725
        %v3727 = vmul.f32 %v3726, %v3671
        %v3728 = vmul.f32 %v3726, %v3672
        %3731 = vrot.lane.b32.xlu0 %v3727, 127
        %v3732 = vpop.permute.xlu0 %3731
        %3733 = vrot.lane.b32.xlu0 %v3728, 127
        %v3734 = vpop.permute.xlu0 %3733
        %v3737 = vadd.f32 %v3689, %v3732
        %v3738 = vadd.f32 %v3690, %v3734
        %s3739 = sld [smem:[#allocation11 + $0x88]]
        %v3740 = vstv %s3739
        %v3741 = vmul.f32 %v3740, %v3671
        %v3742 = vmul.f32 %v3740, %v3672
        %3745 = vrot.lane.b32.xlu0 %v3741, 127
        %v3746 = vpop.permute.xlu0 %3745
        %3747 = vrot.lane.b32.xlu0 %v3742, 127
        %v3748 = vpop.permute.xlu0 %3747
        %v3751 = vadd.f32 %v3695, %v3746
        %v3752 = vadd.f32 %v3696, %v3748
        %s3753 = sld [smem:[#allocation11 + $0x1d]]
        %v3754 = vstv %s3753
        %v3755 = vmul.f32 %v3754, %v3671
        %v3756 = vmul.f32 %v3754, %v3672
        %3759 = vrot.lane.b32.xlu0 %v3755, 126
        %v3760 = vpop.permute.xlu0 %3759
        %3761 = vrot.lane.b32.xlu0 %v3756, 126
        %v3762 = vpop.permute.xlu0 %3761
        %v3765 = vadd.f32 %v3709, %v3760
        %v3766 = vadd.f32 %v3710, %v3762
        %s3767 = sld [smem:[#allocation11 + $0x41]]
        %v3768 = vstv %s3767
        %v3769 = vmul.f32 %v3768, %v3671
        %v3770 = vmul.f32 %v3768, %v3672
        %3773 = vrot.lane.b32.xlu0 %v3769, 126
        %v3774 = vpop.permute.xlu0 %3773
        %3775 = vrot.lane.b32.xlu0 %v3770, 126
        %v3776 = vpop.permute.xlu0 %3775
        %v3779 = vadd.f32 %v3723, %v3774
        %v3780 = vadd.f32 %v3724, %v3776
        %s3781 = sld [smem:[#allocation11 + $0x65]]
        %v3782 = vstv %s3781
        %v3783 = vmul.f32 %v3782, %v3671
        %v3784 = vmul.f32 %v3782, %v3672
        %3787 = vrot.lane.b32.xlu0 %v3783, 126
        %v3788 = vpop.permute.xlu0 %3787
        %3789 = vrot.lane.b32.xlu0 %v3784, 126
        %v3790 = vpop.permute.xlu0 %3789
        %v3793 = vadd.f32 %v3737, %v3788
        %v3794 = vadd.f32 %v3738, %v3790
        %s3795 = sld [smem:[#allocation11 + $0x89]]
        %v3796 = vstv %s3795
        %v3797 = vmul.f32 %v3796, %v3671
        %v3798 = vmul.f32 %v3796, %v3672
        %3801 = vrot.lane.b32.xlu0 %v3797, 126
        %v3802 = vpop.permute.xlu0 %3801
        %3803 = vrot.lane.b32.xlu0 %v3798, 126
        %v3804 = vpop.permute.xlu0 %3803
        %v3807 = vadd.f32 %v3751, %v3802
        %v3808 = vadd.f32 %v3752, %v3804
        %v3809 = vld [vmem:[%s2266 + $0x1] sm:$0xff]
        %v3810 = vld [vmem:[%s2266 + $0x9] sm:$0xff]
        %s3811 = sld [smem:[#allocation11 + $0x1e]]
        %v3812 = vstv %s3811
        %v3813 = vmul.f32 %v3812, %v3809
        %v3814 = vmul.f32 %v3812, %v3810
        %v3815 = vadd.f32 %v3765, %v3813
        %v3816 = vadd.f32 %v3766, %v3814
        %s3817 = sld [smem:[#allocation11 + $0x42]]
        %v3818 = vstv %s3817
        %v3819 = vmul.f32 %v3818, %v3809
        %v3820 = vmul.f32 %v3818, %v3810
        %v3821 = vadd.f32 %v3779, %v3819
        %v3822 = vadd.f32 %v3780, %v3820
        %s3823 = sld [smem:[#allocation11 + $0x66]]
        %v3824 = vstv %s3823
        %v3825 = vmul.f32 %v3824, %v3809
        %v3826 = vmul.f32 %v3824, %v3810
        %v3827 = vadd.f32 %v3793, %v3825
        %v3828 = vadd.f32 %v3794, %v3826
        %s3829 = sld [smem:[#allocation11 + $0x8a]]
        %v3830 = vstv %s3829
        %v3831 = vmul.f32 %v3830, %v3809
        %v3832 = vmul.f32 %v3830, %v3810
        %v3833 = vadd.f32 %v3807, %v3831
        %v3834 = vadd.f32 %v3808, %v3832
        %s3835 = sld [smem:[#allocation11 + $0x1f]]
        %v3836 = vstv %s3835
        %v3837 = vmul.f32 %v3836, %v3809
        %v3838 = vmul.f32 %v3836, %v3810
        %3841 = vrot.lane.b32.xlu0 %v3837, 127
        %v3842 = vpop.permute.xlu0 %3841
        %3843 = vrot.lane.b32.xlu0 %v3838, 127
        %v3844 = vpop.permute.xlu0 %3843
        %v3847 = vadd.f32 %v3815, %v3842
        %v3848 = vadd.f32 %v3816, %v3844
        %s3849 = sld [smem:[#allocation11 + $0x43]]
        %v3850 = vstv %s3849
        %v3851 = vmul.f32 %v3850, %v3809
        %v3852 = vmul.f32 %v3850, %v3810
        %3855 = vrot.lane.b32.xlu0 %v3851, 127
        %v3856 = vpop.permute.xlu0 %3855
        %3857 = vrot.lane.b32.xlu0 %v3852, 127
        %v3858 = vpop.permute.xlu0 %3857
        %v3861 = vadd.f32 %v3821, %v3856
        %v3862 = vadd.f32 %v3822, %v3858
        %s3863 = sld [smem:[#allocation11 + $0x67]]
        %v3864 = vstv %s3863
        %v3865 = vmul.f32 %v3864, %v3809
        %v3866 = vmul.f32 %v3864, %v3810
        %3869 = vrot.lane.b32.xlu0 %v3865, 127
        %v3870 = vpop.permute.xlu0 %3869
        %3871 = vrot.lane.b32.xlu0 %v3866, 127
        %v3872 = vpop.permute.xlu0 %3871
        %v3875 = vadd.f32 %v3827, %v3870
        %v3876 = vadd.f32 %v3828, %v3872
        %s3877 = sld [smem:[#allocation11 + $0x8b]]
        %v3878 = vstv %s3877
        %v3879 = vmul.f32 %v3878, %v3809
        %v3880 = vmul.f32 %v3878, %v3810
        %3883 = vrot.lane.b32.xlu0 %v3879, 127
        %v3884 = vpop.permute.xlu0 %3883
        %3885 = vrot.lane.b32.xlu0 %v3880, 127
        %v3886 = vpop.permute.xlu0 %3885
        %v3889 = vadd.f32 %v3833, %v3884
        %v3890 = vadd.f32 %v3834, %v3886
        %s3891 = sld [smem:[#allocation11 + $0x20]]
        %v3892 = vstv %s3891
        %v3893 = vmul.f32 %v3892, %v3809
        %v3894 = vmul.f32 %v3892, %v3810
        %3897 = vrot.lane.b32.xlu0 %v3893, 126
        %v3898 = vpop.permute.xlu0 %3897
        %3899 = vrot.lane.b32.xlu0 %v3894, 126
        %v3900 = vpop.permute.xlu0 %3899
        %v3903 = vadd.f32 %v3847, %v3898
        %v3904 = vadd.f32 %v3848, %v3900
        %s3905 = sld [smem:[#allocation11 + $0x44]]
        %v3906 = vstv %s3905
        %v3907 = vmul.f32 %v3906, %v3809
        %v3908 = vmul.f32 %v3906, %v3810
        %3911 = vrot.lane.b32.xlu0 %v3907, 126
        %v3912 = vpop.permute.xlu0 %3911
        %3913 = vrot.lane.b32.xlu0 %v3908, 126
        %v3914 = vpop.permute.xlu0 %3913
        %v3917 = vadd.f32 %v3861, %v3912
        %v3918 = vadd.f32 %v3862, %v3914
        %s3919 = sld [smem:[#allocation11 + $0x68]]
        %v3920 = vstv %s3919
        %v3921 = vmul.f32 %v3920, %v3809
        %v3922 = vmul.f32 %v3920, %v3810
        %3925 = vrot.lane.b32.xlu0 %v3921, 126
        %v3926 = vpop.permute.xlu0 %3925
        %3927 = vrot.lane.b32.xlu0 %v3922, 126
        %v3928 = vpop.permute.xlu0 %3927
        %v3931 = vadd.f32 %v3875, %v3926
        %v3932 = vadd.f32 %v3876, %v3928
        %s3933 = sld [smem:[#allocation11 + $0x8c]]
        %v3934 = vstv %s3933
        %v3935 = vmul.f32 %v3934, %v3809
        %v3936 = vmul.f32 %v3934, %v3810
        %3939 = vrot.lane.b32.xlu0 %v3935, 126
        %v3940 = vpop.permute.xlu0 %3939
        %3941 = vrot.lane.b32.xlu0 %v3936, 126
        %v3942 = vpop.permute.xlu0 %3941
        %v3945 = vadd.f32 %v3889, %v3940
        %v3946 = vadd.f32 %v3890, %v3942
        %v3947 = vld [vmem:[%s2266 + $0x2] sm:$0xff]
        %v3948 = vld [vmem:[%s2266 + $0xa] sm:$0xff]
        %s3949 = sld [smem:[#allocation11 + $0x21]]
        %v3950 = vstv %s3949
        %v3951 = vmul.f32 %v3950, %v3947
        %v3952 = vmul.f32 %v3950, %v3948
        %v3953 = vadd.f32 %v3903, %v3951
        %v3954 = vadd.f32 %v3904, %v3952
        %s3955 = sld [smem:[#allocation11 + $0x45]]
        %v3956 = vstv %s3955
        %v3957 = vmul.f32 %v3956, %v3947
        %v3958 = vmul.f32 %v3956, %v3948
        %v3959 = vadd.f32 %v3917, %v3957
        %v3960 = vadd.f32 %v3918, %v3958
        %s3961 = sld [smem:[#allocation11 + $0x69]]
        %v3962 = vstv %s3961
        %v3963 = vmul.f32 %v3962, %v3947
        %v3964 = vmul.f32 %v3962, %v3948
        %v3965 = vadd.f32 %v3931, %v3963
        %v3966 = vadd.f32 %v3932, %v3964
        %s3967 = sld [smem:[#allocation11 + $0x8d]]
        %v3968 = vstv %s3967
        %v3969 = vmul.f32 %v3968, %v3947
        %v3970 = vmul.f32 %v3968, %v3948
        %v3971 = vadd.f32 %v3945, %v3969
        %v3972 = vadd.f32 %v3946, %v3970
        %s3973 = sld [smem:[#allocation11 + $0x22]]
        %v3974 = vstv %s3973
        %v3975 = vmul.f32 %v3974, %v3947
        %v3976 = vmul.f32 %v3974, %v3948
        %3979 = vrot.lane.b32.xlu0 %v3975, 127
        %v3980 = vpop.permute.xlu0 %3979
        %3981 = vrot.lane.b32.xlu0 %v3976, 127
        %v3982 = vpop.permute.xlu0 %3981
        %v3985 = vadd.f32 %v3953, %v3980
        %v3986 = vadd.f32 %v3954, %v3982
        %s3987 = sld [smem:[#allocation11 + $0x46]]
        %v3988 = vstv %s3987
        %v3989 = vmul.f32 %v3988, %v3947
        %v3990 = vmul.f32 %v3988, %v3948
        %3993 = vrot.lane.b32.xlu0 %v3989, 127
        %v3994 = vpop.permute.xlu0 %3993
        %3995 = vrot.lane.b32.xlu0 %v3990, 127
        %v3996 = vpop.permute.xlu0 %3995
        %v3999 = vadd.f32 %v3959, %v3994
        %v4000 = vadd.f32 %v3960, %v3996
        %s4001 = sld [smem:[#allocation11 + $0x6a]]
        %v4002 = vstv %s4001
        %v4003 = vmul.f32 %v4002, %v3947
        %v4004 = vmul.f32 %v4002, %v3948
        %4007 = vrot.lane.b32.xlu0 %v4003, 127
        %v4008 = vpop.permute.xlu0 %4007
        %4009 = vrot.lane.b32.xlu0 %v4004, 127
        %v4010 = vpop.permute.xlu0 %4009
        %v4013 = vadd.f32 %v3965, %v4008
        %v4014 = vadd.f32 %v3966, %v4010
        %s4015 = sld [smem:[#allocation11 + $0x8e]]
        %v4016 = vstv %s4015
        %v4017 = vmul.f32 %v4016, %v3947
        %v4018 = vmul.f32 %v4016, %v3948
        %4021 = vrot.lane.b32.xlu0 %v4017, 127
        %v4022 = vpop.permute.xlu0 %4021
        %4023 = vrot.lane.b32.xlu0 %v4018, 127
        %v4024 = vpop.permute.xlu0 %4023
        %v4027 = vadd.f32 %v3971, %v4022
        %v4028 = vadd.f32 %v3972, %v4024
        %s4029 = sld [smem:[#allocation11 + $0x23]]
        %v4030 = vstv %s4029
        %v4031 = vmul.f32 %v4030, %v3947
        %v4032 = vmul.f32 %v4030, %v3948
        %4035 = vrot.lane.b32.xlu0 %v4031, 126
        %v4036 = vpop.permute.xlu0 %4035
        %4037 = vrot.lane.b32.xlu0 %v4032, 126
        %v4038 = vpop.permute.xlu0 %4037
        %v4041 = vadd.f32 %v3985, %v4036
        %v4042 = vadd.f32 %v3986, %v4038
        %s4043 = sld [smem:[#allocation11 + $0x47]]
        %v4044 = vstv %s4043
        %v4045 = vmul.f32 %v4044, %v3947
        %v4046 = vmul.f32 %v4044, %v3948
        %4049 = vrot.lane.b32.xlu0 %v4045, 126
        %v4050 = vpop.permute.xlu0 %4049
        %4051 = vrot.lane.b32.xlu0 %v4046, 126
        %v4052 = vpop.permute.xlu0 %4051
        %v4055 = vadd.f32 %v3999, %v4050
        %v4056 = vadd.f32 %v4000, %v4052
        %s4057 = sld [smem:[#allocation11 + $0x6b]]
        %v4058 = vstv %s4057
        %v4059 = vmul.f32 %v4058, %v3947
        %v4060 = vmul.f32 %v4058, %v3948
        %4063 = vrot.lane.b32.xlu0 %v4059, 126
        %v4064 = vpop.permute.xlu0 %4063
        %4065 = vrot.lane.b32.xlu0 %v4060, 126
        %v4066 = vpop.permute.xlu0 %4065
        %v4069 = vadd.f32 %v4013, %v4064
        %v4070 = vadd.f32 %v4014, %v4066
        %s4071 = sld [smem:[#allocation11 + $0x8f]]
        %v4072 = vstv %s4071
        %v4073 = vmul.f32 %v4072, %v3947
        %v4074 = vmul.f32 %v4072, %v3948
        %4077 = vrot.lane.b32.xlu0 %v4073, 126
        %v4078 = vpop.permute.xlu0 %4077
        %4079 = vrot.lane.b32.xlu0 %v4074, 126
        %v4080 = vpop.permute.xlu0 %4079
        %v4083 = vadd.f32 %v4027, %v4078
        %v4084 = vadd.f32 %v4028, %v4080
        %s4085 = sld [smem:[#allocation12]]
        %v4086 = vstv %s4085
        %v4087 = vadd.f32 %v4041, %v4086
        %v4088 = vadd.f32 %v4042, %v4086
        %s4089 = sld [smem:[#allocation12 + $0x1]]
        %v4090 = vstv %s4089
        %v4091 = vadd.f32 %v4055, %v4090
        %v4092 = vadd.f32 %v4056, %v4090
        %s4093 = sld [smem:[#allocation12 + $0x2]]
        %v4094 = vstv %s4093
        %v4095 = vadd.f32 %v4069, %v4094
        %v4096 = vadd.f32 %v4070, %v4094
        %s4097 = sld [smem:[#allocation12 + $0x3]]
        %v4098 = vstv %s4097
        %v4099 = vadd.f32 %v4083, %v4098
        %v4100 = vadd.f32 %v4084, %v4098
        %v4101 = vld [vmem:[%s248] sm:$0xff]
        %v4102 = vld [vmem:[%s248 + $0x8] sm:$0xff]
        %v4103 = vadd.f32 %v4087, %v4101
        %v4104 = vadd.f32 %v4088, %v4102
        %v4105 = vmax.f32 %v4103, 0.0
        %v4106 = vmax.f32 %v4104, 0.0
        %vm4107 = vcmask 130048
        %4108 = vst.msk [vmem:[%s296] sm:$0xff] %vm4107, %v4105
        %4109 = vst.msk [vmem:[%s296 + $0x8] sm:$0xff] %vm4107, %v4106
        %s4110 = scalar_lea.vmem %s248, 16 [#allocation4]
        %v4111 = vld [vmem:[%s4110] sm:$0xff]
        %v4112 = vld [vmem:[%s4110 + $0x8] sm:$0xff]
        %v4113 = vadd.f32 %v4091, %v4111
        %v4114 = vadd.f32 %v4092, %v4112
        %v4115 = vmax.f32 %v4113, 0.0
        %v4116 = vmax.f32 %v4114, 0.0
        %s4117 = scalar_lea.vmem %s296, 16 [#allocation14]
        %4118 = vst.msk [vmem:[%s4117] sm:$0xff] %vm4107, %v4115
        %4119 = vst.msk [vmem:[%s4117 + $0x8] sm:$0xff] %vm4107, %v4116
        %s4120 = scalar_lea.vmem %s248, 32 [#allocation4]
        %v4121 = vld [vmem:[%s4120] sm:$0xff]
        %v4122 = vld [vmem:[%s4120 + $0x8] sm:$0xff]
        %v4123 = vadd.f32 %v4095, %v4121
        %v4124 = vadd.f32 %v4096, %v4122
        %v4125 = vmax.f32 %v4123, 0.0
        %v4126 = vmax.f32 %v4124, 0.0
        %s4127 = scalar_lea.vmem %s296, 32 [#allocation14]
        %4128 = vst.msk [vmem:[%s4127] sm:$0xff] %vm4107, %v4125
        %4129 = vst.msk [vmem:[%s4127 + $0x8] sm:$0xff] %vm4107, %v4126
        %s4130 = scalar_lea.vmem %s248, 48 [#allocation4]
        %v4131 = vld [vmem:[%s4130] sm:$0xff]
        %v4132 = vld [vmem:[%s4130 + $0x8] sm:$0xff]
        %v4133 = vadd.f32 %v4099, %v4131
        %v4134 = vadd.f32 %v4100, %v4132
        %v4135 = vmax.f32 %v4133, 0.0
        %v4136 = vmax.f32 %v4134, 0.0
        %s4137 = scalar_lea.vmem %s296, 48 [#allocation14]
        %4138 = vst.msk [vmem:[%s4137] sm:$0xff] %vm4107, %v4135
        %4139 = vst.msk [vmem:[%s4137 + $0x8] sm:$0xff] %vm4107, %v4136
        %s4140 = sand.u32 %s143, 1
        %s4141 = scalar_lea.sflag [#allocation6], %s4140
        %s4142 = sand.u32 %s143, 1
        %s4143 = smul.addr %s4142, 64
        %s4144 = scalar_lea.vmem [#allocation14], %s4143
        // Predicated region
        $region61: #{residual_block.1} parent=39 // pred_check
          %p4145 = pneg %p153
        $region62: #{residual_block.1} parent=39 // pred_check_branch
          %4147 = sbr.rel (%p4145) target = $region64
        $region63: #{residual_block.1} parent=39 // pred_region
          %4149 = vsyncadd %s4141, 0
          %s4150 = smul.addr %s25, 8
          %s4151 = smul.addr %s4150, 8
          %s4152 = scalar_lea.hbm %s5, %s4151
          %s4153 = sshll.u32 %s4144, 4
          %s4154 = int_to_ptr.vmem [resolvable:$true] %s4153
          %s4155 = sshll.u32 %s4152, 4
          %s4156 = int_to_ptr.hbm [resolvable:$true] %s4155
          %4161 = dma.vmem_to_hbm [thread:$0]  %s4154, 1024, %s4156, %s4141, 128, 128, 8
        $region64: #{residual_block.1} parent=39 // pred_fallthru
          _
      $region40: #{residual_block.1} parent=5 // pred_fallthru
        _
      %p4162 = scmp.le.s32.totalorder 2, %s20
      // Predicated region
      $region65: #{residual_block.1} parent=5 // pred_check
        %p4163 = pneg %p4162
      $region66: #{residual_block.1} parent=5 // pred_check_branch
        %4165 = sbr.rel (%p4163) target = $region68
      $region67: #{residual_block.1} parent=5 // pred_region
        %s4166 = ssub.s32 %s20, 2
        // Predicated region
        $region69: #{residual_block.1} parent=67 // pred_check
          %p4167 = pneg %p159
        $region70: #{residual_block.1} parent=67 // pred_check_branch
          %4169 = sbr.rel (%p4167) target = $region72
        $region71: #{residual_block.1} parent=67 // pred_region
          %s4170 = sand.u32 %s144, 1
          %s4171 = scalar_lea.sflag [#allocation6], %s4170
          %s4172 = sand.u32 %s144, 1
          %s4173 = smul.addr %s4172, 64
          %s4174 = scalar_lea.vmem [#allocation14], %s4173
          %4176 = dma.done %s4171, 1024
        $region72: #{residual_block.1} parent=67 // pred_fallthru
          _
      $region68: #{residual_block.1} parent=5 // pred_fallthru
        _
    $region6: #{residual_block.1} parent=1 // loop_footer
      %s24 = sadd.s32 1, %s20
    $region7: #{residual_block.1} parent=1 // loop_footer_branch
      %19 = sbr.rel target = $region3
    $region8: #{residual_block.1} parent=1 // loop_exit
      _
    %4177 = vsyncpa [#allocation5], 1
    %s4178 = scalar_lea.sflag [#allocation5], 1
    %4179 = vsyncpa %s4178, 1
    %4180 = vsyncpa [#allocation6], 1
    %s4181 = scalar_lea.sflag [#allocation6], 1
    %4182 = vsyncpa %s4181, 1
    %4183 = vsyncpa [#allocation7], 1
    %s4184 = scalar_lea.sflag [#allocation7], 1
    %4185 = vsyncpa %s4184, 1
    %4186 = vsyncpa [#allocation10], 1
    %4187 = vsyncpa [#allocation13], 1

</llo_original>
